<compile_context>
chip_gen: v7x
topology: tpu7x:2x2x1
jax: 0.10.0
libtpu: 0.0.40
codegen_flags: <defaults>
</compile_context>

<pallas_src>
import functools
import math

import jax
import jax.numpy as jnp
from jax.experimental import pallas as pl
from jax.experimental.pallas import tpu as pltpu  # noqa: F401 (TPU backend)

# ------------------------- small Pixtral-like config -------------------------
IMAGE_SIZE = 32
PATCH_SIZE = 8
NUM_CHANNELS = 3
HIDDEN_SIZE = 64
NUM_HEADS = 4
HEAD_DIM = HIDDEN_SIZE // NUM_HEADS
INTERMEDIATE_SIZE = 128
NUM_LAYERS = 2
ROPE_THETA = 10000.0
RMS_EPS = 1e-5

# MXU operand dtype.  Set to jnp.bfloat16 on v5e/v6e/v7x for ~2x MXU
# throughput and half the weight bytes (accumulation stays f32 via
# preferred_element_type).  Kept f32 to match the PyTorch reference numerics.
MATMUL_DTYPE = jnp.float32


# ------------------------------ fused Pallas kernel --------------------------
def _pixtral_forward_kernel(
    patches_ref, wconv_ref, ln_pre_ref,
    wq_ref, wqr_ref, wk_ref, wkr_ref, wv_ref, wo_ref,
    wg_ref, wu_ref, wd_ref,
    cos_ref, sin_ref, mask_ref, hmask_ref,
    out_ref, *,
    num_layers, num_heads, eps, matmul_dtype, collect_hidden):
  """Whole Pixtral vision forward; every operand is a whole-array VMEM block.

  If collect_hidden: out_ref[l] = hidden state after layer l (index 0 =
  post-ln_pre embeddings), matching the PyTorch all_hidden_states list.
  Otherwise out_ref is just the final (S, hidden) state.
  """

  def mm(a, b):
    return jnp.dot(a.astype(matmul_dtype), b.astype(matmul_dtype),
                   preferred_element_type=jnp.float32)

  def rms_nogain(x):  # gains are folded into the downstream weights
    return x * jax.lax.rsqrt(jnp.mean(x * x, axis=-1, keepdims=True) + eps)

  cos = cos_ref[...]                       # (S, hidden)  head-tiled
  sin = sin_ref[...]                       # (S, hidden)  head-tiled
  mask = mask_ref[...]                     # (S, S) additive block-diag mask
  hmask = [hmask_ref[h] for h in range(num_heads)]     # (1, hidden) 0/1 each

  # patch conv (as im2col matmul) + ln_pre RMSNorm (gain kept: residual base).
  h = rms_nogain(mm(patches_ref[...], wconv_ref[...])) * ln_pre_ref[...]
  if collect_hidden:
    out_ref[0] = h

  for l in range(num_layers):               # static unroll (2 layers)
    # ---------------- attention (norm gain + softmax scale pre-folded) ------
    x = rms_nogain(h)
    # RoPE full-width: rotate_half is baked into wqr/wkr, so no lane slicing.
    q = mm(x, wq_ref[l]) * cos + mm(x, wqr_ref[l]) * sin     # (S, hidden)
    k = mm(x, wk_ref[l]) * cos + mm(x, wkr_ref[l]) * sin     # (S, hidden)
    v = mm(x, wv_ref[l])                                     # (S, hidden)
    ctx = jnp.zeros_like(v)
    for hh in range(num_heads):              # static unroll, independent chains
      kh = k * hmask[hh]                     # zero other heads' lanes (VPU)
      s = jax.lax.dot_general(
          q.astype(matmul_dtype), kh.astype(matmul_dtype),
          (((1,), (1,)), ((), ())),
          preferred_element_type=jnp.float32) + mask         # (S, S)
      m = jnp.max(s, axis=-1, keepdims=True)
      p = jnp.exp(s - m)
      inv = 1.0 / jnp.sum(p, axis=-1, keepdims=True)         # exact f32
      ctx = ctx + mm(p * inv, v * hmask[hh])                 # lane-dense accum
    h = h + mm(ctx, wo_ref[l])
    # ---------------- feed-forward (ffn_norm gain pre-folded) ---------------
    x = rms_nogain(h)
    g = mm(x, wg_ref[l])                                     # (S, inter)
    u = mm(x, wu_ref[l])                                     # (S, inter)
    h = h + mm(g * jax.nn.sigmoid(g) * u, wd_ref[l])
    if collect_hidden:
      out_ref[l + 1] = h

  if not collect_hidden:
    out_ref[...] = h


def _run_fused_forward(patches, cos_t, sin_t, mask, head_mask, params,
                       collect_hidden):
  """One pallas_call for the whole forward."""
  S = patches.shape[0]
  kernel = functools.partial(
      _pixtral_forward_kernel,
      num_layers=NUM_LAYERS, num_heads=NUM_HEADS, eps=RMS_EPS,
      matmul_dtype=MATMUL_DTYPE, collect_hidden=collect_hidden)
  if collect_hidden:
    out_shape = jax.ShapeDtypeStruct((NUM_LAYERS + 1, S, HIDDEN_SIZE),
                                     jnp.float32)
  else:
    out_shape = jax.ShapeDtypeStruct((S, HIDDEN_SIZE), jnp.float32)
  return pl.pallas_call(kernel, out_shape=out_shape)(
      patches, params["patch_conv_wT"], params["ln_pre_w"],
      params["wq"], params["wqr"], params["wk"], params["wkr"], params["wv"],
      params["wo"], params["wg"], params["wu"], params["wd"],
      cos_t, sin_t, mask, head_mask)


# --------------------------------- JAX glue ----------------------------------
def patchify(pixel_values, image_sizes):
  """Crop each image to its true size, extract non-overlapping PATCH_SIZE
  patches in row-major (h, w) order, flatten each patch as (C, ph, pw) —
  identical ordering to Conv2d(stride=patch) + flatten(1).T + cat."""
  rows, grids = [], []
  for i, (h, w) in enumerate(image_sizes):
    hp, wp = h // PATCH_SIZE, w // PATCH_SIZE
    img = pixel_values[i, :, : hp * PATCH_SIZE, : wp * PATCH_SIZE]
    x = img.reshape(NUM_CHANNELS, hp, PATCH_SIZE, wp, PATCH_SIZE)
    x = x.transpose(1, 3, 0, 2, 4).reshape(
        hp * wp, NUM_CHANNELS * PATCH_SIZE * PATCH_SIZE)
    rows.append(x)
    grids.append((hp, wp))
  return jnp.concatenate(rows, axis=0), grids


def position_ids_from_grids(grids, max_width):
  ids = []
  for hp, wp in grids:
    hh = jnp.arange(hp)
    ww = jnp.arange(wp)
    ids.append((hh[:, None] * max_width + ww[None, :]).reshape(-1))
  return jnp.concatenate(ids)


def build_rope_inv_freq():
  """PixtralRotaryEmbedding's 2D rope frequency table: (max_side^2, D//2)."""
  max_side = IMAGE_SIZE // PATCH_SIZE
  freqs = 1.0 / (ROPE_THETA ** (
      jnp.arange(0, HEAD_DIM, 2, dtype=jnp.float32) / HEAD_DIM))
  h = jnp.arange(max_side, dtype=jnp.float32)
  w = jnp.arange(max_side, dtype=jnp.float32)
  freqs_h = jnp.outer(h, freqs[0::2])
  freqs_w = jnp.outer(w, freqs[1::2])
  inv = jnp.concatenate(
      [
          jnp.tile(freqs_h[:, None, :], (1, max_side, 1)),
          jnp.tile(freqs_w[None, :, :], (max_side, 1, 1)),
      ],
      axis=-1,
  ).reshape(max_side * max_side, HEAD_DIM // 2)
  return inv


def block_diag_mask(seq_lens):
  s = sum(seq_lens)
  mask = jnp.full((s, s), jnp.finfo(jnp.float32).min, jnp.float32)
  off = 0
  for n in seq_lens:
    mask = mask.at[off:off + n, off:off + n].set(0.0)
    off += n
  return mask


@functools.partial(jax.jit, static_argnums=(2,),
                   static_argnames=("output_hidden_states",
                                    "feature_sample_layers"))
def pixtral_vision_forward(params, pixel_values, image_sizes,
                           output_hidden_states=False,
                           feature_sample_layers=None):
  # image_sizes must be a (hashable) tuple of (H, W) tuples; same for
  # feature_sample_layers (tuple of ints) when provided.
  if feature_sample_layers is not None:
    for idx in feature_sample_layers:
      if idx < 0 or idx > NUM_LAYERS:
        raise ValueError(f"Feature sample layer index {idx} out of range "
                         f"[0, {NUM_LAYERS}]")

  patches, grids = patchify(pixel_values, image_sizes)

  max_width = IMAGE_SIZE // PATCH_SIZE
  pos_ids = position_ids_from_grids(grids, max_width)
  f = build_rope_inv_freq()[pos_ids]                         # (S, D//2)
  emb = jnp.concatenate([f, f], axis=-1)                     # (S, head_dim)
  cos_t = jnp.tile(jnp.cos(emb), (1, NUM_HEADS))             # (S, hidden)
  sin_t = jnp.tile(jnp.sin(emb), (1, NUM_HEADS))
  mask = block_diag_mask([hp * wp for hp, wp in grids])      # (S, S)
  lane = jnp.arange(HIDDEN_SIZE) // HEAD_DIM
  head_mask = (lane[None, None, :] ==
               jnp.arange(NUM_HEADS)[:, None, None]).astype(jnp.float32)

  collect = output_hidden_states or (feature_sample_layers is not None)
  hs = _run_fused_forward(patches, cos_t, sin_t, mask, head_mask, params,
                          collect)

  if not collect:
    return hs[None]                                          # (1, S, hidden)

  all_hidden = [hs[i][None] for i in range(NUM_LAYERS + 1)]
  if feature_sample_layers is not None:
    out = jnp.concatenate([all_hidden[i] for i in feature_sample_layers],
                          axis=-1)
  else:
    out = all_hidden[-1]
  if output_hidden_states:
    return out, all_hidden
  return out


# ------------------------------ parameter init --------------------------------
def init_params(key):
  """Raw weights in the PyTorch (out, in) layout (as a checkpoint provides)."""
  std = 0.02
  ks = jax.random.split(key, 12)
  n = jax.random.normal
  return {
      "patch_conv_w": std * n(ks[0], (HIDDEN_SIZE, NUM_CHANNELS, PATCH_SIZE,
                                      PATCH_SIZE), jnp.float32),
      "ln_pre_w": 1.0 + 0.01 * n(ks[1], (HIDDEN_SIZE,), jnp.float32),
      "attention_norm": 1.0 + 0.01 * n(ks[2], (NUM_LAYERS, HIDDEN_SIZE),
                                       jnp.float32),
      "ffn_norm": 1.0 + 0.01 * n(ks[3], (NUM_LAYERS, HIDDEN_SIZE),
                                 jnp.float32),
      "wq": std * n(ks[4], (NUM_LAYERS, HIDDEN_SIZE, HIDDEN_SIZE), jnp.float32),
      "wk": std * n(ks[5], (NUM_LAYERS, HIDDEN_SIZE, HIDDEN_SIZE), jnp.float32),
      "wv": std * n(ks[6], (NUM_LAYERS, HIDDEN_SIZE, HIDDEN_SIZE), jnp.float32),
      "wo": std * n(ks[7], (NUM_LAYERS, HIDDEN_SIZE, HIDDEN_SIZE), jnp.float32),
      "w_gate": std * n(ks[8], (NUM_LAYERS, INTERMEDIATE_SIZE, HIDDEN_SIZE),
                        jnp.float32),
      "w_up": std * n(ks[9], (NUM_LAYERS, INTERMEDIATE_SIZE, HIDDEN_SIZE),
                      jnp.float32),
      "w_down": std * n(ks[10], (NUM_LAYERS, HIDDEN_SIZE, INTERMEDIATE_SIZE),
                        jnp.float32),
  }


def prepare_params(raw):
  """Load-time weight transform: transpose to (in, out), fold the
  attention_norm / ffn_norm gains and the 1/sqrt(head_dim) softmax scale into
  the weight matrices, and bake rotate_half into extra q/k weights."""
  # rotate_half as a matrix: per head block [[0, I],[-I, 0]] (q_rot = q @ R).
  d2 = HEAD_DIM // 2
  r_blk = jnp.zeros((HEAD_DIM, HEAD_DIM), jnp.float32)
  r_blk = r_blk.at[d2:, :d2].set(-jnp.eye(d2, dtype=jnp.float32))
  r_blk = r_blk.at[:d2, d2:].set(jnp.eye(d2, dtype=jnp.float32))
  rot = jnp.kron(jnp.eye(NUM_HEADS, dtype=jnp.float32), r_blk)  # (hid, hid)
  scale = 1.0 / math.sqrt(HEAD_DIM)

  def t(w):                               # (L, out, in) -> (L, in, out)
    return jnp.swapaxes(w, 1, 2)

  an = raw["attention_norm"][:, :, None]                       # (L, in, 1)
  fn = raw["ffn_norm"][:, :, None]

  wq = t(raw["wq"]) * an * scale          # norm gain + softmax scale folded
  wk = t(raw["wk"]) * an
  wv = t(raw["wv"]) * an
  return {
      "patch_conv_wT": raw["patch_conv_w"].reshape(HIDDEN_SIZE, -1).T,
      "ln_pre_w": raw["ln_pre_w"].reshape(1, HIDDEN_SIZE),
      "wq": wq,
      "wqr": jnp.einsum("lio,oj->lij", wq, rot),               # Wq @ R
      "wk": wk,
      "wkr": jnp.einsum("lio,oj->lij", wk, rot),               # Wk @ R
      "wv": wv,
      "wo": t(raw["wo"]),
      "wg": t(raw["w_gate"]) * fn,                             # ffn gain folded
      "wu": t(raw["w_up"]) * fn,
      "wd": t(raw["w_down"]),
  }


# TODO(synk): load_weights (HF checkpoint name mapping), pad_input_ids
# (multimodal token plumbing) and quantization configs have no kernel
# equivalent and are intentionally not implemented.

if __name__ == "__main__":
  key = jax.random.PRNGKey(0)
  k_params, k_pix = jax.random.split(key)
  params = prepare_params(init_params(k_params))

  batch = 2
  pixel_values = jax.random.normal(
      k_pix, (batch, NUM_CHANNELS, IMAGE_SIZE, IMAGE_SIZE), jnp.float32)
  image_sizes = ((32, 32), (16, 24))   # -> 4*4 + 2*3 = 22 patches total

  # Fast path: final hidden state only (kernel stores a single (S, 64) slab).
  out = pixtral_vision_forward(params, pixel_values, image_sizes)
  out = jax.block_until_ready(out)
  assert out.shape == (1, 22, HIDDEN_SIZE), out.shape
  assert bool(jnp.all(jnp.isfinite(out)))

  # Hidden-state collection path (matches PyTorch all_hidden_states).
  out2, hiddens = pixtral_vision_forward(params, pixel_values, image_sizes,
                                         output_hidden_states=True)
  out2 = jax.block_until_ready(out2)
  assert len(hiddens) == NUM_LAYERS + 1
  assert out2.shape == (1, 22, HIDDEN_SIZE)
  assert bool(jnp.allclose(out, out2, atol=1e-4, rtol=1e-4))

  print("KERNEL_OK")
</pallas_src>

<mosaic_0001>
module attributes {stable_mosaic.version = 11 : i64} {
  func.func @_pixtral_forward_kernel(%arg0: memref<22x192xf32, #tpu.memory_space<vmem>>, %arg1: memref<192x64xf32, #tpu.memory_space<vmem>>, %arg2: memref<1x64xf32, #tpu.memory_space<vmem>>, %arg3: memref<2x64x64xf32, #tpu.memory_space<vmem>>, %arg4: memref<2x64x64xf32, #tpu.memory_space<vmem>>, %arg5: memref<2x64x64xf32, #tpu.memory_space<vmem>>, %arg6: memref<2x64x64xf32, #tpu.memory_space<vmem>>, %arg7: memref<2x64x64xf32, #tpu.memory_space<vmem>>, %arg8: memref<2x64x64xf32, #tpu.memory_space<vmem>>, %arg9: memref<2x64x128xf32, #tpu.memory_space<vmem>>, %arg10: memref<2x64x128xf32, #tpu.memory_space<vmem>>, %arg11: memref<2x128x64xf32, #tpu.memory_space<vmem>>, %arg12: memref<22x64xf32, #tpu.memory_space<vmem>>, %arg13: memref<22x64xf32, #tpu.memory_space<vmem>>, %arg14: memref<22x22xf32, #tpu.memory_space<vmem>>, %arg15: memref<4x1x64xf32, #tpu.memory_space<vmem>>, %arg16: memref<22x64xf32, #tpu.memory_space<vmem>>) attributes {dimension_semantics = [], scalar_prefetch = 0 : i64, scratch_operands = 0 : i64, tpu.core_type = #tpu.core_type<tc>} {
    %c0 = arith.constant 0 : index
    %c0_0 = arith.constant 0 : index
    %0 = vector.load %arg12[%c0, %c0_0] : memref<22x64xf32, #tpu.memory_space<vmem>>, vector<22x64xf32>
    %c0_1 = arith.constant 0 : index
    %c0_2 = arith.constant 0 : index
    %1 = vector.load %arg13[%c0_1, %c0_2] : memref<22x64xf32, #tpu.memory_space<vmem>>, vector<22x64xf32>
    %c0_3 = arith.constant 0 : index
    %c0_4 = arith.constant 0 : index
    %2 = vector.load %arg14[%c0_3, %c0_4] : memref<22x22xf32, #tpu.memory_space<vmem>>, vector<22x22xf32>
    %c0_5 = arith.constant 0 : index
    %c0_6 = arith.constant 0 : index
    %c0_7 = arith.constant 0 : index
    %3 = vector.load %arg15[%c0_5, %c0_6, %c0_7] : memref<4x1x64xf32, #tpu.memory_space<vmem>>, vector<1x1x64xf32>
    %4 = vector.shape_cast %3 : vector<1x1x64xf32> to vector<1x64xf32>
    %c1 = arith.constant 1 : index
    %c0_8 = arith.constant 0 : index
    %c0_9 = arith.constant 0 : index
    %5 = vector.load %arg15[%c1, %c0_8, %c0_9] : memref<4x1x64xf32, #tpu.memory_space<vmem>>, vector<1x1x64xf32>
    %6 = vector.shape_cast %5 : vector<1x1x64xf32> to vector<1x64xf32>
    %c2 = arith.constant 2 : index
    %c0_10 = arith.constant 0 : index
    %c0_11 = arith.constant 0 : index
    %7 = vector.load %arg15[%c2, %c0_10, %c0_11] : memref<4x1x64xf32, #tpu.memory_space<vmem>>, vector<1x1x64xf32>
    %8 = vector.shape_cast %7 : vector<1x1x64xf32> to vector<1x64xf32>
    %c3 = arith.constant 3 : index
    %c0_12 = arith.constant 0 : index
    %c0_13 = arith.constant 0 : index
    %9 = vector.load %arg15[%c3, %c0_12, %c0_13] : memref<4x1x64xf32, #tpu.memory_space<vmem>>, vector<1x1x64xf32>
    %10 = vector.shape_cast %9 : vector<1x1x64xf32> to vector<1x64xf32>
    %c0_14 = arith.constant 0 : index
    %c0_15 = arith.constant 0 : index
    %11 = vector.load %arg0[%c0_14, %c0_15] : memref<22x192xf32, #tpu.memory_space<vmem>>, vector<22x192xf32>
    %c0_16 = arith.constant 0 : index
    %c0_17 = arith.constant 0 : index
    %12 = vector.load %arg1[%c0_16, %c0_17] : memref<192x64xf32, #tpu.memory_space<vmem>>, vector<192x64xf32>
    %cst = arith.constant dense<0.000000e+00> : vector<22x64xf32>
    %13 = tpu.matmul %11, %12, %cst {dimension_numbers = #tpu.dot_dimension_numbers<[1], [0], [0], [1], [0, 0, 1, 1], [], []>} : vector<22x192xf32>, vector<192x64xf32>, vector<22x64xf32> -> vector<22x64xf32>
    %14 = arith.mulf %13, %13 : vector<22x64xf32>
    %cst_18 = arith.constant dense<0.000000e+00> : vector<22xf32>
    %15 = vector.multi_reduction <add>, %14, %cst_18 [1] : vector<22x64xf32> to vector<22xf32>
    %16 = vector.shape_cast %15 : vector<22xf32> to vector<22x1xf32>
    %cst_19 = arith.constant 6.400000e+01 : f32
    %17 = vector.broadcast %cst_19 : f32 to vector<22x1xf32>
    %18 = arith.divf %16, %17 : vector<22x1xf32>
    %cst_20 = arith.constant 9.99999974E-6 : f32
    %19 = vector.broadcast %cst_20 : f32 to vector<22x1xf32>
    %20 = arith.addf %18, %19 : vector<22x1xf32>
    %21 = math.rsqrt %20 : vector<22x1xf32>
    %22 = vector.broadcast %21 : vector<22x1xf32> to vector<22x64xf32>
    %23 = arith.mulf %13, %22 : vector<22x64xf32>
    %c0_21 = arith.constant 0 : index
    %c0_22 = arith.constant 0 : index
    %24 = vector.load %arg2[%c0_21, %c0_22] : memref<1x64xf32, #tpu.memory_space<vmem>>, vector<1x64xf32>
    %25 = vector.broadcast %24 : vector<1x64xf32> to vector<22x64xf32>
    %26 = arith.mulf %23, %25 : vector<22x64xf32>
    %27 = arith.mulf %26, %26 : vector<22x64xf32>
    %cst_23 = arith.constant dense<0.000000e+00> : vector<22xf32>
    %28 = vector.multi_reduction <add>, %27, %cst_23 [1] : vector<22x64xf32> to vector<22xf32>
    %29 = vector.shape_cast %28 : vector<22xf32> to vector<22x1xf32>
    %cst_24 = arith.constant 6.400000e+01 : f32
    %30 = vector.broadcast %cst_24 : f32 to vector<22x1xf32>
    %31 = arith.divf %29, %30 : vector<22x1xf32>
    %cst_25 = arith.constant 9.99999974E-6 : f32
    %32 = vector.broadcast %cst_25 : f32 to vector<22x1xf32>
    %33 = arith.addf %31, %32 : vector<22x1xf32>
    %34 = math.rsqrt %33 : vector<22x1xf32>
    %35 = vector.broadcast %34 : vector<22x1xf32> to vector<22x64xf32>
    %36 = arith.mulf %26, %35 : vector<22x64xf32>
    %c0_26 = arith.constant 0 : index
    %c0_27 = arith.constant 0 : index
    %c0_28 = arith.constant 0 : index
    %37 = vector.load %arg3[%c0_26, %c0_27, %c0_28] : memref<2x64x64xf32, #tpu.memory_space<vmem>>, vector<1x64x64xf32>
    %38 = vector.shape_cast %37 : vector<1x64x64xf32> to vector<64x64xf32>
    %cst_29 = arith.constant dense<0.000000e+00> : vector<22x64xf32>
    %39 = tpu.matmul %36, %38, %cst_29 {dimension_numbers = #tpu.dot_dimension_numbers<[1], [0], [0], [1], [0, 0, 1, 1], [], []>} : vector<22x64xf32>, vector<64x64xf32>, vector<22x64xf32> -> vector<22x64xf32>
    %40 = arith.mulf %39, %0 : vector<22x64xf32>
    %c0_30 = arith.constant 0 : index
    %c0_31 = arith.constant 0 : index
    %c0_32 = arith.constant 0 : index
    %41 = vector.load %arg4[%c0_30, %c0_31, %c0_32] : memref<2x64x64xf32, #tpu.memory_space<vmem>>, vector<1x64x64xf32>
    %42 = vector.shape_cast %41 : vector<1x64x64xf32> to vector<64x64xf32>
    %cst_33 = arith.constant dense<0.000000e+00> : vector<22x64xf32>
    %43 = tpu.matmul %36, %42, %cst_33 {dimension_numbers = #tpu.dot_dimension_numbers<[1], [0], [0], [1], [0, 0, 1, 1], [], []>} : vector<22x64xf32>, vector<64x64xf32>, vector<22x64xf32> -> vector<22x64xf32>
    %44 = arith.mulf %43, %1 : vector<22x64xf32>
    %45 = arith.addf %40, %44 : vector<22x64xf32>
    %c0_34 = arith.constant 0 : index
    %c0_35 = arith.constant 0 : index
    %c0_36 = arith.constant 0 : index
    %46 = vector.load %arg5[%c0_34, %c0_35, %c0_36] : memref<2x64x64xf32, #tpu.memory_space<vmem>>, vector<1x64x64xf32>
    %47 = vector.shape_cast %46 : vector<1x64x64xf32> to vector<64x64xf32>
    %cst_37 = arith.constant dense<0.000000e+00> : vector<22x64xf32>
    %48 = tpu.matmul %36, %47, %cst_37 {dimension_numbers = #tpu.dot_dimension_numbers<[1], [0], [0], [1], [0, 0, 1, 1], [], []>} : vector<22x64xf32>, vector<64x64xf32>, vector<22x64xf32> -> vector<22x64xf32>
    %49 = arith.mulf %48, %0 : vector<22x64xf32>
    %c0_38 = arith.constant 0 : index
    %c0_39 = arith.constant 0 : index
    %c0_40 = arith.constant 0 : index
    %50 = vector.load %arg6[%c0_38, %c0_39, %c0_40] : memref<2x64x64xf32, #tpu.memory_space<vmem>>, vector<1x64x64xf32>
    %51 = vector.shape_cast %50 : vector<1x64x64xf32> to vector<64x64xf32>
    %cst_41 = arith.constant dense<0.000000e+00> : vector<22x64xf32>
    %52 = tpu.matmul %36, %51, %cst_41 {dimension_numbers = #tpu.dot_dimension_numbers<[1], [0], [0], [1], [0, 0, 1, 1], [], []>} : vector<22x64xf32>, vector<64x64xf32>, vector<22x64xf32> -> vector<22x64xf32>
    %53 = arith.mulf %52, %1 : vector<22x64xf32>
    %54 = arith.addf %49, %53 : vector<22x64xf32>
    %c0_42 = arith.constant 0 : index
    %c0_43 = arith.constant 0 : index
    %c0_44 = arith.constant 0 : index
    %55 = vector.load %arg7[%c0_42, %c0_43, %c0_44] : memref<2x64x64xf32, #tpu.memory_space<vmem>>, vector<1x64x64xf32>
    %56 = vector.shape_cast %55 : vector<1x64x64xf32> to vector<64x64xf32>
    %cst_45 = arith.constant dense<0.000000e+00> : vector<22x64xf32>
    %57 = tpu.matmul %36, %56, %cst_45 {dimension_numbers = #tpu.dot_dimension_numbers<[1], [0], [0], [1], [0, 0, 1, 1], [], []>} : vector<22x64xf32>, vector<64x64xf32>, vector<22x64xf32> -> vector<22x64xf32>
    %cst_46 = arith.constant 0.000000e+00 : f32
    %58 = vector.broadcast %cst_46 : f32 to vector<22x64xf32>
    %59 = vector.broadcast %4 : vector<1x64xf32> to vector<22x64xf32>
    %60 = arith.mulf %54, %59 : vector<22x64xf32>
    %cst_47 = arith.constant dense<0.000000e+00> : vector<22x22xf32>
    %61 = tpu.matmul %45, %60, %cst_47 {dimension_numbers = #tpu.dot_dimension_numbers<[1], [1], [0], [0], [0, 0, 1, 0], [], []>} : vector<22x64xf32>, vector<22x64xf32>, vector<22x22xf32> -> vector<22x22xf32>
    %62 = arith.addf %61, %2 : vector<22x22xf32>
    %cst_48 = arith.constant dense<0xFF800000> : vector<22xf32>
    %63 = vector.multi_reduction <maximumf>, %62, %cst_48 [1] : vector<22x22xf32> to vector<22xf32>
    %64 = vector.shape_cast %63 : vector<22xf32> to vector<22x1xf32>
    %65 = vector.broadcast %64 : vector<22x1xf32> to vector<22x22xf32>
    %66 = arith.subf %62, %65 : vector<22x22xf32>
    %67 = math.exp %66 : vector<22x22xf32>
    %cst_49 = arith.constant dense<0.000000e+00> : vector<22xf32>
    %68 = vector.multi_reduction <add>, %67, %cst_49 [1] : vector<22x22xf32> to vector<22xf32>
    %69 = vector.shape_cast %68 : vector<22xf32> to vector<22x1xf32>
    %cst_50 = arith.constant 1.000000e+00 : f32
    %70 = vector.broadcast %cst_50 : f32 to vector<22x1xf32>
    %71 = arith.divf %70, %69 : vector<22x1xf32>
    %72 = vector.broadcast %71 : vector<22x1xf32> to vector<22x22xf32>
    %73 = arith.mulf %67, %72 : vector<22x22xf32>
    %74 = vector.broadcast %4 : vector<1x64xf32> to vector<22x64xf32>
    %75 = arith.mulf %57, %74 : vector<22x64xf32>
    %cst_51 = arith.constant dense<0.000000e+00> : vector<22x64xf32>
    %76 = tpu.matmul %73, %75, %cst_51 {dimension_numbers = #tpu.dot_dimension_numbers<[1], [0], [0], [1], [0, 0, 1, 1], [], []>} : vector<22x22xf32>, vector<22x64xf32>, vector<22x64xf32> -> vector<22x64xf32>
    %77 = arith.addf %58, %76 : vector<22x64xf32>
    %78 = vector.broadcast %6 : vector<1x64xf32> to vector<22x64xf32>
    %79 = arith.mulf %54, %78 : vector<22x64xf32>
    %cst_52 = arith.constant dense<0.000000e+00> : vector<22x22xf32>
    %80 = tpu.matmul %45, %79, %cst_52 {dimension_numbers = #tpu.dot_dimension_numbers<[1], [1], [0], [0], [0, 0, 1, 0], [], []>} : vector<22x64xf32>, vector<22x64xf32>, vector<22x22xf32> -> vector<22x22xf32>
    %81 = arith.addf %80, %2 : vector<22x22xf32>
    %cst_53 = arith.constant dense<0xFF800000> : vector<22xf32>
    %82 = vector.multi_reduction <maximumf>, %81, %cst_53 [1] : vector<22x22xf32> to vector<22xf32>
    %83 = vector.shape_cast %82 : vector<22xf32> to vector<22x1xf32>
    %84 = vector.broadcast %83 : vector<22x1xf32> to vector<22x22xf32>
    %85 = arith.subf %81, %84 : vector<22x22xf32>
    %86 = math.exp %85 : vector<22x22xf32>
    %cst_54 = arith.constant dense<0.000000e+00> : vector<22xf32>
    %87 = vector.multi_reduction <add>, %86, %cst_54 [1] : vector<22x22xf32> to vector<22xf32>
    %88 = vector.shape_cast %87 : vector<22xf32> to vector<22x1xf32>
    %cst_55 = arith.constant 1.000000e+00 : f32
    %89 = vector.broadcast %cst_55 : f32 to vector<22x1xf32>
    %90 = arith.divf %89, %88 : vector<22x1xf32>
    %91 = vector.broadcast %90 : vector<22x1xf32> to vector<22x22xf32>
    %92 = arith.mulf %86, %91 : vector<22x22xf32>
    %93 = vector.broadcast %6 : vector<1x64xf32> to vector<22x64xf32>
    %94 = arith.mulf %57, %93 : vector<22x64xf32>
    %cst_56 = arith.constant dense<0.000000e+00> : vector<22x64xf32>
    %95 = tpu.matmul %92, %94, %cst_56 {dimension_numbers = #tpu.dot_dimension_numbers<[1], [0], [0], [1], [0, 0, 1, 1], [], []>} : vector<22x22xf32>, vector<22x64xf32>, vector<22x64xf32> -> vector<22x64xf32>
    %96 = arith.addf %77, %95 : vector<22x64xf32>
    %97 = vector.broadcast %8 : vector<1x64xf32> to vector<22x64xf32>
    %98 = arith.mulf %54, %97 : vector<22x64xf32>
    %cst_57 = arith.constant dense<0.000000e+00> : vector<22x22xf32>
    %99 = tpu.matmul %45, %98, %cst_57 {dimension_numbers = #tpu.dot_dimension_numbers<[1], [1], [0], [0], [0, 0, 1, 0], [], []>} : vector<22x64xf32>, vector<22x64xf32>, vector<22x22xf32> -> vector<22x22xf32>
    %100 = arith.addf %99, %2 : vector<22x22xf32>
    %cst_58 = arith.constant dense<0xFF800000> : vector<22xf32>
    %101 = vector.multi_reduction <maximumf>, %100, %cst_58 [1] : vector<22x22xf32> to vector<22xf32>
    %102 = vector.shape_cast %101 : vector<22xf32> to vector<22x1xf32>
    %103 = vector.broadcast %102 : vector<22x1xf32> to vector<22x22xf32>
    %104 = arith.subf %100, %103 : vector<22x22xf32>
    %105 = math.exp %104 : vector<22x22xf32>
    %cst_59 = arith.constant dense<0.000000e+00> : vector<22xf32>
    %106 = vector.multi_reduction <add>, %105, %cst_59 [1] : vector<22x22xf32> to vector<22xf32>
    %107 = vector.shape_cast %106 : vector<22xf32> to vector<22x1xf32>
    %cst_60 = arith.constant 1.000000e+00 : f32
    %108 = vector.broadcast %cst_60 : f32 to vector<22x1xf32>
    %109 = arith.divf %108, %107 : vector<22x1xf32>
    %110 = vector.broadcast %109 : vector<22x1xf32> to vector<22x22xf32>
    %111 = arith.mulf %105, %110 : vector<22x22xf32>
    %112 = vector.broadcast %8 : vector<1x64xf32> to vector<22x64xf32>
    %113 = arith.mulf %57, %112 : vector<22x64xf32>
    %cst_61 = arith.constant dense<0.000000e+00> : vector<22x64xf32>
    %114 = tpu.matmul %111, %113, %cst_61 {dimension_numbers = #tpu.dot_dimension_numbers<[1], [0], [0], [1], [0, 0, 1, 1], [], []>} : vector<22x22xf32>, vector<22x64xf32>, vector<22x64xf32> -> vector<22x64xf32>
    %115 = arith.addf %96, %114 : vector<22x64xf32>
    %116 = vector.broadcast %10 : vector<1x64xf32> to vector<22x64xf32>
    %117 = arith.mulf %54, %116 : vector<22x64xf32>
    %cst_62 = arith.constant dense<0.000000e+00> : vector<22x22xf32>
    %118 = tpu.matmul %45, %117, %cst_62 {dimension_numbers = #tpu.dot_dimension_numbers<[1], [1], [0], [0], [0, 0, 1, 0], [], []>} : vector<22x64xf32>, vector<22x64xf32>, vector<22x22xf32> -> vector<22x22xf32>
    %119 = arith.addf %118, %2 : vector<22x22xf32>
    %cst_63 = arith.constant dense<0xFF800000> : vector<22xf32>
    %120 = vector.multi_reduction <maximumf>, %119, %cst_63 [1] : vector<22x22xf32> to vector<22xf32>
    %121 = vector.shape_cast %120 : vector<22xf32> to vector<22x1xf32>
    %122 = vector.broadcast %121 : vector<22x1xf32> to vector<22x22xf32>
    %123 = arith.subf %119, %122 : vector<22x22xf32>
    %124 = math.exp %123 : vector<22x22xf32>
    %cst_64 = arith.constant dense<0.000000e+00> : vector<22xf32>
    %125 = vector.multi_reduction <add>, %124, %cst_64 [1] : vector<22x22xf32> to vector<22xf32>
    %126 = vector.shape_cast %125 : vector<22xf32> to vector<22x1xf32>
    %cst_65 = arith.constant 1.000000e+00 : f32
    %127 = vector.broadcast %cst_65 : f32 to vector<22x1xf32>
    %128 = arith.divf %127, %126 : vector<22x1xf32>
    %129 = vector.broadcast %128 : vector<22x1xf32> to vector<22x22xf32>
    %130 = arith.mulf %124, %129 : vector<22x22xf32>
    %131 = vector.broadcast %10 : vector<1x64xf32> to vector<22x64xf32>
    %132 = arith.mulf %57, %131 : vector<22x64xf32>
    %cst_66 = arith.constant dense<0.000000e+00> : vector<22x64xf32>
    %133 = tpu.matmul %130, %132, %cst_66 {dimension_numbers = #tpu.dot_dimension_numbers<[1], [0], [0], [1], [0, 0, 1, 1], [], []>} : vector<22x22xf32>, vector<22x64xf32>, vector<22x64xf32> -> vector<22x64xf32>
    %134 = arith.addf %115, %133 : vector<22x64xf32>
    %c0_67 = arith.constant 0 : index
    %c0_68 = arith.constant 0 : index
    %c0_69 = arith.constant 0 : index
    %135 = vector.load %arg8[%c0_67, %c0_68, %c0_69] : memref<2x64x64xf32, #tpu.memory_space<vmem>>, vector<1x64x64xf32>
    %136 = vector.shape_cast %135 : vector<1x64x64xf32> to vector<64x64xf32>
    %cst_70 = arith.constant dense<0.000000e+00> : vector<22x64xf32>
    %137 = tpu.matmul %134, %136, %cst_70 {dimension_numbers = #tpu.dot_dimension_numbers<[1], [0], [0], [1], [0, 0, 1, 1], [], []>} : vector<22x64xf32>, vector<64x64xf32>, vector<22x64xf32> -> vector<22x64xf32>
    %138 = arith.addf %26, %137 : vector<22x64xf32>
    %139 = arith.mulf %138, %138 : vector<22x64xf32>
    %cst_71 = arith.constant dense<0.000000e+00> : vector<22xf32>
    %140 = vector.multi_reduction <add>, %139, %cst_71 [1] : vector<22x64xf32> to vector<22xf32>
    %141 = vector.shape_cast %140 : vector<22xf32> to vector<22x1xf32>
    %cst_72 = arith.constant 6.400000e+01 : f32
    %142 = vector.broadcast %cst_72 : f32 to vector<22x1xf32>
    %143 = arith.divf %141, %142 : vector<22x1xf32>
    %cst_73 = arith.constant 9.99999974E-6 : f32
    %144 = vector.broadcast %cst_73 : f32 to vector<22x1xf32>
    %145 = arith.addf %143, %144 : vector<22x1xf32>
    %146 = math.rsqrt %145 : vector<22x1xf32>
    %147 = vector.broadcast %146 : vector<22x1xf32> to vector<22x64xf32>
    %148 = arith.mulf %138, %147 : vector<22x64xf32>
    %c0_74 = arith.constant 0 : index
    %c0_75 = arith.constant 0 : index
    %c0_76 = arith.constant 0 : index
    %149 = vector.load %arg9[%c0_74, %c0_75, %c0_76] : memref<2x64x128xf32, #tpu.memory_space<vmem>>, vector<1x64x128xf32>
    %150 = vector.shape_cast %149 : vector<1x64x128xf32> to vector<64x128xf32>
    %cst_77 = arith.constant dense<0.000000e+00> : vector<22x128xf32>
    %151 = tpu.matmul %148, %150, %cst_77 {dimension_numbers = #tpu.dot_dimension_numbers<[1], [0], [0], [1], [0, 0, 1, 1], [], []>} : vector<22x64xf32>, vector<64x128xf32>, vector<22x128xf32> -> vector<22x128xf32>
    %c0_78 = arith.constant 0 : index
    %c0_79 = arith.constant 0 : index
    %c0_80 = arith.constant 0 : index
    %152 = vector.load %arg10[%c0_78, %c0_79, %c0_80] : memref<2x64x128xf32, #tpu.memory_space<vmem>>, vector<1x64x128xf32>
    %153 = vector.shape_cast %152 : vector<1x64x128xf32> to vector<64x128xf32>
    %cst_81 = arith.constant dense<0.000000e+00> : vector<22x128xf32>
    %154 = tpu.matmul %148, %153, %cst_81 {dimension_numbers = #tpu.dot_dimension_numbers<[1], [0], [0], [1], [0, 0, 1, 1], [], []>} : vector<22x64xf32>, vector<64x128xf32>, vector<22x128xf32> -> vector<22x128xf32>
    %155 = arith.negf %151 : vector<22x128xf32>
    %156 = math.exp %155 : vector<22x128xf32>
    %cst_82 = arith.constant 1.000000e+00 : f32
    %157 = vector.broadcast %cst_82 : f32 to vector<22x128xf32>
    %158 = arith.addf %157, %156 : vector<22x128xf32>
    %159 = arith.divf %157, %158 : vector<22x128xf32>
    %160 = arith.mulf %151, %159 : vector<22x128xf32>
    %161 = arith.mulf %160, %154 : vector<22x128xf32>
    %c0_83 = arith.constant 0 : index
    %c0_84 = arith.constant 0 : index
    %c0_85 = arith.constant 0 : index
    %162 = vector.load %arg11[%c0_83, %c0_84, %c0_85] : memref<2x128x64xf32, #tpu.memory_space<vmem>>, vector<1x128x64xf32>
    %163 = vector.shape_cast %162 : vector<1x128x64xf32> to vector<128x64xf32>
    %cst_86 = arith.constant dense<0.000000e+00> : vector<22x64xf32>
    %164 = tpu.matmul %161, %163, %cst_86 {dimension_numbers = #tpu.dot_dimension_numbers<[1], [0], [0], [1], [0, 0, 1, 1], [], []>} : vector<22x128xf32>, vector<128x64xf32>, vector<22x64xf32> -> vector<22x64xf32>
    %165 = arith.addf %138, %164 : vector<22x64xf32>
    %166 = arith.mulf %165, %165 : vector<22x64xf32>
    %cst_87 = arith.constant dense<0.000000e+00> : vector<22xf32>
    %167 = vector.multi_reduction <add>, %166, %cst_87 [1] : vector<22x64xf32> to vector<22xf32>
    %168 = vector.shape_cast %167 : vector<22xf32> to vector<22x1xf32>
    %cst_88 = arith.constant 6.400000e+01 : f32
    %169 = vector.broadcast %cst_88 : f32 to vector<22x1xf32>
    %170 = arith.divf %168, %169 : vector<22x1xf32>
    %cst_89 = arith.constant 9.99999974E-6 : f32
    %171 = vector.broadcast %cst_89 : f32 to vector<22x1xf32>
    %172 = arith.addf %170, %171 : vector<22x1xf32>
    %173 = math.rsqrt %172 : vector<22x1xf32>
    %174 = vector.broadcast %173 : vector<22x1xf32> to vector<22x64xf32>
    %175 = arith.mulf %165, %174 : vector<22x64xf32>
    %c1_90 = arith.constant 1 : index
    %c0_91 = arith.constant 0 : index
    %c0_92 = arith.constant 0 : index
    %176 = vector.load %arg3[%c1_90, %c0_91, %c0_92] : memref<2x64x64xf32, #tpu.memory_space<vmem>>, vector<1x64x64xf32>
    %177 = vector.shape_cast %176 : vector<1x64x64xf32> to vector<64x64xf32>
    %cst_93 = arith.constant dense<0.000000e+00> : vector<22x64xf32>
    %178 = tpu.matmul %175, %177, %cst_93 {dimension_numbers = #tpu.dot_dimension_numbers<[1], [0], [0], [1], [0, 0, 1, 1], [], []>} : vector<22x64xf32>, vector<64x64xf32>, vector<22x64xf32> -> vector<22x64xf32>
    %179 = arith.mulf %178, %0 : vector<22x64xf32>
    %c1_94 = arith.constant 1 : index
    %c0_95 = arith.constant 0 : index
    %c0_96 = arith.constant 0 : index
    %180 = vector.load %arg4[%c1_94, %c0_95, %c0_96] : memref<2x64x64xf32, #tpu.memory_space<vmem>>, vector<1x64x64xf32>
    %181 = vector.shape_cast %180 : vector<1x64x64xf32> to vector<64x64xf32>
    %cst_97 = arith.constant dense<0.000000e+00> : vector<22x64xf32>
    %182 = tpu.matmul %175, %181, %cst_97 {dimension_numbers = #tpu.dot_dimension_numbers<[1], [0], [0], [1], [0, 0, 1, 1], [], []>} : vector<22x64xf32>, vector<64x64xf32>, vector<22x64xf32> -> vector<22x64xf32>
    %183 = arith.mulf %182, %1 : vector<22x64xf32>
    %184 = arith.addf %179, %183 : vector<22x64xf32>
    %c1_98 = arith.constant 1 : index
    %c0_99 = arith.constant 0 : index
    %c0_100 = arith.constant 0 : index
    %185 = vector.load %arg5[%c1_98, %c0_99, %c0_100] : memref<2x64x64xf32, #tpu.memory_space<vmem>>, vector<1x64x64xf32>
    %186 = vector.shape_cast %185 : vector<1x64x64xf32> to vector<64x64xf32>
    %cst_101 = arith.constant dense<0.000000e+00> : vector<22x64xf32>
    %187 = tpu.matmul %175, %186, %cst_101 {dimension_numbers = #tpu.dot_dimension_numbers<[1], [0], [0], [1], [0, 0, 1, 1], [], []>} : vector<22x64xf32>, vector<64x64xf32>, vector<22x64xf32> -> vector<22x64xf32>
    %188 = arith.mulf %187, %0 : vector<22x64xf32>
    %c1_102 = arith.constant 1 : index
    %c0_103 = arith.constant 0 : index
    %c0_104 = arith.constant 0 : index
    %189 = vector.load %arg6[%c1_102, %c0_103, %c0_104] : memref<2x64x64xf32, #tpu.memory_space<vmem>>, vector<1x64x64xf32>
    %190 = vector.shape_cast %189 : vector<1x64x64xf32> to vector<64x64xf32>
    %cst_105 = arith.constant dense<0.000000e+00> : vector<22x64xf32>
    %191 = tpu.matmul %175, %190, %cst_105 {dimension_numbers = #tpu.dot_dimension_numbers<[1], [0], [0], [1], [0, 0, 1, 1], [], []>} : vector<22x64xf32>, vector<64x64xf32>, vector<22x64xf32> -> vector<22x64xf32>
    %192 = arith.mulf %191, %1 : vector<22x64xf32>
    %193 = arith.addf %188, %192 : vector<22x64xf32>
    %c1_106 = arith.constant 1 : index
    %c0_107 = arith.constant 0 : index
    %c0_108 = arith.constant 0 : index
    %194 = vector.load %arg7[%c1_106, %c0_107, %c0_108] : memref<2x64x64xf32, #tpu.memory_space<vmem>>, vector<1x64x64xf32>
    %195 = vector.shape_cast %194 : vector<1x64x64xf32> to vector<64x64xf32>
    %cst_109 = arith.constant dense<0.000000e+00> : vector<22x64xf32>
    %196 = tpu.matmul %175, %195, %cst_109 {dimension_numbers = #tpu.dot_dimension_numbers<[1], [0], [0], [1], [0, 0, 1, 1], [], []>} : vector<22x64xf32>, vector<64x64xf32>, vector<22x64xf32> -> vector<22x64xf32>
    %cst_110 = arith.constant 0.000000e+00 : f32
    %197 = vector.broadcast %cst_110 : f32 to vector<22x64xf32>
    %198 = vector.broadcast %4 : vector<1x64xf32> to vector<22x64xf32>
    %199 = arith.mulf %193, %198 : vector<22x64xf32>
    %cst_111 = arith.constant dense<0.000000e+00> : vector<22x22xf32>
    %200 = tpu.matmul %184, %199, %cst_111 {dimension_numbers = #tpu.dot_dimension_numbers<[1], [1], [0], [0], [0, 0, 1, 0], [], []>} : vector<22x64xf32>, vector<22x64xf32>, vector<22x22xf32> -> vector<22x22xf32>
    %201 = arith.addf %200, %2 : vector<22x22xf32>
    %cst_112 = arith.constant dense<0xFF800000> : vector<22xf32>
    %202 = vector.multi_reduction <maximumf>, %201, %cst_112 [1] : vector<22x22xf32> to vector<22xf32>
    %203 = vector.shape_cast %202 : vector<22xf32> to vector<22x1xf32>
    %204 = vector.broadcast %203 : vector<22x1xf32> to vector<22x22xf32>
    %205 = arith.subf %201, %204 : vector<22x22xf32>
    %206 = math.exp %205 : vector<22x22xf32>
    %cst_113 = arith.constant dense<0.000000e+00> : vector<22xf32>
    %207 = vector.multi_reduction <add>, %206, %cst_113 [1] : vector<22x22xf32> to vector<22xf32>
    %208 = vector.shape_cast %207 : vector<22xf32> to vector<22x1xf32>
    %cst_114 = arith.constant 1.000000e+00 : f32
    %209 = vector.broadcast %cst_114 : f32 to vector<22x1xf32>
    %210 = arith.divf %209, %208 : vector<22x1xf32>
    %211 = vector.broadcast %210 : vector<22x1xf32> to vector<22x22xf32>
    %212 = arith.mulf %206, %211 : vector<22x22xf32>
    %213 = vector.broadcast %4 : vector<1x64xf32> to vector<22x64xf32>
    %214 = arith.mulf %196, %213 : vector<22x64xf32>
    %cst_115 = arith.constant dense<0.000000e+00> : vector<22x64xf32>
    %215 = tpu.matmul %212, %214, %cst_115 {dimension_numbers = #tpu.dot_dimension_numbers<[1], [0], [0], [1], [0, 0, 1, 1], [], []>} : vector<22x22xf32>, vector<22x64xf32>, vector<22x64xf32> -> vector<22x64xf32>
    %216 = arith.addf %197, %215 : vector<22x64xf32>
    %217 = vector.broadcast %6 : vector<1x64xf32> to vector<22x64xf32>
    %218 = arith.mulf %193, %217 : vector<22x64xf32>
    %cst_116 = arith.constant dense<0.000000e+00> : vector<22x22xf32>
    %219 = tpu.matmul %184, %218, %cst_116 {dimension_numbers = #tpu.dot_dimension_numbers<[1], [1], [0], [0], [0, 0, 1, 0], [], []>} : vector<22x64xf32>, vector<22x64xf32>, vector<22x22xf32> -> vector<22x22xf32>
    %220 = arith.addf %219, %2 : vector<22x22xf32>
    %cst_117 = arith.constant dense<0xFF800000> : vector<22xf32>
    %221 = vector.multi_reduction <maximumf>, %220, %cst_117 [1] : vector<22x22xf32> to vector<22xf32>
    %222 = vector.shape_cast %221 : vector<22xf32> to vector<22x1xf32>
    %223 = vector.broadcast %222 : vector<22x1xf32> to vector<22x22xf32>
    %224 = arith.subf %220, %223 : vector<22x22xf32>
    %225 = math.exp %224 : vector<22x22xf32>
    %cst_118 = arith.constant dense<0.000000e+00> : vector<22xf32>
    %226 = vector.multi_reduction <add>, %225, %cst_118 [1] : vector<22x22xf32> to vector<22xf32>
    %227 = vector.shape_cast %226 : vector<22xf32> to vector<22x1xf32>
    %cst_119 = arith.constant 1.000000e+00 : f32
    %228 = vector.broadcast %cst_119 : f32 to vector<22x1xf32>
    %229 = arith.divf %228, %227 : vector<22x1xf32>
    %230 = vector.broadcast %229 : vector<22x1xf32> to vector<22x22xf32>
    %231 = arith.mulf %225, %230 : vector<22x22xf32>
    %232 = vector.broadcast %6 : vector<1x64xf32> to vector<22x64xf32>
    %233 = arith.mulf %196, %232 : vector<22x64xf32>
    %cst_120 = arith.constant dense<0.000000e+00> : vector<22x64xf32>
    %234 = tpu.matmul %231, %233, %cst_120 {dimension_numbers = #tpu.dot_dimension_numbers<[1], [0], [0], [1], [0, 0, 1, 1], [], []>} : vector<22x22xf32>, vector<22x64xf32>, vector<22x64xf32> -> vector<22x64xf32>
    %235 = arith.addf %216, %234 : vector<22x64xf32>
    %236 = vector.broadcast %8 : vector<1x64xf32> to vector<22x64xf32>
    %237 = arith.mulf %193, %236 : vector<22x64xf32>
    %cst_121 = arith.constant dense<0.000000e+00> : vector<22x22xf32>
    %238 = tpu.matmul %184, %237, %cst_121 {dimension_numbers = #tpu.dot_dimension_numbers<[1], [1], [0], [0], [0, 0, 1, 0], [], []>} : vector<22x64xf32>, vector<22x64xf32>, vector<22x22xf32> -> vector<22x22xf32>
    %239 = arith.addf %238, %2 : vector<22x22xf32>
    %cst_122 = arith.constant dense<0xFF800000> : vector<22xf32>
    %240 = vector.multi_reduction <maximumf>, %239, %cst_122 [1] : vector<22x22xf32> to vector<22xf32>
    %241 = vector.shape_cast %240 : vector<22xf32> to vector<22x1xf32>
    %242 = vector.broadcast %241 : vector<22x1xf32> to vector<22x22xf32>
    %243 = arith.subf %239, %242 : vector<22x22xf32>
    %244 = math.exp %243 : vector<22x22xf32>
    %cst_123 = arith.constant dense<0.000000e+00> : vector<22xf32>
    %245 = vector.multi_reduction <add>, %244, %cst_123 [1] : vector<22x22xf32> to vector<22xf32>
    %246 = vector.shape_cast %245 : vector<22xf32> to vector<22x1xf32>
    %cst_124 = arith.constant 1.000000e+00 : f32
    %247 = vector.broadcast %cst_124 : f32 to vector<22x1xf32>
    %248 = arith.divf %247, %246 : vector<22x1xf32>
    %249 = vector.broadcast %248 : vector<22x1xf32> to vector<22x22xf32>
    %250 = arith.mulf %244, %249 : vector<22x22xf32>
    %251 = vector.broadcast %8 : vector<1x64xf32> to vector<22x64xf32>
    %252 = arith.mulf %196, %251 : vector<22x64xf32>
    %cst_125 = arith.constant dense<0.000000e+00> : vector<22x64xf32>
    %253 = tpu.matmul %250, %252, %cst_125 {dimension_numbers = #tpu.dot_dimension_numbers<[1], [0], [0], [1], [0, 0, 1, 1], [], []>} : vector<22x22xf32>, vector<22x64xf32>, vector<22x64xf32> -> vector<22x64xf32>
    %254 = arith.addf %235, %253 : vector<22x64xf32>
    %255 = vector.broadcast %10 : vector<1x64xf32> to vector<22x64xf32>
    %256 = arith.mulf %193, %255 : vector<22x64xf32>
    %cst_126 = arith.constant dense<0.000000e+00> : vector<22x22xf32>
    %257 = tpu.matmul %184, %256, %cst_126 {dimension_numbers = #tpu.dot_dimension_numbers<[1], [1], [0], [0], [0, 0, 1, 0], [], []>} : vector<22x64xf32>, vector<22x64xf32>, vector<22x22xf32> -> vector<22x22xf32>
    %258 = arith.addf %257, %2 : vector<22x22xf32>
    %cst_127 = arith.constant dense<0xFF800000> : vector<22xf32>
    %259 = vector.multi_reduction <maximumf>, %258, %cst_127 [1] : vector<22x22xf32> to vector<22xf32>
    %260 = vector.shape_cast %259 : vector<22xf32> to vector<22x1xf32>
    %261 = vector.broadcast %260 : vector<22x1xf32> to vector<22x22xf32>
    %262 = arith.subf %258, %261 : vector<22x22xf32>
    %263 = math.exp %262 : vector<22x22xf32>
    %cst_128 = arith.constant dense<0.000000e+00> : vector<22xf32>
    %264 = vector.multi_reduction <add>, %263, %cst_128 [1] : vector<22x22xf32> to vector<22xf32>
    %265 = vector.shape_cast %264 : vector<22xf32> to vector<22x1xf32>
    %cst_129 = arith.constant 1.000000e+00 : f32
    %266 = vector.broadcast %cst_129 : f32 to vector<22x1xf32>
    %267 = arith.divf %266, %265 : vector<22x1xf32>
    %268 = vector.broadcast %267 : vector<22x1xf32> to vector<22x22xf32>
    %269 = arith.mulf %263, %268 : vector<22x22xf32>
    %270 = vector.broadcast %10 : vector<1x64xf32> to vector<22x64xf32>
    %271 = arith.mulf %196, %270 : vector<22x64xf32>
    %cst_130 = arith.constant dense<0.000000e+00> : vector<22x64xf32>
    %272 = tpu.matmul %269, %271, %cst_130 {dimension_numbers = #tpu.dot_dimension_numbers<[1], [0], [0], [1], [0, 0, 1, 1], [], []>} : vector<22x22xf32>, vector<22x64xf32>, vector<22x64xf32> -> vector<22x64xf32>
    %273 = arith.addf %254, %272 : vector<22x64xf32>
    %c1_131 = arith.constant 1 : index
    %c0_132 = arith.constant 0 : index
    %c0_133 = arith.constant 0 : index
    %274 = vector.load %arg8[%c1_131, %c0_132, %c0_133] : memref<2x64x64xf32, #tpu.memory_space<vmem>>, vector<1x64x64xf32>
    %275 = vector.shape_cast %274 : vector<1x64x64xf32> to vector<64x64xf32>
    %cst_134 = arith.constant dense<0.000000e+00> : vector<22x64xf32>
    %276 = tpu.matmul %273, %275, %cst_134 {dimension_numbers = #tpu.dot_dimension_numbers<[1], [0], [0], [1], [0, 0, 1, 1], [], []>} : vector<22x64xf32>, vector<64x64xf32>, vector<22x64xf32> -> vector<22x64xf32>
    %277 = arith.addf %165, %276 : vector<22x64xf32>
    %278 = arith.mulf %277, %277 : vector<22x64xf32>
    %cst_135 = arith.constant dense<0.000000e+00> : vector<22xf32>
    %279 = vector.multi_reduction <add>, %278, %cst_135 [1] : vector<22x64xf32> to vector<22xf32>
    %280 = vector.shape_cast %279 : vector<22xf32> to vector<22x1xf32>
    %cst_136 = arith.constant 6.400000e+01 : f32
    %281 = vector.broadcast %cst_136 : f32 to vector<22x1xf32>
    %282 = arith.divf %280, %281 : vector<22x1xf32>
    %cst_137 = arith.constant 9.99999974E-6 : f32
    %283 = vector.broadcast %cst_137 : f32 to vector<22x1xf32>
    %284 = arith.addf %282, %283 : vector<22x1xf32>
    %285 = math.rsqrt %284 : vector<22x1xf32>
    %286 = vector.broadcast %285 : vector<22x1xf32> to vector<22x64xf32>
    %287 = arith.mulf %277, %286 : vector<22x64xf32>
    %c1_138 = arith.constant 1 : index
    %c0_139 = arith.constant 0 : index
    %c0_140 = arith.constant 0 : index
    %288 = vector.load %arg9[%c1_138, %c0_139, %c0_140] : memref<2x64x128xf32, #tpu.memory_space<vmem>>, vector<1x64x128xf32>
    %289 = vector.shape_cast %288 : vector<1x64x128xf32> to vector<64x128xf32>
    %cst_141 = arith.constant dense<0.000000e+00> : vector<22x128xf32>
    %290 = tpu.matmul %287, %289, %cst_141 {dimension_numbers = #tpu.dot_dimension_numbers<[1], [0], [0], [1], [0, 0, 1, 1], [], []>} : vector<22x64xf32>, vector<64x128xf32>, vector<22x128xf32> -> vector<22x128xf32>
    %c1_142 = arith.constant 1 : index
    %c0_143 = arith.constant 0 : index
    %c0_144 = arith.constant 0 : index
    %291 = vector.load %arg10[%c1_142, %c0_143, %c0_144] : memref<2x64x128xf32, #tpu.memory_space<vmem>>, vector<1x64x128xf32>
    %292 = vector.shape_cast %291 : vector<1x64x128xf32> to vector<64x128xf32>
    %cst_145 = arith.constant dense<0.000000e+00> : vector<22x128xf32>
    %293 = tpu.matmul %287, %292, %cst_145 {dimension_numbers = #tpu.dot_dimension_numbers<[1], [0], [0], [1], [0, 0, 1, 1], [], []>} : vector<22x64xf32>, vector<64x128xf32>, vector<22x128xf32> -> vector<22x128xf32>
    %294 = arith.negf %290 : vector<22x128xf32>
    %295 = math.exp %294 : vector<22x128xf32>
    %cst_146 = arith.constant 1.000000e+00 : f32
    %296 = vector.broadcast %cst_146 : f32 to vector<22x128xf32>
    %297 = arith.addf %296, %295 : vector<22x128xf32>
    %298 = arith.divf %296, %297 : vector<22x128xf32>
    %299 = arith.mulf %290, %298 : vector<22x128xf32>
    %300 = arith.mulf %299, %293 : vector<22x128xf32>
    %c1_147 = arith.constant 1 : index
    %c0_148 = arith.constant 0 : index
    %c0_149 = arith.constant 0 : index
    %301 = vector.load %arg11[%c1_147, %c0_148, %c0_149] : memref<2x128x64xf32, #tpu.memory_space<vmem>>, vector<1x128x64xf32>
    %302 = vector.shape_cast %301 : vector<1x128x64xf32> to vector<128x64xf32>
    %cst_150 = arith.constant dense<0.000000e+00> : vector<22x64xf32>
    %303 = tpu.matmul %300, %302, %cst_150 {dimension_numbers = #tpu.dot_dimension_numbers<[1], [0], [0], [1], [0, 0, 1, 1], [], []>} : vector<22x128xf32>, vector<128x64xf32>, vector<22x64xf32> -> vector<22x64xf32>
    %304 = arith.addf %277, %303 : vector<22x64xf32>
    %c0_151 = arith.constant 0 : index
    %c0_152 = arith.constant 0 : index
    %305 = vector.load %arg16[%c0_151, %c0_152] : memref<22x64xf32, #tpu.memory_space<vmem>>, vector<22x64xf32>
    tpu.vector_store %arg16[%c0_151, %c0_152], %304 {strides = array<i32>} : memref<22x64xf32, #tpu.memory_space<vmem>>, vector<22x64xf32>,
    return
  }
}

</mosaic_0001>

<llo_original>
// kernel: squeeze.3
$region0: #{squeeze.3}
  %s0 = inlined_call_operand.vmem [shape: f32[1,3,16,24], index: 0, kind: input, shape index: {}]
  %s1 = inlined_call_operand.vmem [shape: f32[3,2,8,3,8], index: 1, kind: output, shape index: {}]
  $region1: #{squeeze.3} parent=0
    #allocation0 [shape = 'u8[294912]{0}', space=vmem, size = 0x48000, scoped, tag = 'scoped mem for output reshape']
    %v2 = vld [vmem:[%s0] sm:$0xff]
    %vm3 = vcmask 64512
    %4 = vst.msk [vmem:[#allocation0] ss:$8 sm:$0xf] %vm3, %v2
    %5 = vst.msk [vmem:[#allocation0] ss:$8 sm:$0xf0] %vm3, %v2
    %s6 = scalar_lea.vmem %s0, 8
    %v7 = vld [vmem:[%s6] sm:$0xff]
    %vm8 = vcmask 64512
    %s9 = scalar_lea.vmem [#allocation0], 64
    %10 = vst.msk [vmem:[%s9] ss:$8 sm:$0xf] %vm8, %v7
    %s11 = scalar_lea.vmem [#allocation0], 64
    %12 = vst.msk [vmem:[%s11] ss:$8 sm:$0xf0] %vm8, %v7
    %s13 = scalar_lea.vmem %s0, 16
    %v14 = vld [vmem:[%s13] sm:$0xff]
    %vm15 = vcmask 64512
    %s16 = scalar_lea.vmem [#allocation0], 128
    %17 = vst.msk [vmem:[%s16] ss:$8 sm:$0xf] %vm15, %v14
    %s18 = scalar_lea.vmem [#allocation0], 128
    %19 = vst.msk [vmem:[%s18] ss:$8 sm:$0xf0] %vm15, %v14
    %s20 = scalar_lea.vmem %s0, 24
    %v21 = vld [vmem:[%s20] sm:$0xff]
    %vm22 = vcmask 64512
    %s23 = scalar_lea.vmem [#allocation0], 192
    %24 = vst.msk [vmem:[%s23] ss:$8 sm:$0xf] %vm22, %v21
    %s25 = scalar_lea.vmem [#allocation0], 192
    %26 = vst.msk [vmem:[%s25] ss:$8 sm:$0xf0] %vm22, %v21
    %s27 = scalar_lea.vmem %s0, 32
    %v28 = vld [vmem:[%s27] sm:$0xff]
    %vm29 = vcmask 64512
    %s30 = scalar_lea.vmem [#allocation0], 256
    %31 = vst.msk [vmem:[%s30] ss:$8 sm:$0xf] %vm29, %v28
    %s32 = scalar_lea.vmem [#allocation0], 256
    %33 = vst.msk [vmem:[%s32] ss:$8 sm:$0xf0] %vm29, %v28
    %s34 = scalar_lea.vmem %s0, 40
    %v35 = vld [vmem:[%s34] sm:$0xff]
    %vm36 = vcmask 64512
    %s37 = scalar_lea.vmem [#allocation0], 320
    %38 = vst.msk [vmem:[%s37] ss:$8 sm:$0xf] %vm36, %v35
    %s39 = scalar_lea.vmem [#allocation0], 320
    %40 = vst.msk [vmem:[%s39] ss:$8 sm:$0xf0] %vm36, %v35
    %s41 = scalar_lea.vmem %s0, 48
    %v42 = vld [vmem:[%s41] sm:$0xff]
    %vm43 = vcmask 64512
    %s44 = scalar_lea.vmem [#allocation0], 384
    %45 = vst.msk [vmem:[%s44] ss:$8 sm:$0xf] %vm43, %v42
    %s46 = scalar_lea.vmem [#allocation0], 384
    %47 = vst.msk [vmem:[%s46] ss:$8 sm:$0xf0] %vm43, %v42
    %s48 = scalar_lea.vmem %s0, 56
    %v49 = vld [vmem:[%s48] sm:$0xff]
    %vm50 = vcmask 64512
    %s51 = scalar_lea.vmem [#allocation0], 448
    %52 = vst.msk [vmem:[%s51] ss:$8 sm:$0xf] %vm50, %v49
    %s53 = scalar_lea.vmem [#allocation0], 448
    %54 = vst.msk [vmem:[%s53] ss:$8 sm:$0xf0] %vm50, %v49
    %s55 = scalar_lea.vmem %s0, 64
    %v56 = vld [vmem:[%s55] sm:$0xff]
    %vm57 = vcmask 64512
    %s58 = scalar_lea.vmem [#allocation0], 512
    %59 = vst.msk [vmem:[%s58] ss:$8 sm:$0xf] %vm57, %v56
    %s60 = scalar_lea.vmem [#allocation0], 512
    %61 = vst.msk [vmem:[%s60] ss:$8 sm:$0xf0] %vm57, %v56
    %v62 = vld [vmem:[%s0] sm:$0xff]
    %63 = vrot.lane.b32.xlu0 %v62, 120
    %v64 = vpop.permute.xlu0 %63
    %vm65 = vcmask 64512
    %s66 = scalar_lea.vmem [#allocation0], 1
    %67 = vst.msk [vmem:[%s66] ss:$8 sm:$0xf] %vm65, %v64
    %s68 = scalar_lea.vmem [#allocation0], 1
    %69 = vst.msk [vmem:[%s68] ss:$8 sm:$0xf0] %vm65, %v64
    %s70 = scalar_lea.vmem %s0, 8
    %v71 = vld [vmem:[%s70] sm:$0xff]
    %72 = vrot.lane.b32.xlu0 %v71, 120
    %v73 = vpop.permute.xlu0 %72
    %vm74 = vcmask 64512
    %s75 = scalar_lea.vmem [#allocation0], 65
    %76 = vst.msk [vmem:[%s75] ss:$8 sm:$0xf] %vm74, %v73
    %s77 = scalar_lea.vmem [#allocation0], 65
    %78 = vst.msk [vmem:[%s77] ss:$8 sm:$0xf0] %vm74, %v73
    %s79 = scalar_lea.vmem %s0, 16
    %v80 = vld [vmem:[%s79] sm:$0xff]
    %81 = vrot.lane.b32.xlu0 %v80, 120
    %v82 = vpop.permute.xlu0 %81
    %vm83 = vcmask 64512
    %s84 = scalar_lea.vmem [#allocation0], 129
    %85 = vst.msk [vmem:[%s84] ss:$8 sm:$0xf] %vm83, %v82
    %s86 = scalar_lea.vmem [#allocation0], 129
    %87 = vst.msk [vmem:[%s86] ss:$8 sm:$0xf0] %vm83, %v82
    %s88 = scalar_lea.vmem %s0, 24
    %v89 = vld [vmem:[%s88] sm:$0xff]
    %90 = vrot.lane.b32.xlu0 %v89, 120
    %v91 = vpop.permute.xlu0 %90
    %vm92 = vcmask 64512
    %s93 = scalar_lea.vmem [#allocation0], 193
    %94 = vst.msk [vmem:[%s93] ss:$8 sm:$0xf] %vm92, %v91
    %s95 = scalar_lea.vmem [#allocation0], 193
    %96 = vst.msk [vmem:[%s95] ss:$8 sm:$0xf0] %vm92, %v91
    %s97 = scalar_lea.vmem %s0, 32
    %v98 = vld [vmem:[%s97] sm:$0xff]
    %99 = vrot.lane.b32.xlu0 %v98, 120
    %v100 = vpop.permute.xlu0 %99
    %vm101 = vcmask 64512
    %s102 = scalar_lea.vmem [#allocation0], 257
    %103 = vst.msk [vmem:[%s102] ss:$8 sm:$0xf] %vm101, %v100
    %s104 = scalar_lea.vmem [#allocation0], 257
    %105 = vst.msk [vmem:[%s104] ss:$8 sm:$0xf0] %vm101, %v100
    %s106 = scalar_lea.vmem %s0, 40
    %v107 = vld [vmem:[%s106] sm:$0xff]
    %108 = vrot.lane.b32.xlu0 %v107, 120
    %v109 = vpop.permute.xlu0 %108
    %vm110 = vcmask 64512
    %s111 = scalar_lea.vmem [#allocation0], 321
    %112 = vst.msk [vmem:[%s111] ss:$8 sm:$0xf] %vm110, %v109
    %s113 = scalar_lea.vmem [#allocation0], 321
    %114 = vst.msk [vmem:[%s113] ss:$8 sm:$0xf0] %vm110, %v109
    %s115 = scalar_lea.vmem %s0, 48
    %v116 = vld [vmem:[%s115] sm:$0xff]
    %117 = vrot.lane.b32.xlu0 %v116, 120
    %v118 = vpop.permute.xlu0 %117
    %vm119 = vcmask 64512
    %s120 = scalar_lea.vmem [#allocation0], 385
    %121 = vst.msk [vmem:[%s120] ss:$8 sm:$0xf] %vm119, %v118
    %s122 = scalar_lea.vmem [#allocation0], 385
    %123 = vst.msk [vmem:[%s122] ss:$8 sm:$0xf0] %vm119, %v118
    %s124 = scalar_lea.vmem %s0, 56
    %v125 = vld [vmem:[%s124] sm:$0xff]
    %126 = vrot.lane.b32.xlu0 %v125, 120
    %v127 = vpop.permute.xlu0 %126
    %vm128 = vcmask 64512
    %s129 = scalar_lea.vmem [#allocation0], 449
    %130 = vst.msk [vmem:[%s129] ss:$8 sm:$0xf] %vm128, %v127
    %s131 = scalar_lea.vmem [#allocation0], 449
    %132 = vst.msk [vmem:[%s131] ss:$8 sm:$0xf0] %vm128, %v127
    %s133 = scalar_lea.vmem %s0, 64
    %v134 = vld [vmem:[%s133] sm:$0xff]
    %135 = vrot.lane.b32.xlu0 %v134, 120
    %v136 = vpop.permute.xlu0 %135
    %vm137 = vcmask 64512
    %s138 = scalar_lea.vmem [#allocation0], 513
    %139 = vst.msk [vmem:[%s138] ss:$8 sm:$0xf] %vm137, %v136
    %s140 = scalar_lea.vmem [#allocation0], 513
    %141 = vst.msk [vmem:[%s140] ss:$8 sm:$0xf0] %vm137, %v136
    %s143 = sshllo.u32 0, 2
    %v145 = vld [vmem:[#allocation0] sm:%s143]
    %s146 = sshllo.u32 0, 2
    %147 = vst [vmem:[%s1] sm:%s146] %v145
    %s148 = scalar_lea.vmem [#allocation0], 8
    %v149 = vld [vmem:[%s148] sm:%s143]
    %s150 = sshllo.u32 0, 2
    %s151 = scalar_lea.vmem %s1, 2
    %152 = vst [vmem:[%s151] sm:%s150] %v149
    %s153 = scalar_lea.vmem [#allocation0], 16
    %v154 = vld [vmem:[%s153] sm:%s143]
    %s155 = sshllo.u32 0, 2
    %s156 = smul.addr 2, 2
    %s157 = scalar_lea.vmem %s1, %s156
    %158 = vst [vmem:[%s157] sm:%s155] %v154
    %s159 = scalar_lea.vmem [#allocation0], 24
    %v160 = vld [vmem:[%s159] sm:%s143]
    %s161 = sshllo.u32 0, 2
    %s162 = smul.addr 2, 3
    %s163 = scalar_lea.vmem %s1, %s162
    %164 = vst [vmem:[%s163] sm:%s161] %v160
    %s165 = scalar_lea.vmem [#allocation0], 32
    %v166 = vld [vmem:[%s165] sm:%s143]
    %s167 = sshllo.u32 0, 2
    %s168 = smul.addr 2, 4
    %s169 = scalar_lea.vmem %s1, %s168
    %170 = vst [vmem:[%s169] sm:%s167] %v166
    %s171 = scalar_lea.vmem [#allocation0], 40
    %v172 = vld [vmem:[%s171] sm:%s143]
    %s173 = sshllo.u32 0, 2
    %s174 = smul.addr 2, 5
    %s175 = scalar_lea.vmem %s1, %s174
    %176 = vst [vmem:[%s175] sm:%s173] %v172
    %s177 = scalar_lea.vmem [#allocation0], 48
    %v178 = vld [vmem:[%s177] sm:%s143]
    %s179 = sshllo.u32 0, 2
    %s180 = smul.addr 2, 6
    %s181 = scalar_lea.vmem %s1, %s180
    %182 = vst [vmem:[%s181] sm:%s179] %v178
    %s183 = scalar_lea.vmem [#allocation0], 56
    %v184 = vld [vmem:[%s183] sm:%s143]
    %s185 = sshllo.u32 0, 2
    %s186 = smul.addr 2, 7
    %s187 = scalar_lea.vmem %s1, %s186
    %188 = vst [vmem:[%s187] sm:%s185] %v184
    %s189 = scalar_lea.vmem [#allocation0], 64
    %v190 = vld [vmem:[%s189] sm:%s143]
    %s191 = sshllo.u32 0, 2
    %s192 = smul.addr 2, 8
    %s193 = scalar_lea.vmem %s1, %s192
    %194 = vst [vmem:[%s193] sm:%s191] %v190
    %s195 = scalar_lea.vmem [#allocation0], 72
    %v196 = vld [vmem:[%s195] sm:%s143]
    %s197 = sshllo.u32 0, 2
    %s198 = smul.addr 2, 9
    %s199 = scalar_lea.vmem %s1, %s198
    %200 = vst [vmem:[%s199] sm:%s197] %v196
    %s201 = scalar_lea.vmem [#allocation0], 80
    %v202 = vld [vmem:[%s201] sm:%s143]
    %s203 = sshllo.u32 0, 2
    %s204 = smul.addr 2, 10
    %s205 = scalar_lea.vmem %s1, %s204
    %206 = vst [vmem:[%s205] sm:%s203] %v202
    %s207 = scalar_lea.vmem [#allocation0], 88
    %v208 = vld [vmem:[%s207] sm:%s143]
    %s209 = sshllo.u32 0, 2
    %s210 = smul.addr 2, 11
    %s211 = scalar_lea.vmem %s1, %s210
    %212 = vst [vmem:[%s211] sm:%s209] %v208
    %s213 = scalar_lea.vmem [#allocation0], 96
    %v214 = vld [vmem:[%s213] sm:%s143]
    %s215 = sshllo.u32 0, 2
    %s216 = smul.addr 2, 12
    %s217 = scalar_lea.vmem %s1, %s216
    %218 = vst [vmem:[%s217] sm:%s215] %v214
    %s219 = scalar_lea.vmem [#allocation0], 104
    %v220 = vld [vmem:[%s219] sm:%s143]
    %s221 = sshllo.u32 0, 2
    %s222 = smul.addr 2, 13
    %s223 = scalar_lea.vmem %s1, %s222
    %224 = vst [vmem:[%s223] sm:%s221] %v220
    %s225 = scalar_lea.vmem [#allocation0], 112
    %v226 = vld [vmem:[%s225] sm:%s143]
    %s227 = sshllo.u32 0, 2
    %s228 = smul.addr 2, 14
    %s229 = scalar_lea.vmem %s1, %s228
    %230 = vst [vmem:[%s229] sm:%s227] %v226
    %s231 = scalar_lea.vmem [#allocation0], 120
    %v232 = vld [vmem:[%s231] sm:%s143]
    %s233 = sshllo.u32 0, 2
    %s234 = smul.addr 2, 15
    %s235 = scalar_lea.vmem %s1, %s234
    %236 = vst [vmem:[%s235] sm:%s233] %v232
    %s237 = scalar_lea.vmem [#allocation0], 128
    %v238 = vld [vmem:[%s237] sm:%s143]
    %s239 = sshllo.u32 0, 2
    %s240 = smul.addr 2, 16
    %s241 = scalar_lea.vmem %s1, %s240
    %242 = vst [vmem:[%s241] sm:%s239] %v238
    %s243 = scalar_lea.vmem [#allocation0], 136
    %v244 = vld [vmem:[%s243] sm:%s143]
    %s245 = sshllo.u32 0, 2
    %s246 = smul.addr 2, 17
    %s247 = scalar_lea.vmem %s1, %s246
    %248 = vst [vmem:[%s247] sm:%s245] %v244
    %s249 = scalar_lea.vmem [#allocation0], 144
    %v250 = vld [vmem:[%s249] sm:%s143]
    %s251 = sshllo.u32 0, 2
    %s252 = smul.addr 2, 18
    %s253 = scalar_lea.vmem %s1, %s252
    %254 = vst [vmem:[%s253] sm:%s251] %v250
    %s255 = scalar_lea.vmem [#allocation0], 152
    %v256 = vld [vmem:[%s255] sm:%s143]
    %s257 = sshllo.u32 0, 2
    %s258 = smul.addr 2, 19
    %s259 = scalar_lea.vmem %s1, %s258
    %260 = vst [vmem:[%s259] sm:%s257] %v256
    %s261 = scalar_lea.vmem [#allocation0], 160
    %v262 = vld [vmem:[%s261] sm:%s143]
    %s263 = sshllo.u32 0, 2
    %s264 = smul.addr 2, 20
    %s265 = scalar_lea.vmem %s1, %s264
    %266 = vst [vmem:[%s265] sm:%s263] %v262
    %s267 = scalar_lea.vmem [#allocation0], 168
    %v268 = vld [vmem:[%s267] sm:%s143]
    %s269 = sshllo.u32 0, 2
    %s270 = smul.addr 2, 21
    %s271 = scalar_lea.vmem %s1, %s270
    %272 = vst [vmem:[%s271] sm:%s269] %v268
    %s273 = scalar_lea.vmem [#allocation0], 176
    %v274 = vld [vmem:[%s273] sm:%s143]
    %s275 = sshllo.u32 0, 2
    %s276 = smul.addr 2, 22
    %s277 = scalar_lea.vmem %s1, %s276
    %278 = vst [vmem:[%s277] sm:%s275] %v274
    %s279 = scalar_lea.vmem [#allocation0], 184
    %v280 = vld [vmem:[%s279] sm:%s143]
    %s281 = sshllo.u32 0, 2
    %s282 = smul.addr 2, 23
    %s283 = scalar_lea.vmem %s1, %s282
    %284 = vst [vmem:[%s283] sm:%s281] %v280
    %s285 = scalar_lea.vmem [#allocation0], 192
    %v286 = vld [vmem:[%s285] sm:%s143]
    %s287 = sshllo.u32 0, 2
    %s288 = smul.addr 2, 24
    %s289 = scalar_lea.vmem %s1, %s288
    %290 = vst [vmem:[%s289] sm:%s287] %v286
    %s291 = scalar_lea.vmem [#allocation0], 200
    %v292 = vld [vmem:[%s291] sm:%s143]
    %s293 = sshllo.u32 0, 2
    %s294 = smul.addr 2, 25
    %s295 = scalar_lea.vmem %s1, %s294
    %296 = vst [vmem:[%s295] sm:%s293] %v292
    %s297 = scalar_lea.vmem [#allocation0], 208
    %v298 = vld [vmem:[%s297] sm:%s143]
    %s299 = sshllo.u32 0, 2
    %s300 = smul.addr 2, 26
    %s301 = scalar_lea.vmem %s1, %s300
    %302 = vst [vmem:[%s301] sm:%s299] %v298
    %s303 = scalar_lea.vmem [#allocation0], 216
    %v304 = vld [vmem:[%s303] sm:%s143]
    %s305 = sshllo.u32 0, 2
    %s306 = smul.addr 2, 27
    %s307 = scalar_lea.vmem %s1, %s306
    %308 = vst [vmem:[%s307] sm:%s305] %v304
    %s309 = scalar_lea.vmem [#allocation0], 224
    %v310 = vld [vmem:[%s309] sm:%s143]
    %s311 = sshllo.u32 0, 2
    %s312 = smul.addr 2, 28
    %s313 = scalar_lea.vmem %s1, %s312
    %314 = vst [vmem:[%s313] sm:%s311] %v310
    %s315 = scalar_lea.vmem [#allocation0], 232
    %v316 = vld [vmem:[%s315] sm:%s143]
    %s317 = sshllo.u32 0, 2
    %s318 = smul.addr 2, 29
    %s319 = scalar_lea.vmem %s1, %s318
    %320 = vst [vmem:[%s319] sm:%s317] %v316
    %s321 = scalar_lea.vmem [#allocation0], 240
    %v322 = vld [vmem:[%s321] sm:%s143]
    %s323 = sshllo.u32 0, 2
    %s324 = smul.addr 2, 30
    %s325 = scalar_lea.vmem %s1, %s324
    %326 = vst [vmem:[%s325] sm:%s323] %v322
    %s327 = scalar_lea.vmem [#allocation0], 248
    %v328 = vld [vmem:[%s327] sm:%s143]
    %s329 = sshllo.u32 0, 2
    %s330 = smul.addr 2, 31
    %s331 = scalar_lea.vmem %s1, %s330
    %332 = vst [vmem:[%s331] sm:%s329] %v328
    %s333 = scalar_lea.vmem [#allocation0], 256
    %v334 = vld [vmem:[%s333] sm:%s143]
    %s335 = sshllo.u32 0, 2
    %s336 = smul.addr 2, 32
    %s337 = scalar_lea.vmem %s1, %s336
    %338 = vst [vmem:[%s337] sm:%s335] %v334
    %s339 = scalar_lea.vmem [#allocation0], 264
    %v340 = vld [vmem:[%s339] sm:%s143]
    %s341 = sshllo.u32 0, 2
    %s342 = smul.addr 2, 33
    %s343 = scalar_lea.vmem %s1, %s342
    %344 = vst [vmem:[%s343] sm:%s341] %v340
    %s345 = scalar_lea.vmem [#allocation0], 272
    %v346 = vld [vmem:[%s345] sm:%s143]
    %s347 = sshllo.u32 0, 2
    %s348 = smul.addr 2, 34
    %s349 = scalar_lea.vmem %s1, %s348
    %350 = vst [vmem:[%s349] sm:%s347] %v346
    %s351 = scalar_lea.vmem [#allocation0], 280
    %v352 = vld [vmem:[%s351] sm:%s143]
    %s353 = sshllo.u32 0, 2
    %s354 = smul.addr 2, 35
    %s355 = scalar_lea.vmem %s1, %s354
    %356 = vst [vmem:[%s355] sm:%s353] %v352
    %s357 = scalar_lea.vmem [#allocation0], 288
    %v358 = vld [vmem:[%s357] sm:%s143]
    %s359 = sshllo.u32 0, 2
    %s360 = smul.addr 2, 36
    %s361 = scalar_lea.vmem %s1, %s360
    %362 = vst [vmem:[%s361] sm:%s359] %v358
    %s363 = scalar_lea.vmem [#allocation0], 296
    %v364 = vld [vmem:[%s363] sm:%s143]
    %s365 = sshllo.u32 0, 2
    %s366 = smul.addr 2, 37
    %s367 = scalar_lea.vmem %s1, %s366
    %368 = vst [vmem:[%s367] sm:%s365] %v364
    %s369 = scalar_lea.vmem [#allocation0], 304
    %v370 = vld [vmem:[%s369] sm:%s143]
    %s371 = sshllo.u32 0, 2
    %s372 = smul.addr 2, 38
    %s373 = scalar_lea.vmem %s1, %s372
    %374 = vst [vmem:[%s373] sm:%s371] %v370
    %s375 = scalar_lea.vmem [#allocation0], 312
    %v376 = vld [vmem:[%s375] sm:%s143]
    %s377 = sshllo.u32 0, 2
    %s378 = smul.addr 2, 39
    %s379 = scalar_lea.vmem %s1, %s378
    %380 = vst [vmem:[%s379] sm:%s377] %v376
    %s381 = scalar_lea.vmem [#allocation0], 320
    %v382 = vld [vmem:[%s381] sm:%s143]
    %s383 = sshllo.u32 0, 2
    %s384 = smul.addr 2, 40
    %s385 = scalar_lea.vmem %s1, %s384
    %386 = vst [vmem:[%s385] sm:%s383] %v382
    %s387 = scalar_lea.vmem [#allocation0], 328
    %v388 = vld [vmem:[%s387] sm:%s143]
    %s389 = sshllo.u32 0, 2
    %s390 = smul.addr 2, 41
    %s391 = scalar_lea.vmem %s1, %s390
    %392 = vst [vmem:[%s391] sm:%s389] %v388
    %s393 = scalar_lea.vmem [#allocation0], 336
    %v394 = vld [vmem:[%s393] sm:%s143]
    %s395 = sshllo.u32 0, 2
    %s396 = smul.addr 2, 42
    %s397 = scalar_lea.vmem %s1, %s396
    %398 = vst [vmem:[%s397] sm:%s395] %v394
    %s399 = scalar_lea.vmem [#allocation0], 344
    %v400 = vld [vmem:[%s399] sm:%s143]
    %s401 = sshllo.u32 0, 2
    %s402 = smul.addr 2, 43
    %s403 = scalar_lea.vmem %s1, %s402
    %404 = vst [vmem:[%s403] sm:%s401] %v400
    %s405 = scalar_lea.vmem [#allocation0], 352
    %v406 = vld [vmem:[%s405] sm:%s143]
    %s407 = sshllo.u32 0, 2
    %s408 = smul.addr 2, 44
    %s409 = scalar_lea.vmem %s1, %s408
    %410 = vst [vmem:[%s409] sm:%s407] %v406
    %s411 = scalar_lea.vmem [#allocation0], 360
    %v412 = vld [vmem:[%s411] sm:%s143]
    %s413 = sshllo.u32 0, 2
    %s414 = smul.addr 2, 45
    %s415 = scalar_lea.vmem %s1, %s414
    %416 = vst [vmem:[%s415] sm:%s413] %v412
    %s417 = scalar_lea.vmem [#allocation0], 368
    %v418 = vld [vmem:[%s417] sm:%s143]
    %s419 = sshllo.u32 0, 2
    %s420 = smul.addr 2, 46
    %s421 = scalar_lea.vmem %s1, %s420
    %422 = vst [vmem:[%s421] sm:%s419] %v418
    %s423 = scalar_lea.vmem [#allocation0], 376
    %v424 = vld [vmem:[%s423] sm:%s143]
    %s425 = sshllo.u32 0, 2
    %s426 = smul.addr 2, 47
    %s427 = scalar_lea.vmem %s1, %s426
    %428 = vst [vmem:[%s427] sm:%s425] %v424
    %s429 = scalar_lea.vmem [#allocation0], 384
    %v430 = vld [vmem:[%s429] sm:%s143]
    %s431 = sshllo.u32 0, 2
    %s432 = smul.addr 2, 48
    %s433 = scalar_lea.vmem %s1, %s432
    %434 = vst [vmem:[%s433] sm:%s431] %v430
    %s435 = scalar_lea.vmem [#allocation0], 392
    %v436 = vld [vmem:[%s435] sm:%s143]
    %s437 = sshllo.u32 0, 2
    %s438 = smul.addr 2, 49
    %s439 = scalar_lea.vmem %s1, %s438
    %440 = vst [vmem:[%s439] sm:%s437] %v436
    %s441 = scalar_lea.vmem [#allocation0], 400
    %v442 = vld [vmem:[%s441] sm:%s143]
    %s443 = sshllo.u32 0, 2
    %s444 = smul.addr 2, 50
    %s445 = scalar_lea.vmem %s1, %s444
    %446 = vst [vmem:[%s445] sm:%s443] %v442
    %s447 = scalar_lea.vmem [#allocation0], 408
    %v448 = vld [vmem:[%s447] sm:%s143]
    %s449 = sshllo.u32 0, 2
    %s450 = smul.addr 2, 51
    %s451 = scalar_lea.vmem %s1, %s450
    %452 = vst [vmem:[%s451] sm:%s449] %v448
    %s453 = scalar_lea.vmem [#allocation0], 416
    %v454 = vld [vmem:[%s453] sm:%s143]
    %s455 = sshllo.u32 0, 2
    %s456 = smul.addr 2, 52
    %s457 = scalar_lea.vmem %s1, %s456
    %458 = vst [vmem:[%s457] sm:%s455] %v454
    %s459 = scalar_lea.vmem [#allocation0], 424
    %v460 = vld [vmem:[%s459] sm:%s143]
    %s461 = sshllo.u32 0, 2
    %s462 = smul.addr 2, 53
    %s463 = scalar_lea.vmem %s1, %s462
    %464 = vst [vmem:[%s463] sm:%s461] %v460
    %s465 = scalar_lea.vmem [#allocation0], 432
    %v466 = vld [vmem:[%s465] sm:%s143]
    %s467 = sshllo.u32 0, 2
    %s468 = smul.addr 2, 54
    %s469 = scalar_lea.vmem %s1, %s468
    %470 = vst [vmem:[%s469] sm:%s467] %v466
    %s471 = scalar_lea.vmem [#allocation0], 440
    %v472 = vld [vmem:[%s471] sm:%s143]
    %s473 = sshllo.u32 0, 2
    %s474 = smul.addr 2, 55
    %s475 = scalar_lea.vmem %s1, %s474
    %476 = vst [vmem:[%s475] sm:%s473] %v472
    %s477 = scalar_lea.vmem [#allocation0], 448
    %v478 = vld [vmem:[%s477] sm:%s143]
    %s479 = sshllo.u32 0, 2
    %s480 = smul.addr 2, 56
    %s481 = scalar_lea.vmem %s1, %s480
    %482 = vst [vmem:[%s481] sm:%s479] %v478
    %s483 = scalar_lea.vmem [#allocation0], 456
    %v484 = vld [vmem:[%s483] sm:%s143]
    %s485 = sshllo.u32 0, 2
    %s486 = smul.addr 2, 57
    %s487 = scalar_lea.vmem %s1, %s486
    %488 = vst [vmem:[%s487] sm:%s485] %v484
    %s489 = scalar_lea.vmem [#allocation0], 464
    %v490 = vld [vmem:[%s489] sm:%s143]
    %s491 = sshllo.u32 0, 2
    %s492 = smul.addr 2, 58
    %s493 = scalar_lea.vmem %s1, %s492
    %494 = vst [vmem:[%s493] sm:%s491] %v490
    %s495 = scalar_lea.vmem [#allocation0], 472
    %v496 = vld [vmem:[%s495] sm:%s143]
    %s497 = sshllo.u32 0, 2
    %s498 = smul.addr 2, 59
    %s499 = scalar_lea.vmem %s1, %s498
    %500 = vst [vmem:[%s499] sm:%s497] %v496
    %s501 = scalar_lea.vmem [#allocation0], 480
    %v502 = vld [vmem:[%s501] sm:%s143]
    %s503 = sshllo.u32 0, 2
    %s504 = smul.addr 2, 60
    %s505 = scalar_lea.vmem %s1, %s504
    %506 = vst [vmem:[%s505] sm:%s503] %v502
    %s507 = scalar_lea.vmem [#allocation0], 488
    %v508 = vld [vmem:[%s507] sm:%s143]
    %s509 = sshllo.u32 0, 2
    %s510 = smul.addr 2, 61
    %s511 = scalar_lea.vmem %s1, %s510
    %512 = vst [vmem:[%s511] sm:%s509] %v508
    %s513 = scalar_lea.vmem [#allocation0], 496
    %v514 = vld [vmem:[%s513] sm:%s143]
    %s515 = sshllo.u32 0, 2
    %s516 = smul.addr 2, 62
    %s517 = scalar_lea.vmem %s1, %s516
    %518 = vst [vmem:[%s517] sm:%s515] %v514
    %s519 = scalar_lea.vmem [#allocation0], 504
    %v520 = vld [vmem:[%s519] sm:%s143]
    %s521 = sshllo.u32 0, 2
    %s522 = smul.addr 2, 63
    %s523 = scalar_lea.vmem %s1, %s522
    %524 = vst [vmem:[%s523] sm:%s521] %v520
    %s525 = scalar_lea.vmem [#allocation0], 512
    %v526 = vld [vmem:[%s525] sm:%s143]
    %s527 = sshllo.u32 0, 2
    %s528 = smul.addr 2, 64
    %s529 = scalar_lea.vmem %s1, %s528
    %530 = vst [vmem:[%s529] sm:%s527] %v526
    %s531 = scalar_lea.vmem [#allocation0], 520
    %v532 = vld [vmem:[%s531] sm:%s143]
    %s533 = sshllo.u32 0, 2
    %s534 = smul.addr 2, 65
    %s535 = scalar_lea.vmem %s1, %s534
    %536 = vst [vmem:[%s535] sm:%s533] %v532
    %s537 = scalar_lea.vmem [#allocation0], 528
    %v538 = vld [vmem:[%s537] sm:%s143]
    %s539 = sshllo.u32 0, 2
    %s540 = smul.addr 2, 66
    %s541 = scalar_lea.vmem %s1, %s540
    %542 = vst [vmem:[%s541] sm:%s539] %v538
    %s543 = scalar_lea.vmem [#allocation0], 536
    %v544 = vld [vmem:[%s543] sm:%s143]
    %s545 = sshllo.u32 0, 2
    %s546 = smul.addr 2, 67
    %s547 = scalar_lea.vmem %s1, %s546
    %548 = vst [vmem:[%s547] sm:%s545] %v544
    %s549 = scalar_lea.vmem [#allocation0], 544
    %v550 = vld [vmem:[%s549] sm:%s143]
    %s551 = sshllo.u32 0, 2
    %s552 = smul.addr 2, 68
    %s553 = scalar_lea.vmem %s1, %s552
    %554 = vst [vmem:[%s553] sm:%s551] %v550
    %s555 = scalar_lea.vmem [#allocation0], 552
    %v556 = vld [vmem:[%s555] sm:%s143]
    %s557 = sshllo.u32 0, 2
    %s558 = smul.addr 2, 69
    %s559 = scalar_lea.vmem %s1, %s558
    %560 = vst [vmem:[%s559] sm:%s557] %v556
    %s561 = scalar_lea.vmem [#allocation0], 560
    %v562 = vld [vmem:[%s561] sm:%s143]
    %s563 = sshllo.u32 0, 2
    %s564 = smul.addr 2, 70
    %s565 = scalar_lea.vmem %s1, %s564
    %566 = vst [vmem:[%s565] sm:%s563] %v562
    %s567 = scalar_lea.vmem [#allocation0], 568
    %v568 = vld [vmem:[%s567] sm:%s143]
    %s569 = sshllo.u32 0, 2
    %s570 = smul.addr 2, 71
    %s571 = scalar_lea.vmem %s1, %s570
    %572 = vst [vmem:[%s571] sm:%s569] %v568

// kernel: squeeze.2
$region0: #{squeeze.2}
  %s0 = inlined_call_operand.vmem [shape: f32[1,3,32,32], index: 0, kind: input, shape index: {}]
  %s1 = inlined_call_operand.vmem [shape: f32[3,4,8,4,8], index: 1, kind: output, shape index: {}]
  $region1: #{squeeze.2} parent=0
    #allocation0 [shape = 'u8[393216]{0}', space=vmem, size = 0x60000, scoped, tag = 'scoped mem for output reshape']
    %v2 = vld [vmem:[%s0] sm:$0xff]
    %vm3 = vcmask 64512
    %4 = vst.msk [vmem:[#allocation0] ss:$8 sm:$0xf] %vm3, %v2
    %5 = vst.msk [vmem:[#allocation0] ss:$8 sm:$0xf0] %vm3, %v2
    %s6 = scalar_lea.vmem %s0, 8
    %v7 = vld [vmem:[%s6] sm:$0xff]
    %vm8 = vcmask 64512
    %s9 = scalar_lea.vmem [#allocation0], 64
    %10 = vst.msk [vmem:[%s9] ss:$8 sm:$0xf] %vm8, %v7
    %s11 = scalar_lea.vmem [#allocation0], 64
    %12 = vst.msk [vmem:[%s11] ss:$8 sm:$0xf0] %vm8, %v7
    %s13 = scalar_lea.vmem %s0, 16
    %v14 = vld [vmem:[%s13] sm:$0xff]
    %vm15 = vcmask 64512
    %s16 = scalar_lea.vmem [#allocation0], 128
    %17 = vst.msk [vmem:[%s16] ss:$8 sm:$0xf] %vm15, %v14
    %s18 = scalar_lea.vmem [#allocation0], 128
    %19 = vst.msk [vmem:[%s18] ss:$8 sm:$0xf0] %vm15, %v14
    %s20 = scalar_lea.vmem %s0, 24
    %v21 = vld [vmem:[%s20] sm:$0xff]
    %vm22 = vcmask 64512
    %s23 = scalar_lea.vmem [#allocation0], 192
    %24 = vst.msk [vmem:[%s23] ss:$8 sm:$0xf] %vm22, %v21
    %s25 = scalar_lea.vmem [#allocation0], 192
    %26 = vst.msk [vmem:[%s25] ss:$8 sm:$0xf0] %vm22, %v21
    %s27 = scalar_lea.vmem %s0, 32
    %v28 = vld [vmem:[%s27] sm:$0xff]
    %vm29 = vcmask 64512
    %s30 = scalar_lea.vmem [#allocation0], 256
    %31 = vst.msk [vmem:[%s30] ss:$8 sm:$0xf] %vm29, %v28
    %s32 = scalar_lea.vmem [#allocation0], 256
    %33 = vst.msk [vmem:[%s32] ss:$8 sm:$0xf0] %vm29, %v28
    %s34 = scalar_lea.vmem %s0, 40
    %v35 = vld [vmem:[%s34] sm:$0xff]
    %vm36 = vcmask 64512
    %s37 = scalar_lea.vmem [#allocation0], 320
    %38 = vst.msk [vmem:[%s37] ss:$8 sm:$0xf] %vm36, %v35
    %s39 = scalar_lea.vmem [#allocation0], 320
    %40 = vst.msk [vmem:[%s39] ss:$8 sm:$0xf0] %vm36, %v35
    %s41 = scalar_lea.vmem %s0, 48
    %v42 = vld [vmem:[%s41] sm:$0xff]
    %vm43 = vcmask 64512
    %s44 = scalar_lea.vmem [#allocation0], 384
    %45 = vst.msk [vmem:[%s44] ss:$8 sm:$0xf] %vm43, %v42
    %s46 = scalar_lea.vmem [#allocation0], 384
    %47 = vst.msk [vmem:[%s46] ss:$8 sm:$0xf0] %vm43, %v42
    %s48 = scalar_lea.vmem %s0, 56
    %v49 = vld [vmem:[%s48] sm:$0xff]
    %vm50 = vcmask 64512
    %s51 = scalar_lea.vmem [#allocation0], 448
    %52 = vst.msk [vmem:[%s51] ss:$8 sm:$0xf] %vm50, %v49
    %s53 = scalar_lea.vmem [#allocation0], 448
    %54 = vst.msk [vmem:[%s53] ss:$8 sm:$0xf0] %vm50, %v49
    %s55 = scalar_lea.vmem %s0, 64
    %v56 = vld [vmem:[%s55] sm:$0xff]
    %vm57 = vcmask 64512
    %s58 = scalar_lea.vmem [#allocation0], 512
    %59 = vst.msk [vmem:[%s58] ss:$8 sm:$0xf] %vm57, %v56
    %s60 = scalar_lea.vmem [#allocation0], 512
    %61 = vst.msk [vmem:[%s60] ss:$8 sm:$0xf0] %vm57, %v56
    %s62 = scalar_lea.vmem %s0, 72
    %v63 = vld [vmem:[%s62] sm:$0xff]
    %vm64 = vcmask 64512
    %s65 = scalar_lea.vmem [#allocation0], 576
    %66 = vst.msk [vmem:[%s65] ss:$8 sm:$0xf] %vm64, %v63
    %s67 = scalar_lea.vmem [#allocation0], 576
    %68 = vst.msk [vmem:[%s67] ss:$8 sm:$0xf0] %vm64, %v63
    %s69 = scalar_lea.vmem %s0, 80
    %v70 = vld [vmem:[%s69] sm:$0xff]
    %vm71 = vcmask 64512
    %s72 = scalar_lea.vmem [#allocation0], 640
    %73 = vst.msk [vmem:[%s72] ss:$8 sm:$0xf] %vm71, %v70
    %s74 = scalar_lea.vmem [#allocation0], 640
    %75 = vst.msk [vmem:[%s74] ss:$8 sm:$0xf0] %vm71, %v70
    %s76 = scalar_lea.vmem %s0, 88
    %v77 = vld [vmem:[%s76] sm:$0xff]
    %vm78 = vcmask 64512
    %s79 = scalar_lea.vmem [#allocation0], 704
    %80 = vst.msk [vmem:[%s79] ss:$8 sm:$0xf] %vm78, %v77
    %s81 = scalar_lea.vmem [#allocation0], 704
    %82 = vst.msk [vmem:[%s81] ss:$8 sm:$0xf0] %vm78, %v77
    %v83 = vld [vmem:[%s0] sm:$0xff]
    %84 = vrot.lane.b32.xlu0 %v83, 120
    %v85 = vpop.permute.xlu0 %84
    %vm86 = vcmask 64512
    %s87 = scalar_lea.vmem [#allocation0], 1
    %88 = vst.msk [vmem:[%s87] ss:$8 sm:$0xf] %vm86, %v85
    %s89 = scalar_lea.vmem [#allocation0], 1
    %90 = vst.msk [vmem:[%s89] ss:$8 sm:$0xf0] %vm86, %v85
    %s91 = scalar_lea.vmem %s0, 8
    %v92 = vld [vmem:[%s91] sm:$0xff]
    %93 = vrot.lane.b32.xlu0 %v92, 120
    %v94 = vpop.permute.xlu0 %93
    %vm95 = vcmask 64512
    %s96 = scalar_lea.vmem [#allocation0], 65
    %97 = vst.msk [vmem:[%s96] ss:$8 sm:$0xf] %vm95, %v94
    %s98 = scalar_lea.vmem [#allocation0], 65
    %99 = vst.msk [vmem:[%s98] ss:$8 sm:$0xf0] %vm95, %v94
    %s100 = scalar_lea.vmem %s0, 16
    %v101 = vld [vmem:[%s100] sm:$0xff]
    %102 = vrot.lane.b32.xlu0 %v101, 120
    %v103 = vpop.permute.xlu0 %102
    %vm104 = vcmask 64512
    %s105 = scalar_lea.vmem [#allocation0], 129
    %106 = vst.msk [vmem:[%s105] ss:$8 sm:$0xf] %vm104, %v103
    %s107 = scalar_lea.vmem [#allocation0], 129
    %108 = vst.msk [vmem:[%s107] ss:$8 sm:$0xf0] %vm104, %v103
    %s109 = scalar_lea.vmem %s0, 24
    %v110 = vld [vmem:[%s109] sm:$0xff]
    %111 = vrot.lane.b32.xlu0 %v110, 120
    %v112 = vpop.permute.xlu0 %111
    %vm113 = vcmask 64512
    %s114 = scalar_lea.vmem [#allocation0], 193
    %115 = vst.msk [vmem:[%s114] ss:$8 sm:$0xf] %vm113, %v112
    %s116 = scalar_lea.vmem [#allocation0], 193
    %117 = vst.msk [vmem:[%s116] ss:$8 sm:$0xf0] %vm113, %v112
    %s118 = scalar_lea.vmem %s0, 32
    %v119 = vld [vmem:[%s118] sm:$0xff]
    %120 = vrot.lane.b32.xlu0 %v119, 120
    %v121 = vpop.permute.xlu0 %120
    %vm122 = vcmask 64512
    %s123 = scalar_lea.vmem [#allocation0], 257
    %124 = vst.msk [vmem:[%s123] ss:$8 sm:$0xf] %vm122, %v121
    %s125 = scalar_lea.vmem [#allocation0], 257
    %126 = vst.msk [vmem:[%s125] ss:$8 sm:$0xf0] %vm122, %v121
    %s127 = scalar_lea.vmem %s0, 40
    %v128 = vld [vmem:[%s127] sm:$0xff]
    %129 = vrot.lane.b32.xlu0 %v128, 120
    %v130 = vpop.permute.xlu0 %129
    %vm131 = vcmask 64512
    %s132 = scalar_lea.vmem [#allocation0], 321
    %133 = vst.msk [vmem:[%s132] ss:$8 sm:$0xf] %vm131, %v130
    %s134 = scalar_lea.vmem [#allocation0], 321
    %135 = vst.msk [vmem:[%s134] ss:$8 sm:$0xf0] %vm131, %v130
    %s136 = scalar_lea.vmem %s0, 48
    %v137 = vld [vmem:[%s136] sm:$0xff]
    %138 = vrot.lane.b32.xlu0 %v137, 120
    %v139 = vpop.permute.xlu0 %138
    %vm140 = vcmask 64512
    %s141 = scalar_lea.vmem [#allocation0], 385
    %142 = vst.msk [vmem:[%s141] ss:$8 sm:$0xf] %vm140, %v139
    %s143 = scalar_lea.vmem [#allocation0], 385
    %144 = vst.msk [vmem:[%s143] ss:$8 sm:$0xf0] %vm140, %v139
    %s145 = scalar_lea.vmem %s0, 56
    %v146 = vld [vmem:[%s145] sm:$0xff]
    %147 = vrot.lane.b32.xlu0 %v146, 120
    %v148 = vpop.permute.xlu0 %147
    %vm149 = vcmask 64512
    %s150 = scalar_lea.vmem [#allocation0], 449
    %151 = vst.msk [vmem:[%s150] ss:$8 sm:$0xf] %vm149, %v148
    %s152 = scalar_lea.vmem [#allocation0], 449
    %153 = vst.msk [vmem:[%s152] ss:$8 sm:$0xf0] %vm149, %v148
    %s154 = scalar_lea.vmem %s0, 64
    %v155 = vld [vmem:[%s154] sm:$0xff]
    %156 = vrot.lane.b32.xlu0 %v155, 120
    %v157 = vpop.permute.xlu0 %156
    %vm158 = vcmask 64512
    %s159 = scalar_lea.vmem [#allocation0], 513
    %160 = vst.msk [vmem:[%s159] ss:$8 sm:$0xf] %vm158, %v157
    %s161 = scalar_lea.vmem [#allocation0], 513
    %162 = vst.msk [vmem:[%s161] ss:$8 sm:$0xf0] %vm158, %v157
    %s163 = scalar_lea.vmem %s0, 72
    %v164 = vld [vmem:[%s163] sm:$0xff]
    %165 = vrot.lane.b32.xlu0 %v164, 120
    %v166 = vpop.permute.xlu0 %165
    %vm167 = vcmask 64512
    %s168 = scalar_lea.vmem [#allocation0], 577
    %169 = vst.msk [vmem:[%s168] ss:$8 sm:$0xf] %vm167, %v166
    %s170 = scalar_lea.vmem [#allocation0], 577
    %171 = vst.msk [vmem:[%s170] ss:$8 sm:$0xf0] %vm167, %v166
    %s172 = scalar_lea.vmem %s0, 80
    %v173 = vld [vmem:[%s172] sm:$0xff]
    %174 = vrot.lane.b32.xlu0 %v173, 120
    %v175 = vpop.permute.xlu0 %174
    %vm176 = vcmask 64512
    %s177 = scalar_lea.vmem [#allocation0], 641
    %178 = vst.msk [vmem:[%s177] ss:$8 sm:$0xf] %vm176, %v175
    %s179 = scalar_lea.vmem [#allocation0], 641
    %180 = vst.msk [vmem:[%s179] ss:$8 sm:$0xf0] %vm176, %v175
    %s181 = scalar_lea.vmem %s0, 88
    %v182 = vld [vmem:[%s181] sm:$0xff]
    %183 = vrot.lane.b32.xlu0 %v182, 120
    %v184 = vpop.permute.xlu0 %183
    %vm185 = vcmask 64512
    %s186 = scalar_lea.vmem [#allocation0], 705
    %187 = vst.msk [vmem:[%s186] ss:$8 sm:$0xf] %vm185, %v184
    %s188 = scalar_lea.vmem [#allocation0], 705
    %189 = vst.msk [vmem:[%s188] ss:$8 sm:$0xf0] %vm185, %v184
    %v190 = vld [vmem:[%s0] sm:$0xff]
    %191 = vrot.lane.b32.xlu0 %v190, 112
    %v192 = vpop.permute.xlu0 %191
    %vm193 = vcmask 64512
    %s194 = scalar_lea.vmem [#allocation0], 2
    %195 = vst.msk [vmem:[%s194] ss:$8 sm:$0xf] %vm193, %v192
    %s196 = scalar_lea.vmem [#allocation0], 2
    %197 = vst.msk [vmem:[%s196] ss:$8 sm:$0xf0] %vm193, %v192
    %s198 = scalar_lea.vmem %s0, 8
    %v199 = vld [vmem:[%s198] sm:$0xff]
    %200 = vrot.lane.b32.xlu0 %v199, 112
    %v201 = vpop.permute.xlu0 %200
    %vm202 = vcmask 64512
    %s203 = scalar_lea.vmem [#allocation0], 66
    %204 = vst.msk [vmem:[%s203] ss:$8 sm:$0xf] %vm202, %v201
    %s205 = scalar_lea.vmem [#allocation0], 66
    %206 = vst.msk [vmem:[%s205] ss:$8 sm:$0xf0] %vm202, %v201
    %s207 = scalar_lea.vmem %s0, 16
    %v208 = vld [vmem:[%s207] sm:$0xff]
    %209 = vrot.lane.b32.xlu0 %v208, 112
    %v210 = vpop.permute.xlu0 %209
    %vm211 = vcmask 64512
    %s212 = scalar_lea.vmem [#allocation0], 130
    %213 = vst.msk [vmem:[%s212] ss:$8 sm:$0xf] %vm211, %v210
    %s214 = scalar_lea.vmem [#allocation0], 130
    %215 = vst.msk [vmem:[%s214] ss:$8 sm:$0xf0] %vm211, %v210
    %s216 = scalar_lea.vmem %s0, 24
    %v217 = vld [vmem:[%s216] sm:$0xff]
    %218 = vrot.lane.b32.xlu0 %v217, 112
    %v219 = vpop.permute.xlu0 %218
    %vm220 = vcmask 64512
    %s221 = scalar_lea.vmem [#allocation0], 194
    %222 = vst.msk [vmem:[%s221] ss:$8 sm:$0xf] %vm220, %v219
    %s223 = scalar_lea.vmem [#allocation0], 194
    %224 = vst.msk [vmem:[%s223] ss:$8 sm:$0xf0] %vm220, %v219
    %s225 = scalar_lea.vmem %s0, 32
    %v226 = vld [vmem:[%s225] sm:$0xff]
    %227 = vrot.lane.b32.xlu0 %v226, 112
    %v228 = vpop.permute.xlu0 %227
    %vm229 = vcmask 64512
    %s230 = scalar_lea.vmem [#allocation0], 258
    %231 = vst.msk [vmem:[%s230] ss:$8 sm:$0xf] %vm229, %v228
    %s232 = scalar_lea.vmem [#allocation0], 258
    %233 = vst.msk [vmem:[%s232] ss:$8 sm:$0xf0] %vm229, %v228
    %s234 = scalar_lea.vmem %s0, 40
    %v235 = vld [vmem:[%s234] sm:$0xff]
    %236 = vrot.lane.b32.xlu0 %v235, 112
    %v237 = vpop.permute.xlu0 %236
    %vm238 = vcmask 64512
    %s239 = scalar_lea.vmem [#allocation0], 322
    %240 = vst.msk [vmem:[%s239] ss:$8 sm:$0xf] %vm238, %v237
    %s241 = scalar_lea.vmem [#allocation0], 322
    %242 = vst.msk [vmem:[%s241] ss:$8 sm:$0xf0] %vm238, %v237
    %s243 = scalar_lea.vmem %s0, 48
    %v244 = vld [vmem:[%s243] sm:$0xff]
    %245 = vrot.lane.b32.xlu0 %v244, 112
    %v246 = vpop.permute.xlu0 %245
    %vm247 = vcmask 64512
    %s248 = scalar_lea.vmem [#allocation0], 386
    %249 = vst.msk [vmem:[%s248] ss:$8 sm:$0xf] %vm247, %v246
    %s250 = scalar_lea.vmem [#allocation0], 386
    %251 = vst.msk [vmem:[%s250] ss:$8 sm:$0xf0] %vm247, %v246
    %s252 = scalar_lea.vmem %s0, 56
    %v253 = vld [vmem:[%s252] sm:$0xff]
    %254 = vrot.lane.b32.xlu0 %v253, 112
    %v255 = vpop.permute.xlu0 %254
    %vm256 = vcmask 64512
    %s257 = scalar_lea.vmem [#allocation0], 450
    %258 = vst.msk [vmem:[%s257] ss:$8 sm:$0xf] %vm256, %v255
    %s259 = scalar_lea.vmem [#allocation0], 450
    %260 = vst.msk [vmem:[%s259] ss:$8 sm:$0xf0] %vm256, %v255
    %s261 = scalar_lea.vmem %s0, 64
    %v262 = vld [vmem:[%s261] sm:$0xff]
    %263 = vrot.lane.b32.xlu0 %v262, 112
    %v264 = vpop.permute.xlu0 %263
    %vm265 = vcmask 64512
    %s266 = scalar_lea.vmem [#allocation0], 514
    %267 = vst.msk [vmem:[%s266] ss:$8 sm:$0xf] %vm265, %v264
    %s268 = scalar_lea.vmem [#allocation0], 514
    %269 = vst.msk [vmem:[%s268] ss:$8 sm:$0xf0] %vm265, %v264
    %s270 = scalar_lea.vmem %s0, 72
    %v271 = vld [vmem:[%s270] sm:$0xff]
    %272 = vrot.lane.b32.xlu0 %v271, 112
    %v273 = vpop.permute.xlu0 %272
    %vm274 = vcmask 64512
    %s275 = scalar_lea.vmem [#allocation0], 578
    %276 = vst.msk [vmem:[%s275] ss:$8 sm:$0xf] %vm274, %v273
    %s277 = scalar_lea.vmem [#allocation0], 578
    %278 = vst.msk [vmem:[%s277] ss:$8 sm:$0xf0] %vm274, %v273
    %s279 = scalar_lea.vmem %s0, 80
    %v280 = vld [vmem:[%s279] sm:$0xff]
    %281 = vrot.lane.b32.xlu0 %v280, 112
    %v282 = vpop.permute.xlu0 %281
    %vm283 = vcmask 64512
    %s284 = scalar_lea.vmem [#allocation0], 642
    %285 = vst.msk [vmem:[%s284] ss:$8 sm:$0xf] %vm283, %v282
    %s286 = scalar_lea.vmem [#allocation0], 642
    %287 = vst.msk [vmem:[%s286] ss:$8 sm:$0xf0] %vm283, %v282
    %s288 = scalar_lea.vmem %s0, 88
    %v289 = vld [vmem:[%s288] sm:$0xff]
    %290 = vrot.lane.b32.xlu0 %v289, 112
    %v291 = vpop.permute.xlu0 %290
    %vm292 = vcmask 64512
    %s293 = scalar_lea.vmem [#allocation0], 706
    %294 = vst.msk [vmem:[%s293] ss:$8 sm:$0xf] %vm292, %v291
    %s295 = scalar_lea.vmem [#allocation0], 706
    %296 = vst.msk [vmem:[%s295] ss:$8 sm:$0xf0] %vm292, %v291
    %v297 = vld [vmem:[%s0] sm:$0xff]
    %298 = vrot.lane.b32.xlu0 %v297, 104
    %v299 = vpop.permute.xlu0 %298
    %vm300 = vcmask 64512
    %s301 = scalar_lea.vmem [#allocation0], 3
    %302 = vst.msk [vmem:[%s301] ss:$8 sm:$0xf] %vm300, %v299
    %s303 = scalar_lea.vmem [#allocation0], 3
    %304 = vst.msk [vmem:[%s303] ss:$8 sm:$0xf0] %vm300, %v299
    %s305 = scalar_lea.vmem %s0, 8
    %v306 = vld [vmem:[%s305] sm:$0xff]
    %307 = vrot.lane.b32.xlu0 %v306, 104
    %v308 = vpop.permute.xlu0 %307
    %vm309 = vcmask 64512
    %s310 = scalar_lea.vmem [#allocation0], 67
    %311 = vst.msk [vmem:[%s310] ss:$8 sm:$0xf] %vm309, %v308
    %s312 = scalar_lea.vmem [#allocation0], 67
    %313 = vst.msk [vmem:[%s312] ss:$8 sm:$0xf0] %vm309, %v308
    %s314 = scalar_lea.vmem %s0, 16
    %v315 = vld [vmem:[%s314] sm:$0xff]
    %316 = vrot.lane.b32.xlu0 %v315, 104
    %v317 = vpop.permute.xlu0 %316
    %vm318 = vcmask 64512
    %s319 = scalar_lea.vmem [#allocation0], 131
    %320 = vst.msk [vmem:[%s319] ss:$8 sm:$0xf] %vm318, %v317
    %s321 = scalar_lea.vmem [#allocation0], 131
    %322 = vst.msk [vmem:[%s321] ss:$8 sm:$0xf0] %vm318, %v317
    %s323 = scalar_lea.vmem %s0, 24
    %v324 = vld [vmem:[%s323] sm:$0xff]
    %325 = vrot.lane.b32.xlu0 %v324, 104
    %v326 = vpop.permute.xlu0 %325
    %vm327 = vcmask 64512
    %s328 = scalar_lea.vmem [#allocation0], 195
    %329 = vst.msk [vmem:[%s328] ss:$8 sm:$0xf] %vm327, %v326
    %s330 = scalar_lea.vmem [#allocation0], 195
    %331 = vst.msk [vmem:[%s330] ss:$8 sm:$0xf0] %vm327, %v326
    %s332 = scalar_lea.vmem %s0, 32
    %v333 = vld [vmem:[%s332] sm:$0xff]
    %334 = vrot.lane.b32.xlu0 %v333, 104
    %v335 = vpop.permute.xlu0 %334
    %vm336 = vcmask 64512
    %s337 = scalar_lea.vmem [#allocation0], 259
    %338 = vst.msk [vmem:[%s337] ss:$8 sm:$0xf] %vm336, %v335
    %s339 = scalar_lea.vmem [#allocation0], 259
    %340 = vst.msk [vmem:[%s339] ss:$8 sm:$0xf0] %vm336, %v335
    %s341 = scalar_lea.vmem %s0, 40
    %v342 = vld [vmem:[%s341] sm:$0xff]
    %343 = vrot.lane.b32.xlu0 %v342, 104
    %v344 = vpop.permute.xlu0 %343
    %vm345 = vcmask 64512
    %s346 = scalar_lea.vmem [#allocation0], 323
    %347 = vst.msk [vmem:[%s346] ss:$8 sm:$0xf] %vm345, %v344
    %s348 = scalar_lea.vmem [#allocation0], 323
    %349 = vst.msk [vmem:[%s348] ss:$8 sm:$0xf0] %vm345, %v344
    %s350 = scalar_lea.vmem %s0, 48
    %v351 = vld [vmem:[%s350] sm:$0xff]
    %352 = vrot.lane.b32.xlu0 %v351, 104
    %v353 = vpop.permute.xlu0 %352
    %vm354 = vcmask 64512
    %s355 = scalar_lea.vmem [#allocation0], 387
    %356 = vst.msk [vmem:[%s355] ss:$8 sm:$0xf] %vm354, %v353
    %s357 = scalar_lea.vmem [#allocation0], 387
    %358 = vst.msk [vmem:[%s357] ss:$8 sm:$0xf0] %vm354, %v353
    %s359 = scalar_lea.vmem %s0, 56
    %v360 = vld [vmem:[%s359] sm:$0xff]
    %361 = vrot.lane.b32.xlu0 %v360, 104
    %v362 = vpop.permute.xlu0 %361
    %vm363 = vcmask 64512
    %s364 = scalar_lea.vmem [#allocation0], 451
    %365 = vst.msk [vmem:[%s364] ss:$8 sm:$0xf] %vm363, %v362
    %s366 = scalar_lea.vmem [#allocation0], 451
    %367 = vst.msk [vmem:[%s366] ss:$8 sm:$0xf0] %vm363, %v362
    %s368 = scalar_lea.vmem %s0, 64
    %v369 = vld [vmem:[%s368] sm:$0xff]
    %370 = vrot.lane.b32.xlu0 %v369, 104
    %v371 = vpop.permute.xlu0 %370
    %vm372 = vcmask 64512
    %s373 = scalar_lea.vmem [#allocation0], 515
    %374 = vst.msk [vmem:[%s373] ss:$8 sm:$0xf] %vm372, %v371
    %s375 = scalar_lea.vmem [#allocation0], 515
    %376 = vst.msk [vmem:[%s375] ss:$8 sm:$0xf0] %vm372, %v371
    %s377 = scalar_lea.vmem %s0, 72
    %v378 = vld [vmem:[%s377] sm:$0xff]
    %379 = vrot.lane.b32.xlu0 %v378, 104
    %v380 = vpop.permute.xlu0 %379
    %vm381 = vcmask 64512
    %s382 = scalar_lea.vmem [#allocation0], 579
    %383 = vst.msk [vmem:[%s382] ss:$8 sm:$0xf] %vm381, %v380
    %s384 = scalar_lea.vmem [#allocation0], 579
    %385 = vst.msk [vmem:[%s384] ss:$8 sm:$0xf0] %vm381, %v380
    %s386 = scalar_lea.vmem %s0, 80
    %v387 = vld [vmem:[%s386] sm:$0xff]
    %388 = vrot.lane.b32.xlu0 %v387, 104
    %v389 = vpop.permute.xlu0 %388
    %vm390 = vcmask 64512
    %s391 = scalar_lea.vmem [#allocation0], 643
    %392 = vst.msk [vmem:[%s391] ss:$8 sm:$0xf] %vm390, %v389
    %s393 = scalar_lea.vmem [#allocation0], 643
    %394 = vst.msk [vmem:[%s393] ss:$8 sm:$0xf0] %vm390, %v389
    %s395 = scalar_lea.vmem %s0, 88
    %v396 = vld [vmem:[%s395] sm:$0xff]
    %397 = vrot.lane.b32.xlu0 %v396, 104
    %v398 = vpop.permute.xlu0 %397
    %vm399 = vcmask 64512
    %s400 = scalar_lea.vmem [#allocation0], 707
    %401 = vst.msk [vmem:[%s400] ss:$8 sm:$0xf] %vm399, %v398
    %s402 = scalar_lea.vmem [#allocation0], 707
    %403 = vst.msk [vmem:[%s402] ss:$8 sm:$0xf0] %vm399, %v398
    %s405 = sshllo.u32 0, 4
    %v407 = vld [vmem:[#allocation0] sm:%s405]
    %s408 = sshllo.u32 0, 4
    %409 = vst [vmem:[%s1] sm:%s408] %v407
    %s410 = scalar_lea.vmem [#allocation0], 8
    %v411 = vld [vmem:[%s410] sm:%s405]
    %s412 = sshllo.u32 0, 4
    %s413 = scalar_lea.vmem %s1, 4
    %414 = vst [vmem:[%s413] sm:%s412] %v411
    %s415 = scalar_lea.vmem [#allocation0], 16
    %v416 = vld [vmem:[%s415] sm:%s405]
    %s417 = sshllo.u32 0, 4
    %s418 = smul.addr 4, 2
    %s419 = scalar_lea.vmem %s1, %s418
    %420 = vst [vmem:[%s419] sm:%s417] %v416
    %s421 = scalar_lea.vmem [#allocation0], 24
    %v422 = vld [vmem:[%s421] sm:%s405]
    %s423 = sshllo.u32 0, 4
    %s424 = smul.addr 4, 3
    %s425 = scalar_lea.vmem %s1, %s424
    %426 = vst [vmem:[%s425] sm:%s423] %v422
    %s427 = scalar_lea.vmem [#allocation0], 32
    %v428 = vld [vmem:[%s427] sm:%s405]
    %s429 = sshllo.u32 0, 4
    %s430 = smul.addr 4, 4
    %s431 = scalar_lea.vmem %s1, %s430
    %432 = vst [vmem:[%s431] sm:%s429] %v428
    %s433 = scalar_lea.vmem [#allocation0], 40
    %v434 = vld [vmem:[%s433] sm:%s405]
    %s435 = sshllo.u32 0, 4
    %s436 = smul.addr 4, 5
    %s437 = scalar_lea.vmem %s1, %s436
    %438 = vst [vmem:[%s437] sm:%s435] %v434
    %s439 = scalar_lea.vmem [#allocation0], 48
    %v440 = vld [vmem:[%s439] sm:%s405]
    %s441 = sshllo.u32 0, 4
    %s442 = smul.addr 4, 6
    %s443 = scalar_lea.vmem %s1, %s442
    %444 = vst [vmem:[%s443] sm:%s441] %v440
    %s445 = scalar_lea.vmem [#allocation0], 56
    %v446 = vld [vmem:[%s445] sm:%s405]
    %s447 = sshllo.u32 0, 4
    %s448 = smul.addr 4, 7
    %s449 = scalar_lea.vmem %s1, %s448
    %450 = vst [vmem:[%s449] sm:%s447] %v446
    %s451 = scalar_lea.vmem [#allocation0], 64
    %v452 = vld [vmem:[%s451] sm:%s405]
    %s453 = sshllo.u32 0, 4
    %s454 = smul.addr 4, 8
    %s455 = scalar_lea.vmem %s1, %s454
    %456 = vst [vmem:[%s455] sm:%s453] %v452
    %s457 = scalar_lea.vmem [#allocation0], 72
    %v458 = vld [vmem:[%s457] sm:%s405]
    %s459 = sshllo.u32 0, 4
    %s460 = smul.addr 4, 9
    %s461 = scalar_lea.vmem %s1, %s460
    %462 = vst [vmem:[%s461] sm:%s459] %v458
    %s463 = scalar_lea.vmem [#allocation0], 80
    %v464 = vld [vmem:[%s463] sm:%s405]
    %s465 = sshllo.u32 0, 4
    %s466 = smul.addr 4, 10
    %s467 = scalar_lea.vmem %s1, %s466
    %468 = vst [vmem:[%s467] sm:%s465] %v464
    %s469 = scalar_lea.vmem [#allocation0], 88
    %v470 = vld [vmem:[%s469] sm:%s405]
    %s471 = sshllo.u32 0, 4
    %s472 = smul.addr 4, 11
    %s473 = scalar_lea.vmem %s1, %s472
    %474 = vst [vmem:[%s473] sm:%s471] %v470
    %s475 = scalar_lea.vmem [#allocation0], 96
    %v476 = vld [vmem:[%s475] sm:%s405]
    %s477 = sshllo.u32 0, 4
    %s478 = smul.addr 4, 12
    %s479 = scalar_lea.vmem %s1, %s478
    %480 = vst [vmem:[%s479] sm:%s477] %v476
    %s481 = scalar_lea.vmem [#allocation0], 104
    %v482 = vld [vmem:[%s481] sm:%s405]
    %s483 = sshllo.u32 0, 4
    %s484 = smul.addr 4, 13
    %s485 = scalar_lea.vmem %s1, %s484
    %486 = vst [vmem:[%s485] sm:%s483] %v482
    %s487 = scalar_lea.vmem [#allocation0], 112
    %v488 = vld [vmem:[%s487] sm:%s405]
    %s489 = sshllo.u32 0, 4
    %s490 = smul.addr 4, 14
    %s491 = scalar_lea.vmem %s1, %s490
    %492 = vst [vmem:[%s491] sm:%s489] %v488
    %s493 = scalar_lea.vmem [#allocation0], 120
    %v494 = vld [vmem:[%s493] sm:%s405]
    %s495 = sshllo.u32 0, 4
    %s496 = smul.addr 4, 15
    %s497 = scalar_lea.vmem %s1, %s496
    %498 = vst [vmem:[%s497] sm:%s495] %v494
    %s499 = scalar_lea.vmem [#allocation0], 128
    %v500 = vld [vmem:[%s499] sm:%s405]
    %s501 = sshllo.u32 0, 4
    %s502 = smul.addr 4, 16
    %s503 = scalar_lea.vmem %s1, %s502
    %504 = vst [vmem:[%s503] sm:%s501] %v500
    %s505 = scalar_lea.vmem [#allocation0], 136
    %v506 = vld [vmem:[%s505] sm:%s405]
    %s507 = sshllo.u32 0, 4
    %s508 = smul.addr 4, 17
    %s509 = scalar_lea.vmem %s1, %s508
    %510 = vst [vmem:[%s509] sm:%s507] %v506
    %s511 = scalar_lea.vmem [#allocation0], 144
    %v512 = vld [vmem:[%s511] sm:%s405]
    %s513 = sshllo.u32 0, 4
    %s514 = smul.addr 4, 18
    %s515 = scalar_lea.vmem %s1, %s514
    %516 = vst [vmem:[%s515] sm:%s513] %v512
    %s517 = scalar_lea.vmem [#allocation0], 152
    %v518 = vld [vmem:[%s517] sm:%s405]
    %s519 = sshllo.u32 0, 4
    %s520 = smul.addr 4, 19
    %s521 = scalar_lea.vmem %s1, %s520
    %522 = vst [vmem:[%s521] sm:%s519] %v518
    %s523 = scalar_lea.vmem [#allocation0], 160
    %v524 = vld [vmem:[%s523] sm:%s405]
    %s525 = sshllo.u32 0, 4
    %s526 = smul.addr 4, 20
    %s527 = scalar_lea.vmem %s1, %s526
    %528 = vst [vmem:[%s527] sm:%s525] %v524
    %s529 = scalar_lea.vmem [#allocation0], 168
    %v530 = vld [vmem:[%s529] sm:%s405]
    %s531 = sshllo.u32 0, 4
    %s532 = smul.addr 4, 21
    %s533 = scalar_lea.vmem %s1, %s532
    %534 = vst [vmem:[%s533] sm:%s531] %v530
    %s535 = scalar_lea.vmem [#allocation0], 176
    %v536 = vld [vmem:[%s535] sm:%s405]
    %s537 = sshllo.u32 0, 4
    %s538 = smul.addr 4, 22
    %s539 = scalar_lea.vmem %s1, %s538
    %540 = vst [vmem:[%s539] sm:%s537] %v536
    %s541 = scalar_lea.vmem [#allocation0], 184
    %v542 = vld [vmem:[%s541] sm:%s405]
    %s543 = sshllo.u32 0, 4
    %s544 = smul.addr 4, 23
    %s545 = scalar_lea.vmem %s1, %s544
    %546 = vst [vmem:[%s545] sm:%s543] %v542
    %s547 = scalar_lea.vmem [#allocation0], 192
    %v548 = vld [vmem:[%s547] sm:%s405]
    %s549 = sshllo.u32 0, 4
    %s550 = smul.addr 4, 24
    %s551 = scalar_lea.vmem %s1, %s550
    %552 = vst [vmem:[%s551] sm:%s549] %v548
    %s553 = scalar_lea.vmem [#allocation0], 200
    %v554 = vld [vmem:[%s553] sm:%s405]
    %s555 = sshllo.u32 0, 4
    %s556 = smul.addr 4, 25
    %s557 = scalar_lea.vmem %s1, %s556
    %558 = vst [vmem:[%s557] sm:%s555] %v554
    %s559 = scalar_lea.vmem [#allocation0], 208
    %v560 = vld [vmem:[%s559] sm:%s405]
    %s561 = sshllo.u32 0, 4
    %s562 = smul.addr 4, 26
    %s563 = scalar_lea.vmem %s1, %s562
    %564 = vst [vmem:[%s563] sm:%s561] %v560
    %s565 = scalar_lea.vmem [#allocation0], 216
    %v566 = vld [vmem:[%s565] sm:%s405]
    %s567 = sshllo.u32 0, 4
    %s568 = smul.addr 4, 27
    %s569 = scalar_lea.vmem %s1, %s568
    %570 = vst [vmem:[%s569] sm:%s567] %v566
    %s571 = scalar_lea.vmem [#allocation0], 224
    %v572 = vld [vmem:[%s571] sm:%s405]
    %s573 = sshllo.u32 0, 4
    %s574 = smul.addr 4, 28
    %s575 = scalar_lea.vmem %s1, %s574
    %576 = vst [vmem:[%s575] sm:%s573] %v572
    %s577 = scalar_lea.vmem [#allocation0], 232
    %v578 = vld [vmem:[%s577] sm:%s405]
    %s579 = sshllo.u32 0, 4
    %s580 = smul.addr 4, 29
    %s581 = scalar_lea.vmem %s1, %s580
    %582 = vst [vmem:[%s581] sm:%s579] %v578
    %s583 = scalar_lea.vmem [#allocation0], 240
    %v584 = vld [vmem:[%s583] sm:%s405]
    %s585 = sshllo.u32 0, 4
    %s586 = smul.addr 4, 30
    %s587 = scalar_lea.vmem %s1, %s586
    %588 = vst [vmem:[%s587] sm:%s585] %v584
    %s589 = scalar_lea.vmem [#allocation0], 248
    %v590 = vld [vmem:[%s589] sm:%s405]
    %s591 = sshllo.u32 0, 4
    %s592 = smul.addr 4, 31
    %s593 = scalar_lea.vmem %s1, %s592
    %594 = vst [vmem:[%s593] sm:%s591] %v590
    %s595 = scalar_lea.vmem [#allocation0], 256
    %v596 = vld [vmem:[%s595] sm:%s405]
    %s597 = sshllo.u32 0, 4
    %s598 = smul.addr 4, 32
    %s599 = scalar_lea.vmem %s1, %s598
    %600 = vst [vmem:[%s599] sm:%s597] %v596
    %s601 = scalar_lea.vmem [#allocation0], 264
    %v602 = vld [vmem:[%s601] sm:%s405]
    %s603 = sshllo.u32 0, 4
    %s604 = smul.addr 4, 33
    %s605 = scalar_lea.vmem %s1, %s604
    %606 = vst [vmem:[%s605] sm:%s603] %v602
    %s607 = scalar_lea.vmem [#allocation0], 272
    %v608 = vld [vmem:[%s607] sm:%s405]
    %s609 = sshllo.u32 0, 4
    %s610 = smul.addr 4, 34
    %s611 = scalar_lea.vmem %s1, %s610
    %612 = vst [vmem:[%s611] sm:%s609] %v608
    %s613 = scalar_lea.vmem [#allocation0], 280
    %v614 = vld [vmem:[%s613] sm:%s405]
    %s615 = sshllo.u32 0, 4
    %s616 = smul.addr 4, 35
    %s617 = scalar_lea.vmem %s1, %s616
    %618 = vst [vmem:[%s617] sm:%s615] %v614
    %s619 = scalar_lea.vmem [#allocation0], 288
    %v620 = vld [vmem:[%s619] sm:%s405]
    %s621 = sshllo.u32 0, 4
    %s622 = smul.addr 4, 36
    %s623 = scalar_lea.vmem %s1, %s622
    %624 = vst [vmem:[%s623] sm:%s621] %v620
    %s625 = scalar_lea.vmem [#allocation0], 296
    %v626 = vld [vmem:[%s625] sm:%s405]
    %s627 = sshllo.u32 0, 4
    %s628 = smul.addr 4, 37
    %s629 = scalar_lea.vmem %s1, %s628
    %630 = vst [vmem:[%s629] sm:%s627] %v626
    %s631 = scalar_lea.vmem [#allocation0], 304
    %v632 = vld [vmem:[%s631] sm:%s405]
    %s633 = sshllo.u32 0, 4
    %s634 = smul.addr 4, 38
    %s635 = scalar_lea.vmem %s1, %s634
    %636 = vst [vmem:[%s635] sm:%s633] %v632
    %s637 = scalar_lea.vmem [#allocation0], 312
    %v638 = vld [vmem:[%s637] sm:%s405]
    %s639 = sshllo.u32 0, 4
    %s640 = smul.addr 4, 39
    %s641 = scalar_lea.vmem %s1, %s640
    %642 = vst [vmem:[%s641] sm:%s639] %v638
    %s643 = scalar_lea.vmem [#allocation0], 320
    %v644 = vld [vmem:[%s643] sm:%s405]
    %s645 = sshllo.u32 0, 4
    %s646 = smul.addr 4, 40
    %s647 = scalar_lea.vmem %s1, %s646
    %648 = vst [vmem:[%s647] sm:%s645] %v644
    %s649 = scalar_lea.vmem [#allocation0], 328
    %v650 = vld [vmem:[%s649] sm:%s405]
    %s651 = sshllo.u32 0, 4
    %s652 = smul.addr 4, 41
    %s653 = scalar_lea.vmem %s1, %s652
    %654 = vst [vmem:[%s653] sm:%s651] %v650
    %s655 = scalar_lea.vmem [#allocation0], 336
    %v656 = vld [vmem:[%s655] sm:%s405]
    %s657 = sshllo.u32 0, 4
    %s658 = smul.addr 4, 42
    %s659 = scalar_lea.vmem %s1, %s658
    %660 = vst [vmem:[%s659] sm:%s657] %v656
    %s661 = scalar_lea.vmem [#allocation0], 344
    %v662 = vld [vmem:[%s661] sm:%s405]
    %s663 = sshllo.u32 0, 4
    %s664 = smul.addr 4, 43
    %s665 = scalar_lea.vmem %s1, %s664
    %666 = vst [vmem:[%s665] sm:%s663] %v662
    %s667 = scalar_lea.vmem [#allocation0], 352
    %v668 = vld [vmem:[%s667] sm:%s405]
    %s669 = sshllo.u32 0, 4
    %s670 = smul.addr 4, 44
    %s671 = scalar_lea.vmem %s1, %s670
    %672 = vst [vmem:[%s671] sm:%s669] %v668
    %s673 = scalar_lea.vmem [#allocation0], 360
    %v674 = vld [vmem:[%s673] sm:%s405]
    %s675 = sshllo.u32 0, 4
    %s676 = smul.addr 4, 45
    %s677 = scalar_lea.vmem %s1, %s676
    %678 = vst [vmem:[%s677] sm:%s675] %v674
    %s679 = scalar_lea.vmem [#allocation0], 368
    %v680 = vld [vmem:[%s679] sm:%s405]
    %s681 = sshllo.u32 0, 4
    %s682 = smul.addr 4, 46
    %s683 = scalar_lea.vmem %s1, %s682
    %684 = vst [vmem:[%s683] sm:%s681] %v680
    %s685 = scalar_lea.vmem [#allocation0], 376
    %v686 = vld [vmem:[%s685] sm:%s405]
    %s687 = sshllo.u32 0, 4
    %s688 = smul.addr 4, 47
    %s689 = scalar_lea.vmem %s1, %s688
    %690 = vst [vmem:[%s689] sm:%s687] %v686
    %s691 = scalar_lea.vmem [#allocation0], 384
    %v692 = vld [vmem:[%s691] sm:%s405]
    %s693 = sshllo.u32 0, 4
    %s694 = smul.addr 4, 48
    %s695 = scalar_lea.vmem %s1, %s694
    %696 = vst [vmem:[%s695] sm:%s693] %v692
    %s697 = scalar_lea.vmem [#allocation0], 392
    %v698 = vld [vmem:[%s697] sm:%s405]
    %s699 = sshllo.u32 0, 4
    %s700 = smul.addr 4, 49
    %s701 = scalar_lea.vmem %s1, %s700
    %702 = vst [vmem:[%s701] sm:%s699] %v698
    %s703 = scalar_lea.vmem [#allocation0], 400
    %v704 = vld [vmem:[%s703] sm:%s405]
    %s705 = sshllo.u32 0, 4
    %s706 = smul.addr 4, 50
    %s707 = scalar_lea.vmem %s1, %s706
    %708 = vst [vmem:[%s707] sm:%s705] %v704
    %s709 = scalar_lea.vmem [#allocation0], 408
    %v710 = vld [vmem:[%s709] sm:%s405]
    %s711 = sshllo.u32 0, 4
    %s712 = smul.addr 4, 51
    %s713 = scalar_lea.vmem %s1, %s712
    %714 = vst [vmem:[%s713] sm:%s711] %v710
    %s715 = scalar_lea.vmem [#allocation0], 416
    %v716 = vld [vmem:[%s715] sm:%s405]
    %s717 = sshllo.u32 0, 4
    %s718 = smul.addr 4, 52
    %s719 = scalar_lea.vmem %s1, %s718
    %720 = vst [vmem:[%s719] sm:%s717] %v716
    %s721 = scalar_lea.vmem [#allocation0], 424
    %v722 = vld [vmem:[%s721] sm:%s405]
    %s723 = sshllo.u32 0, 4
    %s724 = smul.addr 4, 53
    %s725 = scalar_lea.vmem %s1, %s724
    %726 = vst [vmem:[%s725] sm:%s723] %v722
    %s727 = scalar_lea.vmem [#allocation0], 432
    %v728 = vld [vmem:[%s727] sm:%s405]
    %s729 = sshllo.u32 0, 4
    %s730 = smul.addr 4, 54
    %s731 = scalar_lea.vmem %s1, %s730
    %732 = vst [vmem:[%s731] sm:%s729] %v728
    %s733 = scalar_lea.vmem [#allocation0], 440
    %v734 = vld [vmem:[%s733] sm:%s405]
    %s735 = sshllo.u32 0, 4
    %s736 = smul.addr 4, 55
    %s737 = scalar_lea.vmem %s1, %s736
    %738 = vst [vmem:[%s737] sm:%s735] %v734
    %s739 = scalar_lea.vmem [#allocation0], 448
    %v740 = vld [vmem:[%s739] sm:%s405]
    %s741 = sshllo.u32 0, 4
    %s742 = smul.addr 4, 56
    %s743 = scalar_lea.vmem %s1, %s742
    %744 = vst [vmem:[%s743] sm:%s741] %v740
    %s745 = scalar_lea.vmem [#allocation0], 456
    %v746 = vld [vmem:[%s745] sm:%s405]
    %s747 = sshllo.u32 0, 4
    %s748 = smul.addr 4, 57
    %s749 = scalar_lea.vmem %s1, %s748
    %750 = vst [vmem:[%s749] sm:%s747] %v746
    %s751 = scalar_lea.vmem [#allocation0], 464
    %v752 = vld [vmem:[%s751] sm:%s405]
    %s753 = sshllo.u32 0, 4
    %s754 = smul.addr 4, 58
    %s755 = scalar_lea.vmem %s1, %s754
    %756 = vst [vmem:[%s755] sm:%s753] %v752
    %s757 = scalar_lea.vmem [#allocation0], 472
    %v758 = vld [vmem:[%s757] sm:%s405]
    %s759 = sshllo.u32 0, 4
    %s760 = smul.addr 4, 59
    %s761 = scalar_lea.vmem %s1, %s760
    %762 = vst [vmem:[%s761] sm:%s759] %v758
    %s763 = scalar_lea.vmem [#allocation0], 480
    %v764 = vld [vmem:[%s763] sm:%s405]
    %s765 = sshllo.u32 0, 4
    %s766 = smul.addr 4, 60
    %s767 = scalar_lea.vmem %s1, %s766
    %768 = vst [vmem:[%s767] sm:%s765] %v764
    %s769 = scalar_lea.vmem [#allocation0], 488
    %v770 = vld [vmem:[%s769] sm:%s405]
    %s771 = sshllo.u32 0, 4
    %s772 = smul.addr 4, 61
    %s773 = scalar_lea.vmem %s1, %s772
    %774 = vst [vmem:[%s773] sm:%s771] %v770
    %s775 = scalar_lea.vmem [#allocation0], 496
    %v776 = vld [vmem:[%s775] sm:%s405]
    %s777 = sshllo.u32 0, 4
    %s778 = smul.addr 4, 62
    %s779 = scalar_lea.vmem %s1, %s778
    %780 = vst [vmem:[%s779] sm:%s777] %v776
    %s781 = scalar_lea.vmem [#allocation0], 504
    %v782 = vld [vmem:[%s781] sm:%s405]
    %s783 = sshllo.u32 0, 4
    %s784 = smul.addr 4, 63
    %s785 = scalar_lea.vmem %s1, %s784
    %786 = vst [vmem:[%s785] sm:%s783] %v782
    %s787 = scalar_lea.vmem [#allocation0], 512
    %v788 = vld [vmem:[%s787] sm:%s405]
    %s789 = sshllo.u32 0, 4
    %s790 = smul.addr 4, 64
    %s791 = scalar_lea.vmem %s1, %s790
    %792 = vst [vmem:[%s791] sm:%s789] %v788
    %s793 = scalar_lea.vmem [#allocation0], 520
    %v794 = vld [vmem:[%s793] sm:%s405]
    %s795 = sshllo.u32 0, 4
    %s796 = smul.addr 4, 65
    %s797 = scalar_lea.vmem %s1, %s796
    %798 = vst [vmem:[%s797] sm:%s795] %v794
    %s799 = scalar_lea.vmem [#allocation0], 528
    %v800 = vld [vmem:[%s799] sm:%s405]
    %s801 = sshllo.u32 0, 4
    %s802 = smul.addr 4, 66
    %s803 = scalar_lea.vmem %s1, %s802
    %804 = vst [vmem:[%s803] sm:%s801] %v800
    %s805 = scalar_lea.vmem [#allocation0], 536
    %v806 = vld [vmem:[%s805] sm:%s405]
    %s807 = sshllo.u32 0, 4
    %s808 = smul.addr 4, 67
    %s809 = scalar_lea.vmem %s1, %s808
    %810 = vst [vmem:[%s809] sm:%s807] %v806
    %s811 = scalar_lea.vmem [#allocation0], 544
    %v812 = vld [vmem:[%s811] sm:%s405]
    %s813 = sshllo.u32 0, 4
    %s814 = smul.addr 4, 68
    %s815 = scalar_lea.vmem %s1, %s814
    %816 = vst [vmem:[%s815] sm:%s813] %v812
    %s817 = scalar_lea.vmem [#allocation0], 552
    %v818 = vld [vmem:[%s817] sm:%s405]
    %s819 = sshllo.u32 0, 4
    %s820 = smul.addr 4, 69
    %s821 = scalar_lea.vmem %s1, %s820
    %822 = vst [vmem:[%s821] sm:%s819] %v818
    %s823 = scalar_lea.vmem [#allocation0], 560
    %v824 = vld [vmem:[%s823] sm:%s405]
    %s825 = sshllo.u32 0, 4
    %s826 = smul.addr 4, 70
    %s827 = scalar_lea.vmem %s1, %s826
    %828 = vst [vmem:[%s827] sm:%s825] %v824
    %s829 = scalar_lea.vmem [#allocation0], 568
    %v830 = vld [vmem:[%s829] sm:%s405]
    %s831 = sshllo.u32 0, 4
    %s832 = smul.addr 4, 71
    %s833 = scalar_lea.vmem %s1, %s832
    %834 = vst [vmem:[%s833] sm:%s831] %v830
    %s835 = scalar_lea.vmem [#allocation0], 576
    %v836 = vld [vmem:[%s835] sm:%s405]
    %s837 = sshllo.u32 0, 4
    %s838 = smul.addr 4, 72
    %s839 = scalar_lea.vmem %s1, %s838
    %840 = vst [vmem:[%s839] sm:%s837] %v836
    %s841 = scalar_lea.vmem [#allocation0], 584
    %v842 = vld [vmem:[%s841] sm:%s405]
    %s843 = sshllo.u32 0, 4
    %s844 = smul.addr 4, 73
    %s845 = scalar_lea.vmem %s1, %s844
    %846 = vst [vmem:[%s845] sm:%s843] %v842
    %s847 = scalar_lea.vmem [#allocation0], 592
    %v848 = vld [vmem:[%s847] sm:%s405]
    %s849 = sshllo.u32 0, 4
    %s850 = smul.addr 4, 74
    %s851 = scalar_lea.vmem %s1, %s850
    %852 = vst [vmem:[%s851] sm:%s849] %v848
    %s853 = scalar_lea.vmem [#allocation0], 600
    %v854 = vld [vmem:[%s853] sm:%s405]
    %s855 = sshllo.u32 0, 4
    %s856 = smul.addr 4, 75
    %s857 = scalar_lea.vmem %s1, %s856
    %858 = vst [vmem:[%s857] sm:%s855] %v854
    %s859 = scalar_lea.vmem [#allocation0], 608
    %v860 = vld [vmem:[%s859] sm:%s405]
    %s861 = sshllo.u32 0, 4
    %s862 = smul.addr 4, 76
    %s863 = scalar_lea.vmem %s1, %s862
    %864 = vst [vmem:[%s863] sm:%s861] %v860
    %s865 = scalar_lea.vmem [#allocation0], 616
    %v866 = vld [vmem:[%s865] sm:%s405]
    %s867 = sshllo.u32 0, 4
    %s868 = smul.addr 4, 77
    %s869 = scalar_lea.vmem %s1, %s868
    %870 = vst [vmem:[%s869] sm:%s867] %v866
    %s871 = scalar_lea.vmem [#allocation0], 624
    %v872 = vld [vmem:[%s871] sm:%s405]
    %s873 = sshllo.u32 0, 4
    %s874 = smul.addr 4, 78
    %s875 = scalar_lea.vmem %s1, %s874
    %876 = vst [vmem:[%s875] sm:%s873] %v872
    %s877 = scalar_lea.vmem [#allocation0], 632
    %v878 = vld [vmem:[%s877] sm:%s405]
    %s879 = sshllo.u32 0, 4
    %s880 = smul.addr 4, 79
    %s881 = scalar_lea.vmem %s1, %s880
    %882 = vst [vmem:[%s881] sm:%s879] %v878
    %s883 = scalar_lea.vmem [#allocation0], 640
    %v884 = vld [vmem:[%s883] sm:%s405]
    %s885 = sshllo.u32 0, 4
    %s886 = smul.addr 4, 80
    %s887 = scalar_lea.vmem %s1, %s886
    %888 = vst [vmem:[%s887] sm:%s885] %v884
    %s889 = scalar_lea.vmem [#allocation0], 648
    %v890 = vld [vmem:[%s889] sm:%s405]
    %s891 = sshllo.u32 0, 4
    %s892 = smul.addr 4, 81
    %s893 = scalar_lea.vmem %s1, %s892
    %894 = vst [vmem:[%s893] sm:%s891] %v890
    %s895 = scalar_lea.vmem [#allocation0], 656
    %v896 = vld [vmem:[%s895] sm:%s405]
    %s897 = sshllo.u32 0, 4
    %s898 = smul.addr 4, 82
    %s899 = scalar_lea.vmem %s1, %s898
    %900 = vst [vmem:[%s899] sm:%s897] %v896
    %s901 = scalar_lea.vmem [#allocation0], 664
    %v902 = vld [vmem:[%s901] sm:%s405]
    %s903 = sshllo.u32 0, 4
    %s904 = smul.addr 4, 83
    %s905 = scalar_lea.vmem %s1, %s904
    %906 = vst [vmem:[%s905] sm:%s903] %v902
    %s907 = scalar_lea.vmem [#allocation0], 672
    %v908 = vld [vmem:[%s907] sm:%s405]
    %s909 = sshllo.u32 0, 4
    %s910 = smul.addr 4, 84
    %s911 = scalar_lea.vmem %s1, %s910
    %912 = vst [vmem:[%s911] sm:%s909] %v908
    %s913 = scalar_lea.vmem [#allocation0], 680
    %v914 = vld [vmem:[%s913] sm:%s405]
    %s915 = sshllo.u32 0, 4
    %s916 = smul.addr 4, 85
    %s917 = scalar_lea.vmem %s1, %s916
    %918 = vst [vmem:[%s917] sm:%s915] %v914
    %s919 = scalar_lea.vmem [#allocation0], 688
    %v920 = vld [vmem:[%s919] sm:%s405]
    %s921 = sshllo.u32 0, 4
    %s922 = smul.addr 4, 86
    %s923 = scalar_lea.vmem %s1, %s922
    %924 = vst [vmem:[%s923] sm:%s921] %v920
    %s925 = scalar_lea.vmem [#allocation0], 696
    %v926 = vld [vmem:[%s925] sm:%s405]
    %s927 = sshllo.u32 0, 4
    %s928 = smul.addr 4, 87
    %s929 = scalar_lea.vmem %s1, %s928
    %930 = vst [vmem:[%s929] sm:%s927] %v926
    %s931 = scalar_lea.vmem [#allocation0], 704
    %v932 = vld [vmem:[%s931] sm:%s405]
    %s933 = sshllo.u32 0, 4
    %s934 = smul.addr 4, 88
    %s935 = scalar_lea.vmem %s1, %s934
    %936 = vst [vmem:[%s935] sm:%s933] %v932
    %s937 = scalar_lea.vmem [#allocation0], 712
    %v938 = vld [vmem:[%s937] sm:%s405]
    %s939 = sshllo.u32 0, 4
    %s940 = smul.addr 4, 89
    %s941 = scalar_lea.vmem %s1, %s940
    %942 = vst [vmem:[%s941] sm:%s939] %v938
    %s943 = scalar_lea.vmem [#allocation0], 720
    %v944 = vld [vmem:[%s943] sm:%s405]
    %s945 = sshllo.u32 0, 4
    %s946 = smul.addr 4, 90
    %s947 = scalar_lea.vmem %s1, %s946
    %948 = vst [vmem:[%s947] sm:%s945] %v944
    %s949 = scalar_lea.vmem [#allocation0], 728
    %v950 = vld [vmem:[%s949] sm:%s405]
    %s951 = sshllo.u32 0, 4
    %s952 = smul.addr 4, 91
    %s953 = scalar_lea.vmem %s1, %s952
    %954 = vst [vmem:[%s953] sm:%s951] %v950
    %s955 = scalar_lea.vmem [#allocation0], 736
    %v956 = vld [vmem:[%s955] sm:%s405]
    %s957 = sshllo.u32 0, 4
    %s958 = smul.addr 4, 92
    %s959 = scalar_lea.vmem %s1, %s958
    %960 = vst [vmem:[%s959] sm:%s957] %v956
    %s961 = scalar_lea.vmem [#allocation0], 744
    %v962 = vld [vmem:[%s961] sm:%s405]
    %s963 = sshllo.u32 0, 4
    %s964 = smul.addr 4, 93
    %s965 = scalar_lea.vmem %s1, %s964
    %966 = vst [vmem:[%s965] sm:%s963] %v962
    %s967 = scalar_lea.vmem [#allocation0], 752
    %v968 = vld [vmem:[%s967] sm:%s405]
    %s969 = sshllo.u32 0, 4
    %s970 = smul.addr 4, 94
    %s971 = scalar_lea.vmem %s1, %s970
    %972 = vst [vmem:[%s971] sm:%s969] %v968
    %s973 = scalar_lea.vmem [#allocation0], 760
    %v974 = vld [vmem:[%s973] sm:%s405]
    %s975 = sshllo.u32 0, 4
    %s976 = smul.addr 4, 95
    %s977 = scalar_lea.vmem %s1, %s976
    %978 = vst [vmem:[%s977] sm:%s975] %v974

// kernel: tile.30
$region0: #{tile.30}
  %s0 = inlined_call_operand.vmem [shape: f32[22,4,16], index: 0, kind: input, shape index: {}]
  %s1 = inlined_call_operand.vmem [shape: f32[22,64], index: 1, kind: output, shape index: {}]
  $region1: #{tile.30} parent=0
    #allocation0 [shape = 'u8[90112]{0}', space=vmem, size = 0x16000, scoped, tag = 'scoped mem for input reshape']
    %s3 = sshllo.u32 0, 4
    %s4 = smul.addr 4, 21
    %s5 = scalar_lea.vmem %s0, %s4
    %v6 = vld [vmem:[%s5] sm:%s3]
    %s7 = scalar_lea.vmem [#allocation0], 168
    %8 = vst [vmem:[%s7] sm:%s3] %v6
    %s9 = smul.addr 4, 20
    %s10 = scalar_lea.vmem %s0, %s9
    %v11 = vld [vmem:[%s10] sm:%s3]
    %s12 = scalar_lea.vmem [#allocation0], 160
    %13 = vst [vmem:[%s12] sm:%s3] %v11
    %s14 = smul.addr 4, 19
    %s15 = scalar_lea.vmem %s0, %s14
    %v16 = vld [vmem:[%s15] sm:%s3]
    %s17 = scalar_lea.vmem [#allocation0], 152
    %18 = vst [vmem:[%s17] sm:%s3] %v16
    %s19 = smul.addr 4, 18
    %s20 = scalar_lea.vmem %s0, %s19
    %v21 = vld [vmem:[%s20] sm:%s3]
    %s22 = scalar_lea.vmem [#allocation0], 144
    %23 = vst [vmem:[%s22] sm:%s3] %v21
    %s24 = smul.addr 4, 17
    %s25 = scalar_lea.vmem %s0, %s24
    %v26 = vld [vmem:[%s25] sm:%s3]
    %s27 = scalar_lea.vmem [#allocation0], 136
    %28 = vst [vmem:[%s27] sm:%s3] %v26
    %s29 = smul.addr 4, 16
    %s30 = scalar_lea.vmem %s0, %s29
    %v31 = vld [vmem:[%s30] sm:%s3]
    %s32 = scalar_lea.vmem [#allocation0], 128
    %33 = vst [vmem:[%s32] sm:%s3] %v31
    %s34 = smul.addr 4, 15
    %s35 = scalar_lea.vmem %s0, %s34
    %v36 = vld [vmem:[%s35] sm:%s3]
    %s37 = scalar_lea.vmem [#allocation0], 120
    %38 = vst [vmem:[%s37] sm:%s3] %v36
    %s39 = smul.addr 4, 14
    %s40 = scalar_lea.vmem %s0, %s39
    %v41 = vld [vmem:[%s40] sm:%s3]
    %s42 = scalar_lea.vmem [#allocation0], 112
    %43 = vst [vmem:[%s42] sm:%s3] %v41
    %s44 = smul.addr 4, 13
    %s45 = scalar_lea.vmem %s0, %s44
    %v46 = vld [vmem:[%s45] sm:%s3]
    %s47 = scalar_lea.vmem [#allocation0], 104
    %48 = vst [vmem:[%s47] sm:%s3] %v46
    %s49 = smul.addr 4, 12
    %s50 = scalar_lea.vmem %s0, %s49
    %v51 = vld [vmem:[%s50] sm:%s3]
    %s52 = scalar_lea.vmem [#allocation0], 96
    %53 = vst [vmem:[%s52] sm:%s3] %v51
    %s54 = smul.addr 4, 11
    %s55 = scalar_lea.vmem %s0, %s54
    %v56 = vld [vmem:[%s55] sm:%s3]
    %s57 = scalar_lea.vmem [#allocation0], 88
    %58 = vst [vmem:[%s57] sm:%s3] %v56
    %s59 = smul.addr 4, 10
    %s60 = scalar_lea.vmem %s0, %s59
    %v61 = vld [vmem:[%s60] sm:%s3]
    %s62 = scalar_lea.vmem [#allocation0], 80
    %63 = vst [vmem:[%s62] sm:%s3] %v61
    %s64 = smul.addr 4, 9
    %s65 = scalar_lea.vmem %s0, %s64
    %v66 = vld [vmem:[%s65] sm:%s3]
    %s67 = scalar_lea.vmem [#allocation0], 72
    %68 = vst [vmem:[%s67] sm:%s3] %v66
    %s69 = smul.addr 4, 8
    %s70 = scalar_lea.vmem %s0, %s69
    %v71 = vld [vmem:[%s70] sm:%s3]
    %s72 = scalar_lea.vmem [#allocation0], 64
    %73 = vst [vmem:[%s72] sm:%s3] %v71
    %s74 = smul.addr 4, 7
    %s75 = scalar_lea.vmem %s0, %s74
    %v76 = vld [vmem:[%s75] sm:%s3]
    %s77 = scalar_lea.vmem [#allocation0], 56
    %78 = vst [vmem:[%s77] sm:%s3] %v76
    %s79 = smul.addr 4, 6
    %s80 = scalar_lea.vmem %s0, %s79
    %v81 = vld [vmem:[%s80] sm:%s3]
    %s82 = scalar_lea.vmem [#allocation0], 48
    %83 = vst [vmem:[%s82] sm:%s3] %v81
    %s84 = smul.addr 4, 5
    %s85 = scalar_lea.vmem %s0, %s84
    %v86 = vld [vmem:[%s85] sm:%s3]
    %s87 = scalar_lea.vmem [#allocation0], 40
    %88 = vst [vmem:[%s87] sm:%s3] %v86
    %s89 = smul.addr 4, 4
    %s90 = scalar_lea.vmem %s0, %s89
    %v91 = vld [vmem:[%s90] sm:%s3]
    %s92 = scalar_lea.vmem [#allocation0], 32
    %93 = vst [vmem:[%s92] sm:%s3] %v91
    %s94 = smul.addr 4, 3
    %s95 = scalar_lea.vmem %s0, %s94
    %v96 = vld [vmem:[%s95] sm:%s3]
    %s97 = scalar_lea.vmem [#allocation0], 24
    %98 = vst [vmem:[%s97] sm:%s3] %v96
    %s99 = smul.addr 4, 2
    %s100 = scalar_lea.vmem %s0, %s99
    %v101 = vld [vmem:[%s100] sm:%s3]
    %s102 = scalar_lea.vmem [#allocation0], 16
    %103 = vst [vmem:[%s102] sm:%s3] %v101
    %s104 = scalar_lea.vmem %s0, 4
    %v105 = vld [vmem:[%s104] sm:%s3]
    %s106 = scalar_lea.vmem [#allocation0], 8
    %107 = vst [vmem:[%s106] sm:%s3] %v105
    %v108 = vld [vmem:[%s0] sm:%s3]
    %109 = vst [vmem:[#allocation0] sm:%s3] %v108
    %v110 = vld [vmem:[#allocation0] ss:$8 sm:$0xf]
    %v111 = vld [vmem:[#allocation0] ss:$8 sm:$0xf0]
    %vm112 = vcmask 1047556
    %v113 = vsel %vm112, %v111, %v110
    %vm114 = vcmask 130048
    %115 = vst.msk [vmem:[%s1] sm:$0xff] %vm114, %v113
    %s116 = scalar_lea.vmem [#allocation0], 64
    %v117 = vld [vmem:[%s116] ss:$8 sm:$0xf]
    %s118 = scalar_lea.vmem [#allocation0], 64
    %v119 = vld [vmem:[%s118] ss:$8 sm:$0xf0]
    %vm120 = vcmask 1047556
    %v121 = vsel %vm120, %v119, %v117
    %vm122 = vcmask 130048
    %s123 = scalar_lea.vmem %s1, 8
    %124 = vst.msk [vmem:[%s123] sm:$0xff] %vm122, %v121
    %s125 = scalar_lea.vmem [#allocation0], 128
    %v126 = vld [vmem:[%s125] ss:$8 sm:$0xf]
    %s127 = scalar_lea.vmem [#allocation0], 128
    %s128 = smov 48
    %v129 = vld [vmem:[%s127] ss:$8 sm:%s128]
    %vm130 = vcmask 1045508
    %v131 = vsel %vm130, %v129, %v126
    %vm132 = vcmask 130048
    %s133 = scalar_lea.vmem %s1, 16
    %134 = vst.msk [vmem:[%s133] sm:$0x3f] %vm132, %v131
    %s135 = scalar_lea.vmem [#allocation0], 3
    %v136 = vld [vmem:[%s135] ss:$8 sm:$0xf]
    %s137 = scalar_lea.vmem [#allocation0], 3
    %v138 = vld [vmem:[%s137] ss:$8 sm:$0xf0]
    %vm139 = vcmask 1047556
    %v140 = vsel %vm139, %v138, %v136
    %141 = vrot.lane.b32.xlu0 %v140, 48
    %v142 = vpop.permute.xlu0 %141
    %vm143 = vcmask 523648
    %144 = vst.msk [vmem:[%s1] sm:$0xff] %vm143, %v142
    %s145 = scalar_lea.vmem [#allocation0], 67
    %v146 = vld [vmem:[%s145] ss:$8 sm:$0xf]
    %s147 = scalar_lea.vmem [#allocation0], 67
    %v148 = vld [vmem:[%s147] ss:$8 sm:$0xf0]
    %vm149 = vcmask 1047556
    %v150 = vsel %vm149, %v148, %v146
    %151 = vrot.lane.b32.xlu0 %v150, 48
    %v152 = vpop.permute.xlu0 %151
    %vm153 = vcmask 523648
    %s154 = scalar_lea.vmem %s1, 8
    %155 = vst.msk [vmem:[%s154] sm:$0xff] %vm153, %v152
    %s156 = scalar_lea.vmem [#allocation0], 131
    %v157 = vld [vmem:[%s156] ss:$8 sm:$0xf]
    %s158 = scalar_lea.vmem [#allocation0], 131
    %s159 = smov 48
    %v160 = vld [vmem:[%s158] ss:$8 sm:%s159]
    %vm161 = vcmask 1045508
    %v162 = vsel %vm161, %v160, %v157
    %163 = vrot.lane.b32.xlu0 %v162, 48
    %v164 = vpop.permute.xlu0 %163
    %vm165 = vcmask 523648
    %s166 = scalar_lea.vmem %s1, 16
    %167 = vst.msk [vmem:[%s166] sm:$0x3f] %vm165, %v164
    %s168 = scalar_lea.vmem [#allocation0], 2
    %v169 = vld [vmem:[%s168] ss:$8 sm:$0xf]
    %s170 = scalar_lea.vmem [#allocation0], 2
    %v171 = vld [vmem:[%s170] ss:$8 sm:$0xf0]
    %vm172 = vcmask 1047556
    %v173 = vsel %vm172, %v171, %v169
    %174 = vrot.lane.b32.xlu0 %v173, 32
    %v175 = vpop.permute.xlu0 %174
    %vm176 = vcmask 392448
    %177 = vst.msk [vmem:[%s1] sm:$0xff] %vm176, %v175
    %s178 = scalar_lea.vmem [#allocation0], 66
    %v179 = vld [vmem:[%s178] ss:$8 sm:$0xf]
    %s180 = scalar_lea.vmem [#allocation0], 66
    %v181 = vld [vmem:[%s180] ss:$8 sm:$0xf0]
    %vm182 = vcmask 1047556
    %v183 = vsel %vm182, %v181, %v179
    %184 = vrot.lane.b32.xlu0 %v183, 32
    %v185 = vpop.permute.xlu0 %184
    %vm186 = vcmask 392448
    %s187 = scalar_lea.vmem %s1, 8
    %188 = vst.msk [vmem:[%s187] sm:$0xff] %vm186, %v185
    %s189 = scalar_lea.vmem [#allocation0], 130
    %v190 = vld [vmem:[%s189] ss:$8 sm:$0xf]
    %s191 = scalar_lea.vmem [#allocation0], 130
    %s192 = smov 48
    %v193 = vld [vmem:[%s191] ss:$8 sm:%s192]
    %vm194 = vcmask 1045508
    %v195 = vsel %vm194, %v193, %v190
    %196 = vrot.lane.b32.xlu0 %v195, 32
    %v197 = vpop.permute.xlu0 %196
    %vm198 = vcmask 392448
    %s199 = scalar_lea.vmem %s1, 16
    %200 = vst.msk [vmem:[%s199] sm:$0x3f] %vm198, %v197
    %s201 = scalar_lea.vmem [#allocation0], 1
    %v202 = vld [vmem:[%s201] ss:$8 sm:$0xf]
    %s203 = scalar_lea.vmem [#allocation0], 1
    %v204 = vld [vmem:[%s203] ss:$8 sm:$0xf0]
    %vm205 = vcmask 1047556
    %v206 = vsel %vm205, %v204, %v202
    %207 = vrot.lane.b32.xlu0 %v206, 16
    %v208 = vpop.permute.xlu0 %207
    %vm209 = vcmask 261248
    %210 = vst.msk [vmem:[%s1] sm:$0xff] %vm209, %v208
    %s211 = scalar_lea.vmem [#allocation0], 65
    %v212 = vld [vmem:[%s211] ss:$8 sm:$0xf]
    %s213 = scalar_lea.vmem [#allocation0], 65
    %v214 = vld [vmem:[%s213] ss:$8 sm:$0xf0]
    %vm215 = vcmask 1047556
    %v216 = vsel %vm215, %v214, %v212
    %217 = vrot.lane.b32.xlu0 %v216, 16
    %v218 = vpop.permute.xlu0 %217
    %vm219 = vcmask 261248
    %s220 = scalar_lea.vmem %s1, 8
    %221 = vst.msk [vmem:[%s220] sm:$0xff] %vm219, %v218
    %s222 = scalar_lea.vmem [#allocation0], 129
    %v223 = vld [vmem:[%s222] ss:$8 sm:$0xf]
    %s224 = scalar_lea.vmem [#allocation0], 129
    %s225 = smov 48
    %v226 = vld [vmem:[%s224] ss:$8 sm:%s225]
    %vm227 = vcmask 1045508
    %v228 = vsel %vm227, %v226, %v223
    %229 = vrot.lane.b32.xlu0 %v228, 16
    %v230 = vpop.permute.xlu0 %229
    %vm231 = vcmask 261248
    %s232 = scalar_lea.vmem %s1, 16
    %233 = vst.msk [vmem:[%s232] sm:$0x3f] %vm231, %v230

// kernel: pixtral_vision_forward.1
$region0: #{pixtral_vision_forward.1}
  #allocation0 [shape = 'u32[]', space=smem, size = 0x4, offset = 0x4, fixed_abs, tag = 'smem constant byte address 0x4 - core index']
  #allocation1 [shape = 'u32[144,128]{1,0:T(1,128)}', space=vmem, size = 0x12000, scoped, tag = 'internal scratch']
  %s0 = inlined_call_operand.vmem [shape: f32[22,192], index: 0, kind: input, shape index: {}]
  %s1 = inlined_call_operand.vmem [shape: f32[192,64], index: 1, kind: input, shape index: {}]
  %s2 = inlined_call_operand.vmem [shape: f32[1,64], index: 2, kind: input, shape index: {}]
  %s3 = inlined_call_operand.vmem [shape: f32[2,64,64], index: 3, kind: input, shape index: {}]
  %s4 = inlined_call_operand.vmem [shape: f32[2,64,64], index: 4, kind: input, shape index: {}]
  %s5 = inlined_call_operand.vmem [shape: f32[2,64,64], index: 5, kind: input, shape index: {}]
  %s6 = inlined_call_operand.vmem [shape: f32[2,64,64], index: 6, kind: input, shape index: {}]
  %s7 = inlined_call_operand.vmem [shape: f32[2,64,64], index: 7, kind: input, shape index: {}]
  %s8 = inlined_call_operand.vmem [shape: f32[2,64,64], index: 8, kind: input, shape index: {}]
  %s9 = inlined_call_operand.vmem [shape: f32[2,64,128], index: 9, kind: input, shape index: {}]
  %s10 = inlined_call_operand.vmem [shape: f32[2,64,128], index: 10, kind: input, shape index: {}]
  %s11 = inlined_call_operand.vmem [shape: f32[2,128,64], index: 11, kind: input, shape index: {}]
  %s12 = inlined_call_operand.vmem [shape: f32[22,64], index: 12, kind: input, shape index: {}]
  %s13 = inlined_call_operand.vmem [shape: f32[22,64], index: 13, kind: input, shape index: {}]
  %s14 = inlined_call_operand.vmem [shape: f32[22,22], index: 14, kind: input, shape index: {}]
  %s15 = inlined_call_operand.vmem [shape: f32[4,1,64], index: 15, kind: input, shape index: {}]
  %s16 = inlined_call_operand.vmem [shape: f32[22,64], index: 16, kind: output, shape index: {}]
  %s17 = sld [smem:[#allocation0]]
  $region74: #{pixtral_vision_forward.1} parent=0
    _
  %s19 = ssub.s32 1, %s17
  %s20 = scalar_select 0, %s19, %s17
  // Predicated region
  $region2: #{pixtral_vision_forward.1} parent=0 // pred_check
    _
  $region3: #{pixtral_vision_forward.1} parent=0 // pred_check_branch
    %22 = sbr.rel (0) target = $region5
  $region4: #{pixtral_vision_forward.1} parent=0 // pred_region
    _
  $region5: #{pixtral_vision_forward.1} parent=0 // pred_fallthru
    _
  // Predicated region
  $region6: #{pixtral_vision_forward.1} parent=0 // pred_check
    _
  $region7: #{pixtral_vision_forward.1} parent=0 // pred_check_branch
    %24 = sbr.rel (0) target = $region9
  $region8: #{pixtral_vision_forward.1} parent=0 // pred_region
    _
  $region9: #{pixtral_vision_forward.1} parent=0 // pred_fallthru
    _
  // Predicated region
  $region10: #{pixtral_vision_forward.1} parent=0 // pred_check
    _
  $region11: #{pixtral_vision_forward.1} parent=0 // pred_check_branch
    %26 = sbr.rel (0) target = $region13
  $region12: #{pixtral_vision_forward.1} parent=0 // pred_region
    _
  $region13: #{pixtral_vision_forward.1} parent=0 // pred_fallthru
    _
  // Predicated region
  $region14: #{pixtral_vision_forward.1} parent=0 // pred_check
    _
  $region15: #{pixtral_vision_forward.1} parent=0 // pred_check_branch
    %28 = sbr.rel (0) target = $region17
  $region16: #{pixtral_vision_forward.1} parent=0 // pred_region
    _
  $region17: #{pixtral_vision_forward.1} parent=0 // pred_fallthru
    _
  // Predicated region
  $region18: #{pixtral_vision_forward.1} parent=0 // pred_check
    _
  $region19: #{pixtral_vision_forward.1} parent=0 // pred_check_branch
    %30 = sbr.rel (0) target = $region21
  $region20: #{pixtral_vision_forward.1} parent=0 // pred_region
    _
  $region21: #{pixtral_vision_forward.1} parent=0 // pred_fallthru
    _
  // Predicated region
  $region22: #{pixtral_vision_forward.1} parent=0 // pred_check
    _
  $region23: #{pixtral_vision_forward.1} parent=0 // pred_check_branch
    %32 = sbr.rel (0) target = $region25
  $region24: #{pixtral_vision_forward.1} parent=0 // pred_region
    _
  $region25: #{pixtral_vision_forward.1} parent=0 // pred_fallthru
    _
  // Predicated region
  $region26: #{pixtral_vision_forward.1} parent=0 // pred_check
    _
  $region27: #{pixtral_vision_forward.1} parent=0 // pred_check_branch
    %34 = sbr.rel (0) target = $region29
  $region28: #{pixtral_vision_forward.1} parent=0 // pred_region
    _
  $region29: #{pixtral_vision_forward.1} parent=0 // pred_fallthru
    _
  // Predicated region
  $region30: #{pixtral_vision_forward.1} parent=0 // pred_check
    _
  $region31: #{pixtral_vision_forward.1} parent=0 // pred_check_branch
    %36 = sbr.rel (0) target = $region33
  $region32: #{pixtral_vision_forward.1} parent=0 // pred_region
    _
  $region33: #{pixtral_vision_forward.1} parent=0 // pred_fallthru
    _
  // Predicated region
  $region34: #{pixtral_vision_forward.1} parent=0 // pred_check
    _
  $region35: #{pixtral_vision_forward.1} parent=0 // pred_check_branch
    %38 = sbr.rel (0) target = $region37
  $region36: #{pixtral_vision_forward.1} parent=0 // pred_region
    _
  $region37: #{pixtral_vision_forward.1} parent=0 // pred_fallthru
    _
  // Predicated region
  $region38: #{pixtral_vision_forward.1} parent=0 // pred_check
    _
  $region39: #{pixtral_vision_forward.1} parent=0 // pred_check_branch
    %40 = sbr.rel (0) target = $region41
  $region40: #{pixtral_vision_forward.1} parent=0 // pred_region
    _
  $region41: #{pixtral_vision_forward.1} parent=0 // pred_fallthru
    _
  // Predicated region
  $region42: #{pixtral_vision_forward.1} parent=0 // pred_check
    _
  $region43: #{pixtral_vision_forward.1} parent=0 // pred_check_branch
    %42 = sbr.rel (0) target = $region45
  $region44: #{pixtral_vision_forward.1} parent=0 // pred_region
    _
  $region45: #{pixtral_vision_forward.1} parent=0 // pred_fallthru
    _
  // Predicated region
  $region46: #{pixtral_vision_forward.1} parent=0 // pred_check
    _
  $region47: #{pixtral_vision_forward.1} parent=0 // pred_check_branch
    %44 = sbr.rel (0) target = $region49
  $region48: #{pixtral_vision_forward.1} parent=0 // pred_region
    _
  $region49: #{pixtral_vision_forward.1} parent=0 // pred_fallthru
    _
  // Predicated region
  $region50: #{pixtral_vision_forward.1} parent=0 // pred_check
    _
  $region51: #{pixtral_vision_forward.1} parent=0 // pred_check_branch
    %46 = sbr.rel (0) target = $region53
  $region52: #{pixtral_vision_forward.1} parent=0 // pred_region
    _
  $region53: #{pixtral_vision_forward.1} parent=0 // pred_fallthru
    _
  // Predicated region
  $region54: #{pixtral_vision_forward.1} parent=0 // pred_check
    _
  $region55: #{pixtral_vision_forward.1} parent=0 // pred_check_branch
    %48 = sbr.rel (0) target = $region57
  $region56: #{pixtral_vision_forward.1} parent=0 // pred_region
    _
  $region57: #{pixtral_vision_forward.1} parent=0 // pred_fallthru
    _
  // Predicated region
  $region58: #{pixtral_vision_forward.1} parent=0 // pred_check
    _
  $region59: #{pixtral_vision_forward.1} parent=0 // pred_check_branch
    %50 = sbr.rel (0) target = $region61
  $region60: #{pixtral_vision_forward.1} parent=0 // pred_region
    _
  $region61: #{pixtral_vision_forward.1} parent=0 // pred_fallthru
    _
  // Predicated region
  $region62: #{pixtral_vision_forward.1} parent=0 // pred_check
    _
  $region63: #{pixtral_vision_forward.1} parent=0 // pred_check_branch
    %52 = sbr.rel (0) target = $region65
  $region64: #{pixtral_vision_forward.1} parent=0 // pred_region
    _
  $region65: #{pixtral_vision_forward.1} parent=0 // pred_fallthru
    _
  %v53 = vld [vmem:[%s12] sm:$0xff]
  %v54 = vld [vmem:[%s12 + $0x8] sm:$0xff]
  %v55 = vld [vmem:[%s12 + $0x10] sm:$0x3f]
  %v56 = vld [vmem:[%s13] sm:$0xff]
  %v57 = vld [vmem:[%s13 + $0x8] sm:$0xff]
  %v58 = vld [vmem:[%s13 + $0x10] sm:$0x3f]
  %v59 = vld [vmem:[%s14] sm:$0xff]
  %v60 = vld [vmem:[%s14 + $0x8] sm:$0xff]
  %v61 = vld [vmem:[%s14 + $0x10] sm:$0x3f]
  %v62 = vld [vmem:[%s15] sm:$0x1]
  %s63 = scalar_lea.vmem %s15, 1
  %v64 = vld [vmem:[%s63] sm:$0x1]
  %s65 = scalar_lea.vmem %s15, 2
  %v66 = vld [vmem:[%s65] sm:$0x1]
  %s67 = scalar_lea.vmem %s15, 3
  %v68 = vld [vmem:[%s67] sm:$0x1]
  %v69 = vld [vmem:[%s0] sm:$0xff]
  %v70 = vld [vmem:[%s0 + $0x8] sm:$0xff]
  %v71 = vld [vmem:[%s0 + $0x10] sm:$0xff]
  %v72 = vld [vmem:[%s0 + $0x18] sm:$0xff]
  %v73 = vld [vmem:[%s0 + $0x20] sm:$0x3f]
  %v74 = vld [vmem:[%s0 + $0x28] sm:$0x3f]
  %v75 = vld [vmem:[%s1] sm:$0xff]
  %v76 = vld [vmem:[%s1 + $0x8] sm:$0xff]
  %v77 = vld [vmem:[%s1 + $0x10] sm:$0xff]
  %v78 = vld [vmem:[%s1 + $0x18] sm:$0xff]
  %v79 = vld [vmem:[%s1 + $0x20] sm:$0xff]
  %v80 = vld [vmem:[%s1 + $0x28] sm:$0xff]
  %v81 = vld [vmem:[%s1 + $0x30] sm:$0xff]
  %v82 = vld [vmem:[%s1 + $0x38] sm:$0xff]
  %v83 = vld [vmem:[%s1 + $0x40] sm:$0xff]
  %v84 = vld [vmem:[%s1 + $0x48] sm:$0xff]
  %v85 = vld [vmem:[%s1 + $0x50] sm:$0xff]
  %v86 = vld [vmem:[%s1 + $0x58] sm:$0xff]
  %v87 = vld [vmem:[%s1 + $0x60] sm:$0xff]
  %v88 = vld [vmem:[%s1 + $0x68] sm:$0xff]
  %v89 = vld [vmem:[%s1 + $0x70] sm:$0xff]
  %v90 = vld [vmem:[%s1 + $0x78] sm:$0xff]
  %v91 = vld [vmem:[%s1 + $0x80] sm:$0xff]
  %v92 = vld [vmem:[%s1 + $0x88] sm:$0xff]
  %v93 = vld [vmem:[%s1 + $0x90] sm:$0xff]
  %v94 = vld [vmem:[%s1 + $0x98] sm:$0xff]
  %v95 = vld [vmem:[%s1 + $0xa0] sm:$0xff]
  %v96 = vld [vmem:[%s1 + $0xa8] sm:$0xff]
  %v97 = vld [vmem:[%s1 + $0xb0] sm:$0xff]
  %v98 = vld [vmem:[%s1 + $0xb8] sm:$0xff]
  %vm99 = vcmask 523264
  %v101 = vsel %vm99, %v70, 0
  %v104 = vsel %vm99, %v72, 0
  %v107 = vsel %vm99, %v74, 0
  %109 = vmatprep.subr.mxu0 0.0
  %110 = vmatpush1.msra.mxu0 %v75
  %111 = vmatprep.subr.mxu0 0.0
  %112 = vmatpush1.msra.mxu0 %v76
  %113 = vmatprep.subr.mxu0 0.0
  %114 = vmatpush1.msra.mxu0 %v77
  %115 = vmatprep.subr.mxu0 0.0
  %116 = vmatpush1.msra.mxu0 %v78
  %117 = vmatprep.subr.mxu0 0.0
  %118 = vmatpush1.msra.mxu0 %v79
  %119 = vmatprep.subr.mxu0 0.0
  %120 = vmatpush1.msra.mxu0 %v80
  %121 = vmatprep.subr.mxu0 0.0
  %122 = vmatpush1.msra.mxu0 %v81
  %123 = vmatprep.subr.mxu0 0.0
  %124 = vmatpush1.msra.mxu0 %v82
  %125 = vmatprep.subr.mxu0 0.0
  %126 = vmatpush1.msra.mxu0 %v83
  %127 = vmatprep.subr.mxu0 0.0
  %128 = vmatpush1.msra.mxu0 %v84
  %129 = vmatprep.subr.mxu0 0.0
  %130 = vmatpush1.msra.mxu0 %v85
  %131 = vmatprep.subr.mxu0 0.0
  %132 = vmatpush1.msra.mxu0 %v86
  %133 = vmatprep.subr.mxu0 0.0
  %134 = vmatpush1.msra.mxu0 %v87
  %135 = vmatprep.subr.mxu0 0.0
  %136 = vmatpush1.msra.mxu0 %v88
  %137 = vmatprep.subr.mxu0 0.0
  %138 = vmatpush1.msra.mxu0 %v89
  %139 = vmatprep.subr.mxu0 0.0
  %140 = vmatpush1.msra.mxu0 %v90
  %141 = vmatprep.subr.mxu0 0.0
  %142 = vmatpush1.msra.mxu0 %v91
  %143 = vmatprep.subr.mxu0 0.0
  %144 = vmatpush1.msra.mxu0 %v92
  %145 = vmatprep.subr.mxu0 0.0
  %146 = vmatpush1.msra.mxu0 %v93
  %147 = vmatprep.subr.mxu0 0.0
  %148 = vmatpush1.msra.mxu0 %v94
  %149 = vmatprep.subr.mxu0 0.0
  %150 = vmatpush1.msra.mxu0 %v95
  %151 = vmatprep.subr.mxu0 0.0
  %152 = vmatpush1.msra.mxu0 %v96
  %153 = vmatprep.subr.mxu0 0.0
  %154 = vmatpush1.msra.mxu0 %v97
  %155 = vmatprep.subr.mxu0 0.0
  %156 = vmatpush1.msra.mxu0 %v98
  %157 = vmatprep.subr.mxu0 0.0
  %158 = vmatpush1.msra.mxu0 0.0
  %159 = vmatprep.subr.mxu0 0.0
  %160 = vmatpush1.msra.mxu0 0.0
  %161 = vmatprep.subr.mxu0 0.0
  %162 = vmatpush1.msra.mxu0 0.0
  %163 = vmatprep.subr.mxu0 0.0
  %164 = vmatpush1.msra.mxu0 0.0
  %165 = vmatprep.subr.mxu0 0.0
  %166 = vmatpush1.msra.mxu0 0.0
  %167 = vmatprep.subr.mxu0 0.0
  %168 = vmatpush1.msra.mxu0 0.0
  %169 = vmatprep.subr.mxu0 0.0
  %170 = vmatpush1.msra.mxu0 0.0
  %171 = vmatprep.subr.mxu0 0.0
  %172 = vmatpush1.msra.mxu0 0.0
  %173 = vmatprep.mubr.f32.mxu0 %v101
  %174 = vmatmul.mubr.f32.gmra.mrb[0].mxu0 %v69
  %v175 = vpop.f32.mrb[0].mxu0
  %v176 = vadd.f32 0.0, %v175
  %v177 = vpop.f32.mrb[0].mxu0
  %178 = vmatprep.mubr.f32.mxu0 %v104
  %179 = vmatmul.mubr.f32.gmra.mrb[0].mxu0 %v71
  %v180 = vpop.f32.mrb[0].mxu0
  %v181 = vadd.f32 0.0, %v180
  %v182 = vpop.f32.mrb[0].mxu0
  %183 = vmatprep.mubr.f32.mxu0 %v107
  %184 = vmatmul.mubr.f32.gmra.mrb[0].mxu0 %v73
  %v185 = vpop.f32.mrb[0].mxu0
  %v186 = vadd.f32 0.0, %v185
  %v187 = vpop.f32.mrb[0].mxu0
  %188 = vdwg.mxu0
  %v189 = vmul.f32 %v176, %v176
  %v190 = vmul.f32 %v181, %v181
  %v191 = vmul.f32 %v186, %v186
  %v192 = vsel %vm99, %v189, 0.0
  %193 = vadd.xlane.f32.xlu0 %v192
  %v194 = vpop.xlane.xlu0 %193
  %v195 = vsel %vm99, %v190, 0.0
  %196 = vadd.xlane.f32.xlu0 %v195
  %v197 = vpop.xlane.xlu0 %196
  %vm198 = vcmask 521216
  %v199 = vsel %vm198, %v191, 0.0
  %200 = vadd.xlane.f32.xlu0 %v199
  %v201 = vpop.xlane.xlu0 %200
  %v202 = vrcp.pop 64.0
  %v203 = vmul.f32 %v194, %v202
  %v204 = vmul.f32 %v197, %v202
  %v205 = vmul.f32 %v201, %v202
  %v206 = vadd.f32 %v203, 1e-05
  %v207 = vadd.f32 %v204, 1e-05
  %v208 = vadd.f32 %v205, 1e-05
  %v209 = vrsqrt.pop %v206
  %v210 = vrsqrt.pop %v207
  %v211 = vrsqrt.pop %v208
  %v212 = vmul.f32 %v176, %v209
  %v213 = vmul.f32 %v181, %v210
  %v214 = vmul.f32 %v186, %v211
  %v215 = vld [vmem:[%s2] sm:$0x1]
  %v217 = vlaneseq
  %v218 = vshrl.u32 %v217, 7
  %v219 = vsub.s32 0, %v218
  %v220 = vrot.slane %v215, %v219
  %v222 = vmul.f32 %v212, %v220
  %v223 = vmul.f32 %v213, %v220
  %v224 = vmul.f32 %v214, %v220
  %v225 = vmul.f32 %v222, %v222
  %v226 = vmul.f32 %v223, %v223
  %v227 = vmul.f32 %v224, %v224
  %v228 = vsel %vm99, %v225, 0.0
  %229 = vadd.xlane.f32.xlu0 %v228
  %v230 = vpop.xlane.xlu0 %229
  %v231 = vsel %vm99, %v226, 0.0
  %232 = vadd.xlane.f32.xlu0 %v231
  %v233 = vpop.xlane.xlu0 %232
  %v234 = vsel %vm198, %v227, 0.0
  %235 = vadd.xlane.f32.xlu0 %v234
  %v236 = vpop.xlane.xlu0 %235
  %v237 = vmul.f32 %v230, %v202
  %v238 = vmul.f32 %v233, %v202
  %v239 = vmul.f32 %v236, %v202
  %v240 = vadd.f32 %v237, 1e-05
  %v241 = vadd.f32 %v238, 1e-05
  %v242 = vadd.f32 %v239, 1e-05
  %v243 = vrsqrt.pop %v240
  %v244 = vrsqrt.pop %v241
  %v245 = vrsqrt.pop %v242
  %v246 = vmul.f32 %v222, %v243
  %v247 = vmul.f32 %v223, %v244
  %v248 = vmul.f32 %v224, %v245
  %v249 = vld [vmem:[%s3] sm:$0xff]
  %v250 = vld [vmem:[%s3 + $0x8] sm:$0xff]
  %v251 = vld [vmem:[%s3 + $0x10] sm:$0xff]
  %v252 = vld [vmem:[%s3 + $0x18] sm:$0xff]
  %v253 = vld [vmem:[%s3 + $0x20] sm:$0xff]
  %v254 = vld [vmem:[%s3 + $0x28] sm:$0xff]
  %v255 = vld [vmem:[%s3 + $0x30] sm:$0xff]
  %v256 = vld [vmem:[%s3 + $0x38] sm:$0xff]
  %v258 = vsel %vm99, %v246, 0
  %v261 = vsel %vm99, %v247, 0
  %v264 = vsel %vm99, %v248, 0
  %266 = vmatprep.subr.mxu0 0.0
  %267 = vmatpush1.msra.mxu0 %v249
  %268 = vmatprep.subr.mxu0 0.0
  %269 = vmatpush1.msra.mxu0 %v250
  %270 = vmatprep.subr.mxu0 0.0
  %271 = vmatpush1.msra.mxu0 %v251
  %272 = vmatprep.subr.mxu0 0.0
  %273 = vmatpush1.msra.mxu0 %v252
  %274 = vmatprep.subr.mxu0 0.0
  %275 = vmatpush1.msra.mxu0 %v253
  %276 = vmatprep.subr.mxu0 0.0
  %277 = vmatpush1.msra.mxu0 %v254
  %278 = vmatprep.subr.mxu0 0.0
  %279 = vmatpush1.msra.mxu0 %v255
  %280 = vmatprep.subr.mxu0 0.0
  %281 = vmatpush1.msra.mxu0 %v256
  %282 = vmatprep.subr.mxu0 0.0
  %283 = vmatpush1.msra.mxu0 0.0
  %284 = vmatprep.subr.mxu0 0.0
  %285 = vmatpush1.msra.mxu0 0.0
  %286 = vmatprep.subr.mxu0 0.0
  %287 = vmatpush1.msra.mxu0 0.0
  %288 = vmatprep.subr.mxu0 0.0
  %289 = vmatpush1.msra.mxu0 0.0
  %290 = vmatprep.subr.mxu0 0.0
  %291 = vmatpush1.msra.mxu0 0.0
  %292 = vmatprep.subr.mxu0 0.0
  %293 = vmatpush1.msra.mxu0 0.0
  %294 = vmatprep.subr.mxu0 0.0
  %295 = vmatpush1.msra.mxu0 0.0
  %296 = vmatprep.subr.mxu0 0.0
  %297 = vmatpush1.msra.mxu0 0.0
  %298 = vmatprep.subr.mxu0 0.0
  %299 = vmatpush1.msra.mxu0 0.0
  %300 = vmatprep.subr.mxu0 0.0
  %301 = vmatpush1.msra.mxu0 0.0
  %302 = vmatprep.subr.mxu0 0.0
  %303 = vmatpush1.msra.mxu0 0.0
  %304 = vmatprep.subr.mxu0 0.0
  %305 = vmatpush1.msra.mxu0 0.0
  %306 = vmatprep.subr.mxu0 0.0
  %307 = vmatpush1.msra.mxu0 0.0
  %308 = vmatprep.subr.mxu0 0.0
  %309 = vmatpush1.msra.mxu0 0.0
  %310 = vmatprep.subr.mxu0 0.0
  %311 = vmatpush1.msra.mxu0 0.0
  %312 = vmatprep.subr.mxu0 0.0
  %313 = vmatpush1.msra.mxu0 0.0
  %314 = vmatprep.subr.mxu0 0.0
  %315 = vmatpush1.msra.mxu0 0.0
  %316 = vmatprep.subr.mxu0 0.0
  %317 = vmatpush1.msra.mxu0 0.0
  %318 = vmatprep.subr.mxu0 0.0
  %319 = vmatpush1.msra.mxu0 0.0
  %320 = vmatprep.subr.mxu0 0.0
  %321 = vmatpush1.msra.mxu0 0.0
  %322 = vmatprep.subr.mxu0 0.0
  %323 = vmatpush1.msra.mxu0 0.0
  %324 = vmatprep.subr.mxu0 0.0
  %325 = vmatpush1.msra.mxu0 0.0
  %326 = vmatprep.subr.mxu0 0.0
  %327 = vmatpush1.msra.mxu0 0.0
  %328 = vmatprep.subr.mxu0 0.0
  %329 = vmatpush1.msra.mxu0 0.0
  %330 = vmatprep.mubr.f32.mxu0 0.0
  %331 = vmatmul.mubr.f32.gmra.mrb[0].mxu0 %v258
  %v332 = vpop.f32.mrb[0].mxu0
  %v333 = vadd.f32 0.0, %v332
  %v334 = vpop.f32.mrb[0].mxu0
  %335 = vmatprep.mubr.f32.mxu0 0.0
  %336 = vmatmul.mubr.f32.gmra.mrb[0].mxu0 %v261
  %v337 = vpop.f32.mrb[0].mxu0
  %v338 = vadd.f32 0.0, %v337
  %v339 = vpop.f32.mrb[0].mxu0
  %340 = vmatprep.mubr.f32.mxu0 0.0
  %341 = vmatmul.mubr.f32.gmra.mrb[0].mxu0 %v264
  %v342 = vpop.f32.mrb[0].mxu0
  %v343 = vadd.f32 0.0, %v342
  %v344 = vpop.f32.mrb[0].mxu0
  %345 = vdwg.mxu0
  %v346 = vmul.f32 %v333, %v53
  %v347 = vmul.f32 %v338, %v54
  %v348 = vmul.f32 %v343, %v55
  %v349 = vld [vmem:[%s4] sm:$0xff]
  %v350 = vld [vmem:[%s4 + $0x8] sm:$0xff]
  %v351 = vld [vmem:[%s4 + $0x10] sm:$0xff]
  %v352 = vld [vmem:[%s4 + $0x18] sm:$0xff]
  %v353 = vld [vmem:[%s4 + $0x20] sm:$0xff]
  %v354 = vld [vmem:[%s4 + $0x28] sm:$0xff]
  %v355 = vld [vmem:[%s4 + $0x30] sm:$0xff]
  %v356 = vld [vmem:[%s4 + $0x38] sm:$0xff]
  %357 = vmatprep.subr.mxu0 0.0
  %358 = vmatpush1.msra.mxu0 %v349
  %359 = vmatprep.subr.mxu0 0.0
  %360 = vmatpush1.msra.mxu0 %v350
  %361 = vmatprep.subr.mxu0 0.0
  %362 = vmatpush1.msra.mxu0 %v351
  %363 = vmatprep.subr.mxu0 0.0
  %364 = vmatpush1.msra.mxu0 %v352
  %365 = vmatprep.subr.mxu0 0.0
  %366 = vmatpush1.msra.mxu0 %v353
  %367 = vmatprep.subr.mxu0 0.0
  %368 = vmatpush1.msra.mxu0 %v354
  %369 = vmatprep.subr.mxu0 0.0
  %370 = vmatpush1.msra.mxu0 %v355
  %371 = vmatprep.subr.mxu0 0.0
  %372 = vmatpush1.msra.mxu0 %v356
  %373 = vmatprep.subr.mxu0 0.0
  %374 = vmatpush1.msra.mxu0 0.0
  %375 = vmatprep.subr.mxu0 0.0
  %376 = vmatpush1.msra.mxu0 0.0
  %377 = vmatprep.subr.mxu0 0.0
  %378 = vmatpush1.msra.mxu0 0.0
  %379 = vmatprep.subr.mxu0 0.0
  %380 = vmatpush1.msra.mxu0 0.0
  %381 = vmatprep.subr.mxu0 0.0
  %382 = vmatpush1.msra.mxu0 0.0
  %383 = vmatprep.subr.mxu0 0.0
  %384 = vmatpush1.msra.mxu0 0.0
  %385 = vmatprep.subr.mxu0 0.0
  %386 = vmatpush1.msra.mxu0 0.0
  %387 = vmatprep.subr.mxu0 0.0
  %388 = vmatpush1.msra.mxu0 0.0
  %389 = vmatprep.subr.mxu0 0.0
  %390 = vmatpush1.msra.mxu0 0.0
  %391 = vmatprep.subr.mxu0 0.0
  %392 = vmatpush1.msra.mxu0 0.0
  %393 = vmatprep.subr.mxu0 0.0
  %394 = vmatpush1.msra.mxu0 0.0
  %395 = vmatprep.subr.mxu0 0.0
  %396 = vmatpush1.msra.mxu0 0.0
  %397 = vmatprep.subr.mxu0 0.0
  %398 = vmatpush1.msra.mxu0 0.0
  %399 = vmatprep.subr.mxu0 0.0
  %400 = vmatpush1.msra.mxu0 0.0
  %401 = vmatprep.subr.mxu0 0.0
  %402 = vmatpush1.msra.mxu0 0.0
  %403 = vmatprep.subr.mxu0 0.0
  %404 = vmatpush1.msra.mxu0 0.0
  %405 = vmatprep.subr.mxu0 0.0
  %406 = vmatpush1.msra.mxu0 0.0
  %407 = vmatprep.subr.mxu0 0.0
  %408 = vmatpush1.msra.mxu0 0.0
  %409 = vmatprep.subr.mxu0 0.0
  %410 = vmatpush1.msra.mxu0 0.0
  %411 = vmatprep.subr.mxu0 0.0
  %412 = vmatpush1.msra.mxu0 0.0
  %413 = vmatprep.subr.mxu0 0.0
  %414 = vmatpush1.msra.mxu0 0.0
  %415 = vmatprep.subr.mxu0 0.0
  %416 = vmatpush1.msra.mxu0 0.0
  %417 = vmatprep.subr.mxu0 0.0
  %418 = vmatpush1.msra.mxu0 0.0
  %419 = vmatprep.subr.mxu0 0.0
  %420 = vmatpush1.msra.mxu0 0.0
  %421 = vmatprep.mubr.f32.mxu0 0.0
  %422 = vmatmul.mubr.f32.gmra.mrb[0].mxu0 %v258
  %v423 = vpop.f32.mrb[0].mxu0
  %v424 = vadd.f32 0.0, %v423
  %v425 = vpop.f32.mrb[0].mxu0
  %426 = vmatprep.mubr.f32.mxu0 0.0
  %427 = vmatmul.mubr.f32.gmra.mrb[0].mxu0 %v261
  %v428 = vpop.f32.mrb[0].mxu0
  %v429 = vadd.f32 0.0, %v428
  %v430 = vpop.f32.mrb[0].mxu0
  %431 = vmatprep.mubr.f32.mxu0 0.0
  %432 = vmatmul.mubr.f32.gmra.mrb[0].mxu0 %v264
  %v433 = vpop.f32.mrb[0].mxu0
  %v434 = vadd.f32 0.0, %v433
  %v435 = vpop.f32.mrb[0].mxu0
  %436 = vdwg.mxu0
  %v437 = vmul.f32 %v424, %v56
  %v438 = vmul.f32 %v429, %v57
  %v439 = vmul.f32 %v434, %v58
  %v440 = vadd.f32 %v346, %v437
  %v441 = vadd.f32 %v347, %v438
  %v442 = vadd.f32 %v348, %v439
  %v443 = vld [vmem:[%s5] sm:$0xff]
  %v444 = vld [vmem:[%s5 + $0x8] sm:$0xff]
  %v445 = vld [vmem:[%s5 + $0x10] sm:$0xff]
  %v446 = vld [vmem:[%s5 + $0x18] sm:$0xff]
  %v447 = vld [vmem:[%s5 + $0x20] sm:$0xff]
  %v448 = vld [vmem:[%s5 + $0x28] sm:$0xff]
  %v449 = vld [vmem:[%s5 + $0x30] sm:$0xff]
  %v450 = vld [vmem:[%s5 + $0x38] sm:$0xff]
  %451 = vmatprep.subr.mxu0 0.0
  %452 = vmatpush1.msra.mxu0 %v443
  %453 = vmatprep.subr.mxu0 0.0
  %454 = vmatpush1.msra.mxu0 %v444
  %455 = vmatprep.subr.mxu0 0.0
  %456 = vmatpush1.msra.mxu0 %v445
  %457 = vmatprep.subr.mxu0 0.0
  %458 = vmatpush1.msra.mxu0 %v446
  %459 = vmatprep.subr.mxu0 0.0
  %460 = vmatpush1.msra.mxu0 %v447
  %461 = vmatprep.subr.mxu0 0.0
  %462 = vmatpush1.msra.mxu0 %v448
  %463 = vmatprep.subr.mxu0 0.0
  %464 = vmatpush1.msra.mxu0 %v449
  %465 = vmatprep.subr.mxu0 0.0
  %466 = vmatpush1.msra.mxu0 %v450
  %467 = vmatprep.subr.mxu0 0.0
  %468 = vmatpush1.msra.mxu0 0.0
  %469 = vmatprep.subr.mxu0 0.0
  %470 = vmatpush1.msra.mxu0 0.0
  %471 = vmatprep.subr.mxu0 0.0
  %472 = vmatpush1.msra.mxu0 0.0
  %473 = vmatprep.subr.mxu0 0.0
  %474 = vmatpush1.msra.mxu0 0.0
  %475 = vmatprep.subr.mxu0 0.0
  %476 = vmatpush1.msra.mxu0 0.0
  %477 = vmatprep.subr.mxu0 0.0
  %478 = vmatpush1.msra.mxu0 0.0
  %479 = vmatprep.subr.mxu0 0.0
  %480 = vmatpush1.msra.mxu0 0.0
  %481 = vmatprep.subr.mxu0 0.0
  %482 = vmatpush1.msra.mxu0 0.0
  %483 = vmatprep.subr.mxu0 0.0
  %484 = vmatpush1.msra.mxu0 0.0
  %485 = vmatprep.subr.mxu0 0.0
  %486 = vmatpush1.msra.mxu0 0.0
  %487 = vmatprep.subr.mxu0 0.0
  %488 = vmatpush1.msra.mxu0 0.0
  %489 = vmatprep.subr.mxu0 0.0
  %490 = vmatpush1.msra.mxu0 0.0
  %491 = vmatprep.subr.mxu0 0.0
  %492 = vmatpush1.msra.mxu0 0.0
  %493 = vmatprep.subr.mxu0 0.0
  %494 = vmatpush1.msra.mxu0 0.0
  %495 = vmatprep.subr.mxu0 0.0
  %496 = vmatpush1.msra.mxu0 0.0
  %497 = vmatprep.subr.mxu0 0.0
  %498 = vmatpush1.msra.mxu0 0.0
  %499 = vmatprep.subr.mxu0 0.0
  %500 = vmatpush1.msra.mxu0 0.0
  %501 = vmatprep.subr.mxu0 0.0
  %502 = vmatpush1.msra.mxu0 0.0
  %503 = vmatprep.subr.mxu0 0.0
  %504 = vmatpush1.msra.mxu0 0.0
  %505 = vmatprep.subr.mxu0 0.0
  %506 = vmatpush1.msra.mxu0 0.0
  %507 = vmatprep.subr.mxu0 0.0
  %508 = vmatpush1.msra.mxu0 0.0
  %509 = vmatprep.subr.mxu0 0.0
  %510 = vmatpush1.msra.mxu0 0.0
  %511 = vmatprep.subr.mxu0 0.0
  %512 = vmatpush1.msra.mxu0 0.0
  %513 = vmatprep.subr.mxu0 0.0
  %514 = vmatpush1.msra.mxu0 0.0
  %515 = vmatprep.mubr.f32.mxu0 0.0
  %516 = vmatmul.mubr.f32.gmra.mrb[0].mxu0 %v258
  %v517 = vpop.f32.mrb[0].mxu0
  %v518 = vadd.f32 0.0, %v517
  %v519 = vpop.f32.mrb[0].mxu0
  %520 = vmatprep.mubr.f32.mxu0 0.0
  %521 = vmatmul.mubr.f32.gmra.mrb[0].mxu0 %v261
  %v522 = vpop.f32.mrb[0].mxu0
  %v523 = vadd.f32 0.0, %v522
  %v524 = vpop.f32.mrb[0].mxu0
  %525 = vmatprep.mubr.f32.mxu0 0.0
  %526 = vmatmul.mubr.f32.gmra.mrb[0].mxu0 %v264
  %v527 = vpop.f32.mrb[0].mxu0
  %v528 = vadd.f32 0.0, %v527
  %v529 = vpop.f32.mrb[0].mxu0
  %530 = vdwg.mxu0
  %v531 = vmul.f32 %v518, %v53
  %v532 = vmul.f32 %v523, %v54
  %v533 = vmul.f32 %v528, %v55
  %v534 = vld [vmem:[%s6] sm:$0xff]
  %v535 = vld [vmem:[%s6 + $0x8] sm:$0xff]
  %v536 = vld [vmem:[%s6 + $0x10] sm:$0xff]
  %v537 = vld [vmem:[%s6 + $0x18] sm:$0xff]
  %v538 = vld [vmem:[%s6 + $0x20] sm:$0xff]
  %v539 = vld [vmem:[%s6 + $0x28] sm:$0xff]
  %v540 = vld [vmem:[%s6 + $0x30] sm:$0xff]
  %v541 = vld [vmem:[%s6 + $0x38] sm:$0xff]
  %542 = vmatprep.subr.mxu0 0.0
  %543 = vmatpush1.msra.mxu0 %v534
  %544 = vmatprep.subr.mxu0 0.0
  %545 = vmatpush1.msra.mxu0 %v535
  %546 = vmatprep.subr.mxu0 0.0
  %547 = vmatpush1.msra.mxu0 %v536
  %548 = vmatprep.subr.mxu0 0.0
  %549 = vmatpush1.msra.mxu0 %v537
  %550 = vmatprep.subr.mxu0 0.0
  %551 = vmatpush1.msra.mxu0 %v538
  %552 = vmatprep.subr.mxu0 0.0
  %553 = vmatpush1.msra.mxu0 %v539
  %554 = vmatprep.subr.mxu0 0.0
  %555 = vmatpush1.msra.mxu0 %v540
  %556 = vmatprep.subr.mxu0 0.0
  %557 = vmatpush1.msra.mxu0 %v541
  %558 = vmatprep.subr.mxu0 0.0
  %559 = vmatpush1.msra.mxu0 0.0
  %560 = vmatprep.subr.mxu0 0.0
  %561 = vmatpush1.msra.mxu0 0.0
  %562 = vmatprep.subr.mxu0 0.0
  %563 = vmatpush1.msra.mxu0 0.0
  %564 = vmatprep.subr.mxu0 0.0
  %565 = vmatpush1.msra.mxu0 0.0
  %566 = vmatprep.subr.mxu0 0.0
  %567 = vmatpush1.msra.mxu0 0.0
  %568 = vmatprep.subr.mxu0 0.0
  %569 = vmatpush1.msra.mxu0 0.0
  %570 = vmatprep.subr.mxu0 0.0
  %571 = vmatpush1.msra.mxu0 0.0
  %572 = vmatprep.subr.mxu0 0.0
  %573 = vmatpush1.msra.mxu0 0.0
  %574 = vmatprep.subr.mxu0 0.0
  %575 = vmatpush1.msra.mxu0 0.0
  %576 = vmatprep.subr.mxu0 0.0
  %577 = vmatpush1.msra.mxu0 0.0
  %578 = vmatprep.subr.mxu0 0.0
  %579 = vmatpush1.msra.mxu0 0.0
  %580 = vmatprep.subr.mxu0 0.0
  %581 = vmatpush1.msra.mxu0 0.0
  %582 = vmatprep.subr.mxu0 0.0
  %583 = vmatpush1.msra.mxu0 0.0
  %584 = vmatprep.subr.mxu0 0.0
  %585 = vmatpush1.msra.mxu0 0.0
  %586 = vmatprep.subr.mxu0 0.0
  %587 = vmatpush1.msra.mxu0 0.0
  %588 = vmatprep.subr.mxu0 0.0
  %589 = vmatpush1.msra.mxu0 0.0
  %590 = vmatprep.subr.mxu0 0.0
  %591 = vmatpush1.msra.mxu0 0.0
  %592 = vmatprep.subr.mxu0 0.0
  %593 = vmatpush1.msra.mxu0 0.0
  %594 = vmatprep.subr.mxu0 0.0
  %595 = vmatpush1.msra.mxu0 0.0
  %596 = vmatprep.subr.mxu0 0.0
  %597 = vmatpush1.msra.mxu0 0.0
  %598 = vmatprep.subr.mxu0 0.0
  %599 = vmatpush1.msra.mxu0 0.0
  %600 = vmatprep.subr.mxu0 0.0
  %601 = vmatpush1.msra.mxu0 0.0
  %602 = vmatprep.subr.mxu0 0.0
  %603 = vmatpush1.msra.mxu0 0.0
  %604 = vmatprep.subr.mxu0 0.0
  %605 = vmatpush1.msra.mxu0 0.0
  %606 = vmatprep.mubr.f32.mxu0 0.0
  %607 = vmatmul.mubr.f32.gmra.mrb[0].mxu0 %v258
  %v608 = vpop.f32.mrb[0].mxu0
  %v609 = vadd.f32 0.0, %v608
  %v610 = vpop.f32.mrb[0].mxu0
  %611 = vmatprep.mubr.f32.mxu0 0.0
  %612 = vmatmul.mubr.f32.gmra.mrb[0].mxu0 %v261
  %v613 = vpop.f32.mrb[0].mxu0
  %v614 = vadd.f32 0.0, %v613
  %v615 = vpop.f32.mrb[0].mxu0
  %616 = vmatprep.mubr.f32.mxu0 0.0
  %617 = vmatmul.mubr.f32.gmra.mrb[0].mxu0 %v264
  %v618 = vpop.f32.mrb[0].mxu0
  %v619 = vadd.f32 0.0, %v618
  %v620 = vpop.f32.mrb[0].mxu0
  %621 = vdwg.mxu0
  %v622 = vmul.f32 %v609, %v56
  %v623 = vmul.f32 %v614, %v57
  %v624 = vmul.f32 %v619, %v58
  %v625 = vadd.f32 %v531, %v622
  %v626 = vadd.f32 %v532, %v623
  %v627 = vadd.f32 %v533, %v624
  %v628 = vld [vmem:[%s7] sm:$0xff]
  %v629 = vld [vmem:[%s7 + $0x8] sm:$0xff]
  %v630 = vld [vmem:[%s7 + $0x10] sm:$0xff]
  %v631 = vld [vmem:[%s7 + $0x18] sm:$0xff]
  %v632 = vld [vmem:[%s7 + $0x20] sm:$0xff]
  %v633 = vld [vmem:[%s7 + $0x28] sm:$0xff]
  %v634 = vld [vmem:[%s7 + $0x30] sm:$0xff]
  %v635 = vld [vmem:[%s7 + $0x38] sm:$0xff]
  %636 = vmatprep.subr.mxu0 0.0
  %637 = vmatpush1.msra.mxu0 %v628
  %638 = vmatprep.subr.mxu0 0.0
  %639 = vmatpush1.msra.mxu0 %v629
  %640 = vmatprep.subr.mxu0 0.0
  %641 = vmatpush1.msra.mxu0 %v630
  %642 = vmatprep.subr.mxu0 0.0
  %643 = vmatpush1.msra.mxu0 %v631
  %644 = vmatprep.subr.mxu0 0.0
  %645 = vmatpush1.msra.mxu0 %v632
  %646 = vmatprep.subr.mxu0 0.0
  %647 = vmatpush1.msra.mxu0 %v633
  %648 = vmatprep.subr.mxu0 0.0
  %649 = vmatpush1.msra.mxu0 %v634
  %650 = vmatprep.subr.mxu0 0.0
  %651 = vmatpush1.msra.mxu0 %v635
  %652 = vmatprep.subr.mxu0 0.0
  %653 = vmatpush1.msra.mxu0 0.0
  %654 = vmatprep.subr.mxu0 0.0
  %655 = vmatpush1.msra.mxu0 0.0
  %656 = vmatprep.subr.mxu0 0.0
  %657 = vmatpush1.msra.mxu0 0.0
  %658 = vmatprep.subr.mxu0 0.0
  %659 = vmatpush1.msra.mxu0 0.0
  %660 = vmatprep.subr.mxu0 0.0
  %661 = vmatpush1.msra.mxu0 0.0
  %662 = vmatprep.subr.mxu0 0.0
  %663 = vmatpush1.msra.mxu0 0.0
  %664 = vmatprep.subr.mxu0 0.0
  %665 = vmatpush1.msra.mxu0 0.0
  %666 = vmatprep.subr.mxu0 0.0
  %667 = vmatpush1.msra.mxu0 0.0
  %668 = vmatprep.subr.mxu0 0.0
  %669 = vmatpush1.msra.mxu0 0.0
  %670 = vmatprep.subr.mxu0 0.0
  %671 = vmatpush1.msra.mxu0 0.0
  %672 = vmatprep.subr.mxu0 0.0
  %673 = vmatpush1.msra.mxu0 0.0
  %674 = vmatprep.subr.mxu0 0.0
  %675 = vmatpush1.msra.mxu0 0.0
  %676 = vmatprep.subr.mxu0 0.0
  %677 = vmatpush1.msra.mxu0 0.0
  %678 = vmatprep.subr.mxu0 0.0
  %679 = vmatpush1.msra.mxu0 0.0
  %680 = vmatprep.subr.mxu0 0.0
  %681 = vmatpush1.msra.mxu0 0.0
  %682 = vmatprep.subr.mxu0 0.0
  %683 = vmatpush1.msra.mxu0 0.0
  %684 = vmatprep.subr.mxu0 0.0
  %685 = vmatpush1.msra.mxu0 0.0
  %686 = vmatprep.subr.mxu0 0.0
  %687 = vmatpush1.msra.mxu0 0.0
  %688 = vmatprep.subr.mxu0 0.0
  %689 = vmatpush1.msra.mxu0 0.0
  %690 = vmatprep.subr.mxu0 0.0
  %691 = vmatpush1.msra.mxu0 0.0
  %692 = vmatprep.subr.mxu0 0.0
  %693 = vmatpush1.msra.mxu0 0.0
  %694 = vmatprep.subr.mxu0 0.0
  %695 = vmatpush1.msra.mxu0 0.0
  %696 = vmatprep.subr.mxu0 0.0
  %697 = vmatpush1.msra.mxu0 0.0
  %698 = vmatprep.subr.mxu0 0.0
  %699 = vmatpush1.msra.mxu0 0.0
  %700 = vmatprep.mubr.f32.mxu0 0.0
  %701 = vmatmul.mubr.f32.gmra.mrb[0].mxu0 %v258
  %v702 = vpop.f32.mrb[0].mxu0
  %v703 = vadd.f32 0.0, %v702
  %v704 = vpop.f32.mrb[0].mxu0
  %705 = vmatprep.mubr.f32.mxu0 0.0
  %706 = vmatmul.mubr.f32.gmra.mrb[0].mxu0 %v261
  %v707 = vpop.f32.mrb[0].mxu0
  %v708 = vadd.f32 0.0, %v707
  %v709 = vpop.f32.mrb[0].mxu0
  %710 = vmatprep.mubr.f32.mxu0 0.0
  %711 = vmatmul.mubr.f32.gmra.mrb[0].mxu0 %v264
  %v712 = vpop.f32.mrb[0].mxu0
  %v713 = vadd.f32 0.0, %v712
  %v714 = vpop.f32.mrb[0].mxu0
  %715 = vdwg.mxu0
  %v717 = vlaneseq
  %v718 = vshrl.u32 %v717, 7
  %v719 = vsub.s32 0, %v718
  %v720 = vrot.slane %v62, %v719
  %v722 = vmul.f32 %v625, %v720
  %v723 = vmul.f32 %v626, %v720
  %v724 = vmul.f32 %v627, %v720
  %v726 = vsel %vm99, %v440, 0
  %v729 = vsel %vm99, %v441, 0
  %v732 = vsel %vm99, %v442, 0
  %v735 = vsel %vm99, %v722, 0
  %v738 = vsel %vm99, %v723, 0
  %v741 = vsel %vm99, %v724, 0
  %743 = vmatprep.subr.mxu0 0.0
  %744 = vmatpush1.xpose.msra.mxu0 %v735
  %745 = vmatprep.subr.mxu0 0.0
  %746 = vmatpush1.xpose.msra.mxu0 %v738
  %747 = vmatprep.subr.mxu0 0.0
  %748 = vmatpush1.xpose.msra.mxu0 %v741
  %749 = vmatprep.subr.mxu0 0.0
  %750 = vmatpush1.xpose.msra.mxu0 0.0
  %751 = vmatprep.subr.mxu0 0.0
  %752 = vmatpush1.xpose.msra.mxu0 0.0
  %753 = vmatprep.subr.mxu0 0.0
  %754 = vmatpush1.xpose.msra.mxu0 0.0
  %755 = vmatprep.subr.mxu0 0.0
  %756 = vmatpush1.xpose.msra.mxu0 0.0
  %757 = vmatprep.subr.mxu0 0.0
  %758 = vmatpush1.xpose.msra.mxu0 0.0
  %759 = vmatprep.subr.mxu0 0.0
  %760 = vmatpush1.xpose.msra.mxu0 0.0
  %761 = vmatprep.subr.mxu0 0.0
  %762 = vmatpush1.xpose.msra.mxu0 0.0
  %763 = vmatprep.subr.mxu0 0.0
  %764 = vmatpush1.xpose.msra.mxu0 0.0
  %765 = vmatprep.subr.mxu0 0.0
  %766 = vmatpush1.xpose.msra.mxu0 0.0
  %767 = vmatprep.subr.mxu0 0.0
  %768 = vmatpush1.xpose.msra.mxu0 0.0
  %769 = vmatprep.subr.mxu0 0.0
  %770 = vmatpush1.xpose.msra.mxu0 0.0
  %771 = vmatprep.subr.mxu0 0.0
  %772 = vmatpush1.xpose.msra.mxu0 0.0
  %773 = vmatprep.subr.mxu0 0.0
  %774 = vmatpush1.xpose.msra.mxu0 0.0
  %775 = vmatprep.subr.mxu0 0.0
  %776 = vmatpush1.xpose.msra.mxu0 0.0
  %777 = vmatprep.subr.mxu0 0.0
  %778 = vmatpush1.xpose.msra.mxu0 0.0
  %779 = vmatprep.subr.mxu0 0.0
  %780 = vmatpush1.xpose.msra.mxu0 0.0
  %781 = vmatprep.subr.mxu0 0.0
  %782 = vmatpush1.xpose.msra.mxu0 0.0
  %783 = vmatprep.subr.mxu0 0.0
  %784 = vmatpush1.xpose.msra.mxu0 0.0
  %785 = vmatprep.subr.mxu0 0.0
  %786 = vmatpush1.xpose.msra.mxu0 0.0
  %787 = vmatprep.subr.mxu0 0.0
  %788 = vmatpush1.xpose.msra.mxu0 0.0
  %789 = vmatprep.subr.mxu0 0.0
  %790 = vmatpush1.xpose.msra.mxu0 0.0
  %791 = vmatprep.subr.mxu0 0.0
  %792 = vmatpush1.xpose.msra.mxu0 0.0
  %793 = vmatprep.subr.mxu0 0.0
  %794 = vmatpush1.xpose.msra.mxu0 0.0
  %795 = vmatprep.subr.mxu0 0.0
  %796 = vmatpush1.xpose.msra.mxu0 0.0
  %797 = vmatprep.subr.mxu0 0.0
  %798 = vmatpush1.xpose.msra.mxu0 0.0
  %799 = vmatprep.subr.mxu0 0.0
  %800 = vmatpush1.xpose.msra.mxu0 0.0
  %801 = vmatprep.subr.mxu0 0.0
  %802 = vmatpush1.xpose.msra.mxu0 0.0
  %803 = vmatprep.subr.mxu0 0.0
  %804 = vmatpush1.xpose.msra.mxu0 0.0
  %805 = vmatprep.subr.mxu0 0.0
  %806 = vmatpush1.xpose.msra.mxu0 0.0
  %807 = vmatprep.mubr.f32.mxu0 0.0
  %808 = vmatmul.mubr.f32.gmra.mrb[0].mxu0 %v726
  %v809 = vpop.f32.mrb[0].mxu0
  %v810 = vadd.f32 %v59, %v809
  %v811 = vpop.f32.mrb[0].mxu0
  %812 = vmatprep.mubr.f32.mxu0 0.0
  %813 = vmatmul.mubr.f32.gmra.mrb[0].mxu0 %v729
  %v814 = vpop.f32.mrb[0].mxu0
  %v815 = vadd.f32 %v60, %v814
  %v816 = vpop.f32.mrb[0].mxu0
  %817 = vmatprep.mubr.f32.mxu0 0.0
  %818 = vmatmul.mubr.f32.gmra.mrb[0].mxu0 %v732
  %v819 = vpop.f32.mrb[0].mxu0
  %v820 = vadd.f32 %v61, %v819
  %v821 = vpop.f32.mrb[0].mxu0
  %822 = vdwg.mxu0
  %vm823 = vcmask 179200
  %v824 = vsel %vm823, %v810, -inf
  %825 = vmax.xlane.f32.xlu0 %v824
  %v826 = vpop.xlane.xlu0 %825
  %v827 = vsel %vm823, %v815, -inf
  %828 = vmax.xlane.f32.xlu0 %v827
  %v829 = vpop.xlane.xlu0 %828
  %vm830 = vcmask 177152
  %v831 = vsel %vm830, %v820, -inf
  %832 = vmax.xlane.f32.xlu0 %v831
  %v833 = vpop.xlane.xlu0 %832
  %v834 = vsub.f32 %v810, %v826
  %v835 = vsub.f32 %v815, %v829
  %v836 = vsub.f32 %v820, %v833
  %v837 = vmul.f32 %v834, 1.442695
  %v838 = vpow.pop %v837
  %v839 = vmul.f32 %v835, 1.442695
  %v840 = vpow.pop %v839
  %v841 = vmul.f32 %v836, 1.442695
  %v842 = vpow.pop %v841
  %v843 = vsel %vm823, %v838, 0.0
  %844 = vadd.xlane.f32.xlu0 %v843
  %v845 = vpop.xlane.xlu0 %844
  %v846 = vsel %vm823, %v840, 0.0
  %847 = vadd.xlane.f32.xlu0 %v846
  %v848 = vpop.xlane.xlu0 %847
  %v849 = vsel %vm830, %v842, 0.0
  %850 = vadd.xlane.f32.xlu0 %v849
  %v851 = vpop.xlane.xlu0 %850
  %v852 = vrcp.pop %v845
  %v853 = vmul.f32 1.0, %v852
  %v854 = vrcp.pop %v848
  %v855 = vmul.f32 1.0, %v854
  %v856 = vrcp.pop %v851
  %v857 = vmul.f32 1.0, %v856
  %v858 = vmul.f32 %v838, %v853
  %v859 = vmul.f32 %v840, %v855
  %v860 = vmul.f32 %v842, %v857
  %v861 = vmul.f32 %v703, %v720
  %v862 = vmul.f32 %v708, %v720
  %v863 = vmul.f32 %v713, %v720
  %v865 = vlaneseq
  %v866 = vshrl.u32 %v865, 7
  %v867 = vsub.s32 0, %v866
  %v868 = vrot.slane %v64, %v867
  %v870 = vmul.f32 %v625, %v868
  %v871 = vmul.f32 %v626, %v868
  %v872 = vmul.f32 %v627, %v868
  %v874 = vsel %vm99, %v870, 0
  %v877 = vsel %vm99, %v871, 0
  %v880 = vsel %vm99, %v872, 0
  %882 = vmatprep.subr.mxu0 0.0
  %883 = vmatpush1.xpose.msra.mxu0 %v874
  %884 = vmatprep.subr.mxu0 0.0
  %885 = vmatpush1.xpose.msra.mxu0 %v877
  %886 = vmatprep.subr.mxu0 0.0
  %887 = vmatpush1.xpose.msra.mxu0 %v880
  %888 = vmatprep.subr.mxu0 0.0
  %889 = vmatpush1.xpose.msra.mxu0 0.0
  %890 = vmatprep.subr.mxu0 0.0
  %891 = vmatpush1.xpose.msra.mxu0 0.0
  %892 = vmatprep.subr.mxu0 0.0
  %893 = vmatpush1.xpose.msra.mxu0 0.0
  %894 = vmatprep.subr.mxu0 0.0
  %895 = vmatpush1.xpose.msra.mxu0 0.0
  %896 = vmatprep.subr.mxu0 0.0
  %897 = vmatpush1.xpose.msra.mxu0 0.0
  %898 = vmatprep.subr.mxu0 0.0
  %899 = vmatpush1.xpose.msra.mxu0 0.0
  %900 = vmatprep.subr.mxu0 0.0
  %901 = vmatpush1.xpose.msra.mxu0 0.0
  %902 = vmatprep.subr.mxu0 0.0
  %903 = vmatpush1.xpose.msra.mxu0 0.0
  %904 = vmatprep.subr.mxu0 0.0
  %905 = vmatpush1.xpose.msra.mxu0 0.0
  %906 = vmatprep.subr.mxu0 0.0
  %907 = vmatpush1.xpose.msra.mxu0 0.0
  %908 = vmatprep.subr.mxu0 0.0
  %909 = vmatpush1.xpose.msra.mxu0 0.0
  %910 = vmatprep.subr.mxu0 0.0
  %911 = vmatpush1.xpose.msra.mxu0 0.0
  %912 = vmatprep.subr.mxu0 0.0
  %913 = vmatpush1.xpose.msra.mxu0 0.0
  %914 = vmatprep.subr.mxu0 0.0
  %915 = vmatpush1.xpose.msra.mxu0 0.0
  %916 = vmatprep.subr.mxu0 0.0
  %917 = vmatpush1.xpose.msra.mxu0 0.0
  %918 = vmatprep.subr.mxu0 0.0
  %919 = vmatpush1.xpose.msra.mxu0 0.0
  %920 = vmatprep.subr.mxu0 0.0
  %921 = vmatpush1.xpose.msra.mxu0 0.0
  %922 = vmatprep.subr.mxu0 0.0
  %923 = vmatpush1.xpose.msra.mxu0 0.0
  %924 = vmatprep.subr.mxu0 0.0
  %925 = vmatpush1.xpose.msra.mxu0 0.0
  %926 = vmatprep.subr.mxu0 0.0
  %927 = vmatpush1.xpose.msra.mxu0 0.0
  %928 = vmatprep.subr.mxu0 0.0
  %929 = vmatpush1.xpose.msra.mxu0 0.0
  %930 = vmatprep.subr.mxu0 0.0
  %931 = vmatpush1.xpose.msra.mxu0 0.0
  %932 = vmatprep.subr.mxu0 0.0
  %933 = vmatpush1.xpose.msra.mxu0 0.0
  %934 = vmatprep.subr.mxu0 0.0
  %935 = vmatpush1.xpose.msra.mxu0 0.0
  %936 = vmatprep.subr.mxu0 0.0
  %937 = vmatpush1.xpose.msra.mxu0 0.0
  %938 = vmatprep.subr.mxu0 0.0
  %939 = vmatpush1.xpose.msra.mxu0 0.0
  %940 = vmatprep.subr.mxu0 0.0
  %941 = vmatpush1.xpose.msra.mxu0 0.0
  %942 = vmatprep.subr.mxu0 0.0
  %943 = vmatpush1.xpose.msra.mxu0 0.0
  %944 = vmatprep.subr.mxu0 0.0
  %945 = vmatpush1.xpose.msra.mxu0 0.0
  %946 = vmatprep.mubr.f32.mxu0 0.0
  %947 = vmatmul.mubr.f32.gmra.mrb[0].mxu0 %v726
  %v948 = vpop.f32.mrb[0].mxu0
  %v949 = vadd.f32 %v59, %v948
  %v950 = vpop.f32.mrb[0].mxu0
  %951 = vmatprep.mubr.f32.mxu0 0.0
  %952 = vmatmul.mubr.f32.gmra.mrb[0].mxu0 %v729
  %v953 = vpop.f32.mrb[0].mxu0
  %v954 = vadd.f32 %v60, %v953
  %v955 = vpop.f32.mrb[0].mxu0
  %956 = vmatprep.mubr.f32.mxu0 0.0
  %957 = vmatmul.mubr.f32.gmra.mrb[0].mxu0 %v732
  %v958 = vpop.f32.mrb[0].mxu0
  %v959 = vadd.f32 %v61, %v958
  %v960 = vpop.f32.mrb[0].mxu0
  %961 = vdwg.mxu0
  %v962 = vsel %vm823, %v949, -inf
  %963 = vmax.xlane.f32.xlu0 %v962
  %v964 = vpop.xlane.xlu0 %963
  %v965 = vsel %vm823, %v954, -inf
  %966 = vmax.xlane.f32.xlu0 %v965
  %v967 = vpop.xlane.xlu0 %966
  %v968 = vsel %vm830, %v959, -inf
  %969 = vmax.xlane.f32.xlu0 %v968
  %v970 = vpop.xlane.xlu0 %969
  %v971 = vsub.f32 %v949, %v964
  %v972 = vsub.f32 %v954, %v967
  %v973 = vsub.f32 %v959, %v970
  %v974 = vmul.f32 %v971, 1.442695
  %v975 = vpow.pop %v974
  %v976 = vmul.f32 %v972, 1.442695
  %v977 = vpow.pop %v976
  %v978 = vmul.f32 %v973, 1.442695
  %v979 = vpow.pop %v978
  %v980 = vsel %vm823, %v975, 0.0
  %981 = vadd.xlane.f32.xlu0 %v980
  %v982 = vpop.xlane.xlu0 %981
  %v983 = vsel %vm823, %v977, 0.0
  %984 = vadd.xlane.f32.xlu0 %v983
  %v985 = vpop.xlane.xlu0 %984
  %v986 = vsel %vm830, %v979, 0.0
  %987 = vadd.xlane.f32.xlu0 %v986
  %v988 = vpop.xlane.xlu0 %987
  %v989 = vrcp.pop %v982
  %v990 = vmul.f32 1.0, %v989
  %v991 = vrcp.pop %v985
  %v992 = vmul.f32 1.0, %v991
  %v993 = vrcp.pop %v988
  %v994 = vmul.f32 1.0, %v993
  %v995 = vmul.f32 %v975, %v990
  %v996 = vmul.f32 %v977, %v992
  %v997 = vmul.f32 %v979, %v994
  %v998 = vmul.f32 %v703, %v868
  %v999 = vmul.f32 %v708, %v868
  %v1000 = vmul.f32 %v713, %v868
  %v1002 = vsel %vm823, %v995, 0
  %v1005 = vsel %vm823, %v996, 0
  %v1008 = vsel %vm823, %v997, 0
  %vm1010 = vcmask 1045504
  %v1012 = vsel %vm1010, %v1000, 0
  %1014 = vmatprep.subr.mxu0 0.0
  %1015 = vmatpush1.msra.mxu0 %v998
  %1016 = vmatprep.subr.mxu0 0.0
  %1017 = vmatpush1.msra.mxu0 %v999
  %1018 = vmatprep.subr.mxu0 0.0
  %1019 = vmatpush1.msra.mxu0 %v1012
  %1020 = vmatprep.subr.mxu0 0.0
  %1021 = vmatpush1.msra.mxu0 0.0
  %1022 = vmatprep.subr.mxu0 0.0
  %1023 = vmatpush1.msra.mxu0 0.0
  %1024 = vmatprep.subr.mxu0 0.0
  %1025 = vmatpush1.msra.mxu0 0.0
  %1026 = vmatprep.subr.mxu0 0.0
  %1027 = vmatpush1.msra.mxu0 0.0
  %1028 = vmatprep.subr.mxu0 0.0
  %1029 = vmatpush1.msra.mxu0 0.0
  %1030 = vmatprep.subr.mxu0 0.0
  %1031 = vmatpush1.msra.mxu0 0.0
  %1032 = vmatprep.subr.mxu0 0.0
  %1033 = vmatpush1.msra.mxu0 0.0
  %1034 = vmatprep.subr.mxu0 0.0
  %1035 = vmatpush1.msra.mxu0 0.0
  %1036 = vmatprep.subr.mxu0 0.0
  %1037 = vmatpush1.msra.mxu0 0.0
  %1038 = vmatprep.subr.mxu0 0.0
  %1039 = vmatpush1.msra.mxu0 0.0
  %1040 = vmatprep.subr.mxu0 0.0
  %1041 = vmatpush1.msra.mxu0 0.0
  %1042 = vmatprep.subr.mxu0 0.0
  %1043 = vmatpush1.msra.mxu0 0.0
  %1044 = vmatprep.subr.mxu0 0.0
  %1045 = vmatpush1.msra.mxu0 0.0
  %1046 = vmatprep.subr.mxu0 0.0
  %1047 = vmatpush1.msra.mxu0 0.0
  %1048 = vmatprep.subr.mxu0 0.0
  %1049 = vmatpush1.msra.mxu0 0.0
  %1050 = vmatprep.subr.mxu0 0.0
  %1051 = vmatpush1.msra.mxu0 0.0
  %1052 = vmatprep.subr.mxu0 0.0
  %1053 = vmatpush1.msra.mxu0 0.0
  %1054 = vmatprep.subr.mxu0 0.0
  %1055 = vmatpush1.msra.mxu0 0.0
  %1056 = vmatprep.subr.mxu0 0.0
  %1057 = vmatpush1.msra.mxu0 0.0
  %1058 = vmatprep.subr.mxu0 0.0
  %1059 = vmatpush1.msra.mxu0 0.0
  %1060 = vmatprep.subr.mxu0 0.0
  %1061 = vmatpush1.msra.mxu0 0.0
  %1062 = vmatprep.subr.mxu0 0.0
  %1063 = vmatpush1.msra.mxu0 0.0
  %1064 = vmatprep.subr.mxu0 0.0
  %1065 = vmatpush1.msra.mxu0 0.0
  %1066 = vmatprep.subr.mxu0 0.0
  %1067 = vmatpush1.msra.mxu0 0.0
  %1068 = vmatprep.subr.mxu0 0.0
  %1069 = vmatpush1.msra.mxu0 0.0
  %1070 = vmatprep.subr.mxu0 0.0
  %1071 = vmatpush1.msra.mxu0 0.0
  %1072 = vmatprep.subr.mxu0 0.0
  %1073 = vmatpush1.msra.mxu0 0.0
  %1074 = vmatprep.subr.mxu0 0.0
  %1075 = vmatpush1.msra.mxu0 0.0
  %1076 = vmatprep.subr.mxu0 0.0
  %1077 = vmatpush1.msra.mxu0 0.0
  %1078 = vmatprep.mubr.f32.mxu0 0.0
  %1079 = vmatmul.mubr.f32.gmra.mrb[0].mxu0 %v1002
  %v1080 = vpop.f32.mrb[0].mxu0
  %v1081 = vadd.f32 0.0, %v1080
  %v1082 = vpop.f32.mrb[0].mxu0
  %1083 = vmatprep.mubr.f32.mxu0 0.0
  %1084 = vmatmul.mubr.f32.gmra.mrb[0].mxu0 %v1005
  %v1085 = vpop.f32.mrb[0].mxu0
  %v1086 = vadd.f32 0.0, %v1085
  %v1087 = vpop.f32.mrb[0].mxu0
  %1088 = vmatprep.mubr.f32.mxu0 0.0
  %1089 = vmatmul.mubr.f32.gmra.mrb[0].mxu0 %v1008
  %v1090 = vpop.f32.mrb[0].mxu0
  %v1091 = vadd.f32 0.0, %v1090
  %v1092 = vpop.f32.mrb[0].mxu0
  %1093 = vdwg.mxu0
  %v1095 = vsel %vm823, %v858, 0
  %v1098 = vsel %vm823, %v859, 0
  %v1101 = vsel %vm823, %v860, 0
  %v1104 = vsel %vm1010, %v863, 0
  %1106 = vmatprep.subr.mxu0 0.0
  %1107 = vmatpush1.msra.mxu0 %v861
  %1108 = vmatprep.subr.mxu0 0.0
  %1109 = vmatpush1.msra.mxu0 %v862
  %1110 = vmatprep.subr.mxu0 0.0
  %1111 = vmatpush1.msra.mxu0 %v1104
  %1112 = vmatprep.subr.mxu0 0.0
  %1113 = vmatpush1.msra.mxu0 0.0
  %1114 = vmatprep.subr.mxu0 0.0
  %1115 = vmatpush1.msra.mxu0 0.0
  %1116 = vmatprep.subr.mxu0 0.0
  %1117 = vmatpush1.msra.mxu0 0.0
  %1118 = vmatprep.subr.mxu0 0.0
  %1119 = vmatpush1.msra.mxu0 0.0
  %1120 = vmatprep.subr.mxu0 0.0
  %1121 = vmatpush1.msra.mxu0 0.0
  %1122 = vmatprep.subr.mxu0 0.0
  %1123 = vmatpush1.msra.mxu0 0.0
  %1124 = vmatprep.subr.mxu0 0.0
  %1125 = vmatpush1.msra.mxu0 0.0
  %1126 = vmatprep.subr.mxu0 0.0
  %1127 = vmatpush1.msra.mxu0 0.0
  %1128 = vmatprep.subr.mxu0 0.0
  %1129 = vmatpush1.msra.mxu0 0.0
  %1130 = vmatprep.subr.mxu0 0.0
  %1131 = vmatpush1.msra.mxu0 0.0
  %1132 = vmatprep.subr.mxu0 0.0
  %1133 = vmatpush1.msra.mxu0 0.0
  %1134 = vmatprep.subr.mxu0 0.0
  %1135 = vmatpush1.msra.mxu0 0.0
  %1136 = vmatprep.subr.mxu0 0.0
  %1137 = vmatpush1.msra.mxu0 0.0
  %1138 = vmatprep.subr.mxu0 0.0
  %1139 = vmatpush1.msra.mxu0 0.0
  %1140 = vmatprep.subr.mxu0 0.0
  %1141 = vmatpush1.msra.mxu0 0.0
  %1142 = vmatprep.subr.mxu0 0.0
  %1143 = vmatpush1.msra.mxu0 0.0
  %1144 = vmatprep.subr.mxu0 0.0
  %1145 = vmatpush1.msra.mxu0 0.0
  %1146 = vmatprep.subr.mxu0 0.0
  %1147 = vmatpush1.msra.mxu0 0.0
  %1148 = vmatprep.subr.mxu0 0.0
  %1149 = vmatpush1.msra.mxu0 0.0
  %1150 = vmatprep.subr.mxu0 0.0
  %1151 = vmatpush1.msra.mxu0 0.0
  %1152 = vmatprep.subr.mxu0 0.0
  %1153 = vmatpush1.msra.mxu0 0.0
  %1154 = vmatprep.subr.mxu0 0.0
  %1155 = vmatpush1.msra.mxu0 0.0
  %1156 = vmatprep.subr.mxu0 0.0
  %1157 = vmatpush1.msra.mxu0 0.0
  %1158 = vmatprep.subr.mxu0 0.0
  %1159 = vmatpush1.msra.mxu0 0.0
  %1160 = vmatprep.subr.mxu0 0.0
  %1161 = vmatpush1.msra.mxu0 0.0
  %1162 = vmatprep.subr.mxu0 0.0
  %1163 = vmatpush1.msra.mxu0 0.0
  %1164 = vmatprep.subr.mxu0 0.0
  %1165 = vmatpush1.msra.mxu0 0.0
  %1166 = vmatprep.subr.mxu0 0.0
  %1167 = vmatpush1.msra.mxu0 0.0
  %1168 = vmatprep.subr.mxu0 0.0
  %1169 = vmatpush1.msra.mxu0 0.0
  %1170 = vmatprep.mubr.f32.mxu0 0.0
  %1171 = vmatmul.mubr.f32.gmra.mrb[0].mxu0 %v1095
  %v1172 = vpop.f32.mrb[0].mxu0
  %v1173 = vadd.f32 %v1081, %v1172
  %v1174 = vpop.f32.mrb[0].mxu0
  %1175 = vmatprep.mubr.f32.mxu0 0.0
  %1176 = vmatmul.mubr.f32.gmra.mrb[0].mxu0 %v1098
  %v1177 = vpop.f32.mrb[0].mxu0
  %v1178 = vadd.f32 %v1086, %v1177
  %v1179 = vpop.f32.mrb[0].mxu0
  %1180 = vmatprep.mubr.f32.mxu0 0.0
  %1181 = vmatmul.mubr.f32.gmra.mrb[0].mxu0 %v1101
  %v1182 = vpop.f32.mrb[0].mxu0
  %v1183 = vadd.f32 %v1091, %v1182
  %v1184 = vpop.f32.mrb[0].mxu0
  %1185 = vdwg.mxu0
  %v1187 = vlaneseq
  %v1188 = vshrl.u32 %v1187, 7
  %v1189 = vsub.s32 0, %v1188
  %v1190 = vrot.slane %v66, %v1189
  %v1192 = vmul.f32 %v625, %v1190
  %v1193 = vmul.f32 %v626, %v1190
  %v1194 = vmul.f32 %v627, %v1190
  %v1196 = vsel %vm99, %v1192, 0
  %v1199 = vsel %vm99, %v1193, 0
  %v1202 = vsel %vm99, %v1194, 0
  %1204 = vmatprep.subr.mxu0 0.0
  %1205 = vmatpush1.xpose.msra.mxu0 %v1196
  %1206 = vmatprep.subr.mxu0 0.0
  %1207 = vmatpush1.xpose.msra.mxu0 %v1199
  %1208 = vmatprep.subr.mxu0 0.0
  %1209 = vmatpush1.xpose.msra.mxu0 %v1202
  %1210 = vmatprep.subr.mxu0 0.0
  %1211 = vmatpush1.xpose.msra.mxu0 0.0
  %1212 = vmatprep.subr.mxu0 0.0
  %1213 = vmatpush1.xpose.msra.mxu0 0.0
  %1214 = vmatprep.subr.mxu0 0.0
  %1215 = vmatpush1.xpose.msra.mxu0 0.0
  %1216 = vmatprep.subr.mxu0 0.0
  %1217 = vmatpush1.xpose.msra.mxu0 0.0
  %1218 = vmatprep.subr.mxu0 0.0
  %1219 = vmatpush1.xpose.msra.mxu0 0.0
  %1220 = vmatprep.subr.mxu0 0.0
  %1221 = vmatpush1.xpose.msra.mxu0 0.0
  %1222 = vmatprep.subr.mxu0 0.0
  %1223 = vmatpush1.xpose.msra.mxu0 0.0
  %1224 = vmatprep.subr.mxu0 0.0
  %1225 = vmatpush1.xpose.msra.mxu0 0.0
  %1226 = vmatprep.subr.mxu0 0.0
  %1227 = vmatpush1.xpose.msra.mxu0 0.0
  %1228 = vmatprep.subr.mxu0 0.0
  %1229 = vmatpush1.xpose.msra.mxu0 0.0
  %1230 = vmatprep.subr.mxu0 0.0
  %1231 = vmatpush1.xpose.msra.mxu0 0.0
  %1232 = vmatprep.subr.mxu0 0.0
  %1233 = vmatpush1.xpose.msra.mxu0 0.0
  %1234 = vmatprep.subr.mxu0 0.0
  %1235 = vmatpush1.xpose.msra.mxu0 0.0
  %1236 = vmatprep.subr.mxu0 0.0
  %1237 = vmatpush1.xpose.msra.mxu0 0.0
  %1238 = vmatprep.subr.mxu0 0.0
  %1239 = vmatpush1.xpose.msra.mxu0 0.0
  %1240 = vmatprep.subr.mxu0 0.0
  %1241 = vmatpush1.xpose.msra.mxu0 0.0
  %1242 = vmatprep.subr.mxu0 0.0
  %1243 = vmatpush1.xpose.msra.mxu0 0.0
  %1244 = vmatprep.subr.mxu0 0.0
  %1245 = vmatpush1.xpose.msra.mxu0 0.0
  %1246 = vmatprep.subr.mxu0 0.0
  %1247 = vmatpush1.xpose.msra.mxu0 0.0
  %1248 = vmatprep.subr.mxu0 0.0
  %1249 = vmatpush1.xpose.msra.mxu0 0.0
  %1250 = vmatprep.subr.mxu0 0.0
  %1251 = vmatpush1.xpose.msra.mxu0 0.0
  %1252 = vmatprep.subr.mxu0 0.0
  %1253 = vmatpush1.xpose.msra.mxu0 0.0
  %1254 = vmatprep.subr.mxu0 0.0
  %1255 = vmatpush1.xpose.msra.mxu0 0.0
  %1256 = vmatprep.subr.mxu0 0.0
  %1257 = vmatpush1.xpose.msra.mxu0 0.0
  %1258 = vmatprep.subr.mxu0 0.0
  %1259 = vmatpush1.xpose.msra.mxu0 0.0
  %1260 = vmatprep.subr.mxu0 0.0
  %1261 = vmatpush1.xpose.msra.mxu0 0.0
  %1262 = vmatprep.subr.mxu0 0.0
  %1263 = vmatpush1.xpose.msra.mxu0 0.0
  %1264 = vmatprep.subr.mxu0 0.0
  %1265 = vmatpush1.xpose.msra.mxu0 0.0
  %1266 = vmatprep.subr.mxu0 0.0
  %1267 = vmatpush1.xpose.msra.mxu0 0.0
  %1268 = vmatprep.mubr.f32.mxu0 0.0
  %1269 = vmatmul.mubr.f32.gmra.mrb[0].mxu0 %v726
  %v1270 = vpop.f32.mrb[0].mxu0
  %v1271 = vadd.f32 %v59, %v1270
  %v1272 = vpop.f32.mrb[0].mxu0
  %1273 = vmatprep.mubr.f32.mxu0 0.0
  %1274 = vmatmul.mubr.f32.gmra.mrb[0].mxu0 %v729
  %v1275 = vpop.f32.mrb[0].mxu0
  %v1276 = vadd.f32 %v60, %v1275
  %v1277 = vpop.f32.mrb[0].mxu0
  %1278 = vmatprep.mubr.f32.mxu0 0.0
  %1279 = vmatmul.mubr.f32.gmra.mrb[0].mxu0 %v732
  %v1280 = vpop.f32.mrb[0].mxu0
  %v1281 = vadd.f32 %v61, %v1280
  %v1282 = vpop.f32.mrb[0].mxu0
  %1283 = vdwg.mxu0
  %v1284 = vsel %vm823, %v1271, -inf
  %1285 = vmax.xlane.f32.xlu0 %v1284
  %v1286 = vpop.xlane.xlu0 %1285
  %v1287 = vsel %vm823, %v1276, -inf
  %1288 = vmax.xlane.f32.xlu0 %v1287
  %v1289 = vpop.xlane.xlu0 %1288
  %v1290 = vsel %vm830, %v1281, -inf
  %1291 = vmax.xlane.f32.xlu0 %v1290
  %v1292 = vpop.xlane.xlu0 %1291
  %v1293 = vsub.f32 %v1271, %v1286
  %v1294 = vsub.f32 %v1276, %v1289
  %v1295 = vsub.f32 %v1281, %v1292
  %v1296 = vmul.f32 %v1293, 1.442695
  %v1297 = vpow.pop %v1296
  %v1298 = vmul.f32 %v1294, 1.442695
  %v1299 = vpow.pop %v1298
  %v1300 = vmul.f32 %v1295, 1.442695
  %v1301 = vpow.pop %v1300
  %v1302 = vsel %vm823, %v1297, 0.0
  %1303 = vadd.xlane.f32.xlu0 %v1302
  %v1304 = vpop.xlane.xlu0 %1303
  %v1305 = vsel %vm823, %v1299, 0.0
  %1306 = vadd.xlane.f32.xlu0 %v1305
  %v1307 = vpop.xlane.xlu0 %1306
  %v1308 = vsel %vm830, %v1301, 0.0
  %1309 = vadd.xlane.f32.xlu0 %v1308
  %v1310 = vpop.xlane.xlu0 %1309
  %v1311 = vrcp.pop %v1304
  %v1312 = vmul.f32 1.0, %v1311
  %v1313 = vrcp.pop %v1307
  %v1314 = vmul.f32 1.0, %v1313
  %v1315 = vrcp.pop %v1310
  %v1316 = vmul.f32 1.0, %v1315
  %v1317 = vmul.f32 %v1297, %v1312
  %v1318 = vmul.f32 %v1299, %v1314
  %v1319 = vmul.f32 %v1301, %v1316
  %v1320 = vmul.f32 %v703, %v1190
  %v1321 = vmul.f32 %v708, %v1190
  %v1322 = vmul.f32 %v713, %v1190
  %v1324 = vsel %vm823, %v1317, 0
  %v1327 = vsel %vm823, %v1318, 0
  %v1330 = vsel %vm823, %v1319, 0
  %v1333 = vsel %vm1010, %v1322, 0
  %1335 = vmatprep.subr.mxu0 0.0
  %1336 = vmatpush1.msra.mxu0 %v1320
  %1337 = vmatprep.subr.mxu0 0.0
  %1338 = vmatpush1.msra.mxu0 %v1321
  %1339 = vmatprep.subr.mxu0 0.0
  %1340 = vmatpush1.msra.mxu0 %v1333
  %1341 = vmatprep.subr.mxu0 0.0
  %1342 = vmatpush1.msra.mxu0 0.0
  %1343 = vmatprep.subr.mxu0 0.0
  %1344 = vmatpush1.msra.mxu0 0.0
  %1345 = vmatprep.subr.mxu0 0.0
  %1346 = vmatpush1.msra.mxu0 0.0
  %1347 = vmatprep.subr.mxu0 0.0
  %1348 = vmatpush1.msra.mxu0 0.0
  %1349 = vmatprep.subr.mxu0 0.0
  %1350 = vmatpush1.msra.mxu0 0.0
  %1351 = vmatprep.subr.mxu0 0.0
  %1352 = vmatpush1.msra.mxu0 0.0
  %1353 = vmatprep.subr.mxu0 0.0
  %1354 = vmatpush1.msra.mxu0 0.0
  %1355 = vmatprep.subr.mxu0 0.0
  %1356 = vmatpush1.msra.mxu0 0.0
  %1357 = vmatprep.subr.mxu0 0.0
  %1358 = vmatpush1.msra.mxu0 0.0
  %1359 = vmatprep.subr.mxu0 0.0
  %1360 = vmatpush1.msra.mxu0 0.0
  %1361 = vmatprep.subr.mxu0 0.0
  %1362 = vmatpush1.msra.mxu0 0.0
  %1363 = vmatprep.subr.mxu0 0.0
  %1364 = vmatpush1.msra.mxu0 0.0
  %1365 = vmatprep.subr.mxu0 0.0
  %1366 = vmatpush1.msra.mxu0 0.0
  %1367 = vmatprep.subr.mxu0 0.0
  %1368 = vmatpush1.msra.mxu0 0.0
  %1369 = vmatprep.subr.mxu0 0.0
  %1370 = vmatpush1.msra.mxu0 0.0
  %1371 = vmatprep.subr.mxu0 0.0
  %1372 = vmatpush1.msra.mxu0 0.0
  %1373 = vmatprep.subr.mxu0 0.0
  %1374 = vmatpush1.msra.mxu0 0.0
  %1375 = vmatprep.subr.mxu0 0.0
  %1376 = vmatpush1.msra.mxu0 0.0
  %1377 = vmatprep.subr.mxu0 0.0
  %1378 = vmatpush1.msra.mxu0 0.0
  %1379 = vmatprep.subr.mxu0 0.0
  %1380 = vmatpush1.msra.mxu0 0.0
  %1381 = vmatprep.subr.mxu0 0.0
  %1382 = vmatpush1.msra.mxu0 0.0
  %1383 = vmatprep.subr.mxu0 0.0
  %1384 = vmatpush1.msra.mxu0 0.0
  %1385 = vmatprep.subr.mxu0 0.0
  %1386 = vmatpush1.msra.mxu0 0.0
  %1387 = vmatprep.subr.mxu0 0.0
  %1388 = vmatpush1.msra.mxu0 0.0
  %1389 = vmatprep.subr.mxu0 0.0
  %1390 = vmatpush1.msra.mxu0 0.0
  %1391 = vmatprep.subr.mxu0 0.0
  %1392 = vmatpush1.msra.mxu0 0.0
  %1393 = vmatprep.subr.mxu0 0.0
  %1394 = vmatpush1.msra.mxu0 0.0
  %1395 = vmatprep.subr.mxu0 0.0
  %1396 = vmatpush1.msra.mxu0 0.0
  %1397 = vmatprep.subr.mxu0 0.0
  %1398 = vmatpush1.msra.mxu0 0.0
  %1399 = vmatprep.mubr.f32.mxu0 0.0
  %1400 = vmatmul.mubr.f32.gmra.mrb[0].mxu0 %v1324
  %v1401 = vpop.f32.mrb[0].mxu0
  %v1402 = vadd.f32 0.0, %v1401
  %v1403 = vpop.f32.mrb[0].mxu0
  %1404 = vmatprep.mubr.f32.mxu0 0.0
  %1405 = vmatmul.mubr.f32.gmra.mrb[0].mxu0 %v1327
  %v1406 = vpop.f32.mrb[0].mxu0
  %v1407 = vadd.f32 0.0, %v1406
  %v1408 = vpop.f32.mrb[0].mxu0
  %1409 = vmatprep.mubr.f32.mxu0 0.0
  %1410 = vmatmul.mubr.f32.gmra.mrb[0].mxu0 %v1330
  %v1411 = vpop.f32.mrb[0].mxu0
  %v1412 = vadd.f32 0.0, %v1411
  %v1413 = vpop.f32.mrb[0].mxu0
  %1414 = vdwg.mxu0
  %v1415 = vadd.f32 %v1173, %v1402
  %v1416 = vadd.f32 %v1178, %v1407
  %v1417 = vadd.f32 %v1183, %v1412
  %v1419 = vlaneseq
  %v1420 = vshrl.u32 %v1419, 7
  %v1421 = vsub.s32 0, %v1420
  %v1422 = vrot.slane %v68, %v1421
  %v1424 = vmul.f32 %v625, %v1422
  %v1425 = vmul.f32 %v626, %v1422
  %v1426 = vmul.f32 %v627, %v1422
  %v1428 = vsel %vm99, %v1424, 0
  %v1431 = vsel %vm99, %v1425, 0
  %v1434 = vsel %vm99, %v1426, 0
  %1436 = vmatprep.subr.mxu0 0.0
  %1437 = vmatpush1.xpose.msra.mxu0 %v1428
  %1438 = vmatprep.subr.mxu0 0.0
  %1439 = vmatpush1.xpose.msra.mxu0 %v1431
  %1440 = vmatprep.subr.mxu0 0.0
  %1441 = vmatpush1.xpose.msra.mxu0 %v1434
  %1442 = vmatprep.subr.mxu0 0.0
  %1443 = vmatpush1.xpose.msra.mxu0 0.0
  %1444 = vmatprep.subr.mxu0 0.0
  %1445 = vmatpush1.xpose.msra.mxu0 0.0
  %1446 = vmatprep.subr.mxu0 0.0
  %1447 = vmatpush1.xpose.msra.mxu0 0.0
  %1448 = vmatprep.subr.mxu0 0.0
  %1449 = vmatpush1.xpose.msra.mxu0 0.0
  %1450 = vmatprep.subr.mxu0 0.0
  %1451 = vmatpush1.xpose.msra.mxu0 0.0
  %1452 = vmatprep.subr.mxu0 0.0
  %1453 = vmatpush1.xpose.msra.mxu0 0.0
  %1454 = vmatprep.subr.mxu0 0.0
  %1455 = vmatpush1.xpose.msra.mxu0 0.0
  %1456 = vmatprep.subr.mxu0 0.0
  %1457 = vmatpush1.xpose.msra.mxu0 0.0
  %1458 = vmatprep.subr.mxu0 0.0
  %1459 = vmatpush1.xpose.msra.mxu0 0.0
  %1460 = vmatprep.subr.mxu0 0.0
  %1461 = vmatpush1.xpose.msra.mxu0 0.0
  %1462 = vmatprep.subr.mxu0 0.0
  %1463 = vmatpush1.xpose.msra.mxu0 0.0
  %1464 = vmatprep.subr.mxu0 0.0
  %1465 = vmatpush1.xpose.msra.mxu0 0.0
  %1466 = vmatprep.subr.mxu0 0.0
  %1467 = vmatpush1.xpose.msra.mxu0 0.0
  %1468 = vmatprep.subr.mxu0 0.0
  %1469 = vmatpush1.xpose.msra.mxu0 0.0
  %1470 = vmatprep.subr.mxu0 0.0
  %1471 = vmatpush1.xpose.msra.mxu0 0.0
  %1472 = vmatprep.subr.mxu0 0.0
  %1473 = vmatpush1.xpose.msra.mxu0 0.0
  %1474 = vmatprep.subr.mxu0 0.0
  %1475 = vmatpush1.xpose.msra.mxu0 0.0
  %1476 = vmatprep.subr.mxu0 0.0
  %1477 = vmatpush1.xpose.msra.mxu0 0.0
  %1478 = vmatprep.subr.mxu0 0.0
  %1479 = vmatpush1.xpose.msra.mxu0 0.0
  %1480 = vmatprep.subr.mxu0 0.0
  %1481 = vmatpush1.xpose.msra.mxu0 0.0
  %1482 = vmatprep.subr.mxu0 0.0
  %1483 = vmatpush1.xpose.msra.mxu0 0.0
  %1484 = vmatprep.subr.mxu0 0.0
  %1485 = vmatpush1.xpose.msra.mxu0 0.0
  %1486 = vmatprep.subr.mxu0 0.0
  %1487 = vmatpush1.xpose.msra.mxu0 0.0
  %1488 = vmatprep.subr.mxu0 0.0
  %1489 = vmatpush1.xpose.msra.mxu0 0.0
  %1490 = vmatprep.subr.mxu0 0.0
  %1491 = vmatpush1.xpose.msra.mxu0 0.0
  %1492 = vmatprep.subr.mxu0 0.0
  %1493 = vmatpush1.xpose.msra.mxu0 0.0
  %1494 = vmatprep.subr.mxu0 0.0
  %1495 = vmatpush1.xpose.msra.mxu0 0.0
  %1496 = vmatprep.subr.mxu0 0.0
  %1497 = vmatpush1.xpose.msra.mxu0 0.0
  %1498 = vmatprep.subr.mxu0 0.0
  %1499 = vmatpush1.xpose.msra.mxu0 0.0
  %1500 = vmatprep.mubr.f32.mxu0 0.0
  %1501 = vmatmul.mubr.f32.gmra.mrb[0].mxu0 %v726
  %v1502 = vpop.f32.mrb[0].mxu0
  %v1503 = vadd.f32 %v59, %v1502
  %v1504 = vpop.f32.mrb[0].mxu0
  %1505 = vmatprep.mubr.f32.mxu0 0.0
  %1506 = vmatmul.mubr.f32.gmra.mrb[0].mxu0 %v729
  %v1507 = vpop.f32.mrb[0].mxu0
  %v1508 = vadd.f32 %v60, %v1507
  %v1509 = vpop.f32.mrb[0].mxu0
  %1510 = vmatprep.mubr.f32.mxu0 0.0
  %1511 = vmatmul.mubr.f32.gmra.mrb[0].mxu0 %v732
  %v1512 = vpop.f32.mrb[0].mxu0
  %v1513 = vadd.f32 %v61, %v1512
  %v1514 = vpop.f32.mrb[0].mxu0
  %1515 = vdwg.mxu0
  %v1516 = vsel %vm823, %v1503, -inf
  %1517 = vmax.xlane.f32.xlu0 %v1516
  %v1518 = vpop.xlane.xlu0 %1517
  %v1519 = vsel %vm823, %v1508, -inf
  %1520 = vmax.xlane.f32.xlu0 %v1519
  %v1521 = vpop.xlane.xlu0 %1520
  %v1522 = vsel %vm830, %v1513, -inf
  %1523 = vmax.xlane.f32.xlu0 %v1522
  %v1524 = vpop.xlane.xlu0 %1523
  %v1525 = vsub.f32 %v1503, %v1518
  %v1526 = vsub.f32 %v1508, %v1521
  %v1527 = vsub.f32 %v1513, %v1524
  %v1528 = vmul.f32 %v1525, 1.442695
  %v1529 = vpow.pop %v1528
  %v1530 = vmul.f32 %v1526, 1.442695
  %v1531 = vpow.pop %v1530
  %v1532 = vmul.f32 %v1527, 1.442695
  %v1533 = vpow.pop %v1532
  %v1534 = vsel %vm823, %v1529, 0.0
  %1535 = vadd.xlane.f32.xlu0 %v1534
  %v1536 = vpop.xlane.xlu0 %1535
  %v1537 = vsel %vm823, %v1531, 0.0
  %1538 = vadd.xlane.f32.xlu0 %v1537
  %v1539 = vpop.xlane.xlu0 %1538
  %v1540 = vsel %vm830, %v1533, 0.0
  %1541 = vadd.xlane.f32.xlu0 %v1540
  %v1542 = vpop.xlane.xlu0 %1541
  %v1543 = vrcp.pop %v1536
  %v1544 = vmul.f32 1.0, %v1543
  %v1545 = vrcp.pop %v1539
  %v1546 = vmul.f32 1.0, %v1545
  %v1547 = vrcp.pop %v1542
  %v1548 = vmul.f32 1.0, %v1547
  %v1549 = vmul.f32 %v1529, %v1544
  %v1550 = vmul.f32 %v1531, %v1546
  %v1551 = vmul.f32 %v1533, %v1548
  %v1552 = vmul.f32 %v703, %v1422
  %v1553 = vmul.f32 %v708, %v1422
  %v1554 = vmul.f32 %v713, %v1422
  %v1556 = vsel %vm823, %v1549, 0
  %v1559 = vsel %vm823, %v1550, 0
  %v1562 = vsel %vm823, %v1551, 0
  %v1565 = vsel %vm1010, %v1554, 0
  %1567 = vmatprep.subr.mxu0 0.0
  %1568 = vmatpush1.msra.mxu0 %v1552
  %1569 = vmatprep.subr.mxu0 0.0
  %1570 = vmatpush1.msra.mxu0 %v1553
  %1571 = vmatprep.subr.mxu0 0.0
  %1572 = vmatpush1.msra.mxu0 %v1565
  %1573 = vmatprep.subr.mxu0 0.0
  %1574 = vmatpush1.msra.mxu0 0.0
  %1575 = vmatprep.subr.mxu0 0.0
  %1576 = vmatpush1.msra.mxu0 0.0
  %1577 = vmatprep.subr.mxu0 0.0
  %1578 = vmatpush1.msra.mxu0 0.0
  %1579 = vmatprep.subr.mxu0 0.0
  %1580 = vmatpush1.msra.mxu0 0.0
  %1581 = vmatprep.subr.mxu0 0.0
  %1582 = vmatpush1.msra.mxu0 0.0
  %1583 = vmatprep.subr.mxu0 0.0
  %1584 = vmatpush1.msra.mxu0 0.0
  %1585 = vmatprep.subr.mxu0 0.0
  %1586 = vmatpush1.msra.mxu0 0.0
  %1587 = vmatprep.subr.mxu0 0.0
  %1588 = vmatpush1.msra.mxu0 0.0
  %1589 = vmatprep.subr.mxu0 0.0
  %1590 = vmatpush1.msra.mxu0 0.0
  %1591 = vmatprep.subr.mxu0 0.0
  %1592 = vmatpush1.msra.mxu0 0.0
  %1593 = vmatprep.subr.mxu0 0.0
  %1594 = vmatpush1.msra.mxu0 0.0
  %1595 = vmatprep.subr.mxu0 0.0
  %1596 = vmatpush1.msra.mxu0 0.0
  %1597 = vmatprep.subr.mxu0 0.0
  %1598 = vmatpush1.msra.mxu0 0.0
  %1599 = vmatprep.subr.mxu0 0.0
  %1600 = vmatpush1.msra.mxu0 0.0
  %1601 = vmatprep.subr.mxu0 0.0
  %1602 = vmatpush1.msra.mxu0 0.0
  %1603 = vmatprep.subr.mxu0 0.0
  %1604 = vmatpush1.msra.mxu0 0.0
  %1605 = vmatprep.subr.mxu0 0.0
  %1606 = vmatpush1.msra.mxu0 0.0
  %1607 = vmatprep.subr.mxu0 0.0
  %1608 = vmatpush1.msra.mxu0 0.0
  %1609 = vmatprep.subr.mxu0 0.0
  %1610 = vmatpush1.msra.mxu0 0.0
  %1611 = vmatprep.subr.mxu0 0.0
  %1612 = vmatpush1.msra.mxu0 0.0
  %1613 = vmatprep.subr.mxu0 0.0
  %1614 = vmatpush1.msra.mxu0 0.0
  %1615 = vmatprep.subr.mxu0 0.0
  %1616 = vmatpush1.msra.mxu0 0.0
  %1617 = vmatprep.subr.mxu0 0.0
  %1618 = vmatpush1.msra.mxu0 0.0
  %1619 = vmatprep.subr.mxu0 0.0
  %1620 = vmatpush1.msra.mxu0 0.0
  %1621 = vmatprep.subr.mxu0 0.0
  %1622 = vmatpush1.msra.mxu0 0.0
  %1623 = vmatprep.subr.mxu0 0.0
  %1624 = vmatpush1.msra.mxu0 0.0
  %1625 = vmatprep.subr.mxu0 0.0
  %1626 = vmatpush1.msra.mxu0 0.0
  %1627 = vmatprep.subr.mxu0 0.0
  %1628 = vmatpush1.msra.mxu0 0.0
  %1629 = vmatprep.subr.mxu0 0.0
  %1630 = vmatpush1.msra.mxu0 0.0
  %1631 = vmatprep.mubr.f32.mxu0 0.0
  %1632 = vmatmul.mubr.f32.gmra.mrb[0].mxu0 %v1556
  %v1633 = vpop.f32.mrb[0].mxu0
  %v1634 = vadd.f32 0.0, %v1633
  %v1635 = vpop.f32.mrb[0].mxu0
  %1636 = vmatprep.mubr.f32.mxu0 0.0
  %1637 = vmatmul.mubr.f32.gmra.mrb[0].mxu0 %v1559
  %v1638 = vpop.f32.mrb[0].mxu0
  %v1639 = vadd.f32 0.0, %v1638
  %v1640 = vpop.f32.mrb[0].mxu0
  %1641 = vmatprep.mubr.f32.mxu0 0.0
  %1642 = vmatmul.mubr.f32.gmra.mrb[0].mxu0 %v1562
  %v1643 = vpop.f32.mrb[0].mxu0
  %v1644 = vadd.f32 0.0, %v1643
  %v1645 = vpop.f32.mrb[0].mxu0
  %1646 = vdwg.mxu0
  %v1647 = vadd.f32 %v1415, %v1634
  %v1648 = vadd.f32 %v1416, %v1639
  %v1649 = vadd.f32 %v1417, %v1644
  %v1650 = vld [vmem:[%s8] sm:$0xff]
  %v1651 = vld [vmem:[%s8 + $0x8] sm:$0xff]
  %v1652 = vld [vmem:[%s8 + $0x10] sm:$0xff]
  %v1653 = vld [vmem:[%s8 + $0x18] sm:$0xff]
  %v1654 = vld [vmem:[%s8 + $0x20] sm:$0xff]
  %v1655 = vld [vmem:[%s8 + $0x28] sm:$0xff]
  %v1656 = vld [vmem:[%s8 + $0x30] sm:$0xff]
  %v1657 = vld [vmem:[%s8 + $0x38] sm:$0xff]
  %v1659 = vsel %vm99, %v1647, 0
  %v1662 = vsel %vm99, %v1648, 0
  %v1665 = vsel %vm99, %v1649, 0
  %1667 = vmatprep.subr.mxu0 0.0
  %1668 = vmatpush1.msra.mxu0 %v1650
  %1669 = vmatprep.subr.mxu0 0.0
  %1670 = vmatpush1.msra.mxu0 %v1651
  %1671 = vmatprep.subr.mxu0 0.0
  %1672 = vmatpush1.msra.mxu0 %v1652
  %1673 = vmatprep.subr.mxu0 0.0
  %1674 = vmatpush1.msra.mxu0 %v1653
  %1675 = vmatprep.subr.mxu0 0.0
  %1676 = vmatpush1.msra.mxu0 %v1654
  %1677 = vmatprep.subr.mxu0 0.0
  %1678 = vmatpush1.msra.mxu0 %v1655
  %1679 = vmatprep.subr.mxu0 0.0
  %1680 = vmatpush1.msra.mxu0 %v1656
  %1681 = vmatprep.subr.mxu0 0.0
  %1682 = vmatpush1.msra.mxu0 %v1657
  %1683 = vmatprep.subr.mxu0 0.0
  %1684 = vmatpush1.msra.mxu0 0.0
  %1685 = vmatprep.subr.mxu0 0.0
  %1686 = vmatpush1.msra.mxu0 0.0
  %1687 = vmatprep.subr.mxu0 0.0
  %1688 = vmatpush1.msra.mxu0 0.0
  %1689 = vmatprep.subr.mxu0 0.0
  %1690 = vmatpush1.msra.mxu0 0.0
  %1691 = vmatprep.subr.mxu0 0.0
  %1692 = vmatpush1.msra.mxu0 0.0
  %1693 = vmatprep.subr.mxu0 0.0
  %1694 = vmatpush1.msra.mxu0 0.0
  %1695 = vmatprep.subr.mxu0 0.0
  %1696 = vmatpush1.msra.mxu0 0.0
  %1697 = vmatprep.subr.mxu0 0.0
  %1698 = vmatpush1.msra.mxu0 0.0
  %1699 = vmatprep.subr.mxu0 0.0
  %1700 = vmatpush1.msra.mxu0 0.0
  %1701 = vmatprep.subr.mxu0 0.0
  %1702 = vmatpush1.msra.mxu0 0.0
  %1703 = vmatprep.subr.mxu0 0.0
  %1704 = vmatpush1.msra.mxu0 0.0
  %1705 = vmatprep.subr.mxu0 0.0
  %1706 = vmatpush1.msra.mxu0 0.0
  %1707 = vmatprep.subr.mxu0 0.0
  %1708 = vmatpush1.msra.mxu0 0.0
  %1709 = vmatprep.subr.mxu0 0.0
  %1710 = vmatpush1.msra.mxu0 0.0
  %1711 = vmatprep.subr.mxu0 0.0
  %1712 = vmatpush1.msra.mxu0 0.0
  %1713 = vmatprep.subr.mxu0 0.0
  %1714 = vmatpush1.msra.mxu0 0.0
  %1715 = vmatprep.subr.mxu0 0.0
  %1716 = vmatpush1.msra.mxu0 0.0
  %1717 = vmatprep.subr.mxu0 0.0
  %1718 = vmatpush1.msra.mxu0 0.0
  %1719 = vmatprep.subr.mxu0 0.0
  %1720 = vmatpush1.msra.mxu0 0.0
  %1721 = vmatprep.subr.mxu0 0.0
  %1722 = vmatpush1.msra.mxu0 0.0
  %1723 = vmatprep.subr.mxu0 0.0
  %1724 = vmatpush1.msra.mxu0 0.0
  %1725 = vmatprep.subr.mxu0 0.0
  %1726 = vmatpush1.msra.mxu0 0.0
  %1727 = vmatprep.subr.mxu0 0.0
  %1728 = vmatpush1.msra.mxu0 0.0
  %1729 = vmatprep.subr.mxu0 0.0
  %1730 = vmatpush1.msra.mxu0 0.0
  %1731 = vmatprep.mubr.f32.mxu0 0.0
  %1732 = vmatmul.mubr.f32.gmra.mrb[0].mxu0 %v1659
  %v1733 = vpop.f32.mrb[0].mxu0
  %v1734 = vadd.f32 0.0, %v1733
  %v1735 = vpop.f32.mrb[0].mxu0
  %1736 = vmatprep.mubr.f32.mxu0 0.0
  %1737 = vmatmul.mubr.f32.gmra.mrb[0].mxu0 %v1662
  %v1738 = vpop.f32.mrb[0].mxu0
  %v1739 = vadd.f32 0.0, %v1738
  %v1740 = vpop.f32.mrb[0].mxu0
  %1741 = vmatprep.mubr.f32.mxu0 0.0
  %1742 = vmatmul.mubr.f32.gmra.mrb[0].mxu0 %v1665
  %v1743 = vpop.f32.mrb[0].mxu0
  %v1744 = vadd.f32 0.0, %v1743
  %v1745 = vpop.f32.mrb[0].mxu0
  %1746 = vdwg.mxu0
  %v1747 = vadd.f32 %v222, %v1734
  %v1748 = vadd.f32 %v223, %v1739
  %v1749 = vadd.f32 %v224, %v1744
  %v1750 = vmul.f32 %v1747, %v1747
  %v1751 = vmul.f32 %v1748, %v1748
  %v1752 = vmul.f32 %v1749, %v1749
  %v1753 = vsel %vm99, %v1750, 0.0
  %1754 = vadd.xlane.f32.xlu0 %v1753
  %v1755 = vpop.xlane.xlu0 %1754
  %v1756 = vsel %vm99, %v1751, 0.0
  %1757 = vadd.xlane.f32.xlu0 %v1756
  %v1758 = vpop.xlane.xlu0 %1757
  %v1759 = vsel %vm198, %v1752, 0.0
  %1760 = vadd.xlane.f32.xlu0 %v1759
  %v1761 = vpop.xlane.xlu0 %1760
  %v1762 = vmul.f32 %v1755, %v202
  %v1763 = vmul.f32 %v1758, %v202
  %v1764 = vmul.f32 %v1761, %v202
  %v1765 = vadd.f32 %v1762, 1e-05
  %v1766 = vadd.f32 %v1763, 1e-05
  %v1767 = vadd.f32 %v1764, 1e-05
  %v1768 = vrsqrt.pop %v1765
  %v1769 = vrsqrt.pop %v1766
  %v1770 = vrsqrt.pop %v1767
  %v1771 = vmul.f32 %v1747, %v1768
  %v1772 = vmul.f32 %v1748, %v1769
  %v1773 = vmul.f32 %v1749, %v1770
  %v1774 = vld [vmem:[%s9] sm:$0xff]
  %v1775 = vld [vmem:[%s9 + $0x8] sm:$0xff]
  %v1776 = vld [vmem:[%s9 + $0x10] sm:$0xff]
  %v1777 = vld [vmem:[%s9 + $0x18] sm:$0xff]
  %v1778 = vld [vmem:[%s9 + $0x20] sm:$0xff]
  %v1779 = vld [vmem:[%s9 + $0x28] sm:$0xff]
  %v1780 = vld [vmem:[%s9 + $0x30] sm:$0xff]
  %v1781 = vld [vmem:[%s9 + $0x38] sm:$0xff]
  %v1783 = vsel %vm99, %v1771, 0
  %v1786 = vsel %vm99, %v1772, 0
  %v1789 = vsel %vm99, %v1773, 0
  %1791 = vmatprep.subr.mxu0 0.0
  %1792 = vmatpush1.msra.mxu0 %v1774
  %1793 = vmatprep.subr.mxu0 0.0
  %1794 = vmatpush1.msra.mxu0 %v1775
  %1795 = vmatprep.subr.mxu0 0.0
  %1796 = vmatpush1.msra.mxu0 %v1776
  %1797 = vmatprep.subr.mxu0 0.0
  %1798 = vmatpush1.msra.mxu0 %v1777
  %1799 = vmatprep.subr.mxu0 0.0
  %1800 = vmatpush1.msra.mxu0 %v1778
  %1801 = vmatprep.subr.mxu0 0.0
  %1802 = vmatpush1.msra.mxu0 %v1779
  %1803 = vmatprep.subr.mxu0 0.0
  %1804 = vmatpush1.msra.mxu0 %v1780
  %1805 = vmatprep.subr.mxu0 0.0
  %1806 = vmatpush1.msra.mxu0 %v1781
  %1807 = vmatprep.subr.mxu0 0.0
  %1808 = vmatpush1.msra.mxu0 0.0
  %1809 = vmatprep.subr.mxu0 0.0
  %1810 = vmatpush1.msra.mxu0 0.0
  %1811 = vmatprep.subr.mxu0 0.0
  %1812 = vmatpush1.msra.mxu0 0.0
  %1813 = vmatprep.subr.mxu0 0.0
  %1814 = vmatpush1.msra.mxu0 0.0
  %1815 = vmatprep.subr.mxu0 0.0
  %1816 = vmatpush1.msra.mxu0 0.0
  %1817 = vmatprep.subr.mxu0 0.0
  %1818 = vmatpush1.msra.mxu0 0.0
  %1819 = vmatprep.subr.mxu0 0.0
  %1820 = vmatpush1.msra.mxu0 0.0
  %1821 = vmatprep.subr.mxu0 0.0
  %1822 = vmatpush1.msra.mxu0 0.0
  %1823 = vmatprep.subr.mxu0 0.0
  %1824 = vmatpush1.msra.mxu0 0.0
  %1825 = vmatprep.subr.mxu0 0.0
  %1826 = vmatpush1.msra.mxu0 0.0
  %1827 = vmatprep.subr.mxu0 0.0
  %1828 = vmatpush1.msra.mxu0 0.0
  %1829 = vmatprep.subr.mxu0 0.0
  %1830 = vmatpush1.msra.mxu0 0.0
  %1831 = vmatprep.subr.mxu0 0.0
  %1832 = vmatpush1.msra.mxu0 0.0
  %1833 = vmatprep.subr.mxu0 0.0
  %1834 = vmatpush1.msra.mxu0 0.0
  %1835 = vmatprep.subr.mxu0 0.0
  %1836 = vmatpush1.msra.mxu0 0.0
  %1837 = vmatprep.subr.mxu0 0.0
  %1838 = vmatpush1.msra.mxu0 0.0
  %1839 = vmatprep.subr.mxu0 0.0
  %1840 = vmatpush1.msra.mxu0 0.0
  %1841 = vmatprep.subr.mxu0 0.0
  %1842 = vmatpush1.msra.mxu0 0.0
  %1843 = vmatprep.subr.mxu0 0.0
  %1844 = vmatpush1.msra.mxu0 0.0
  %1845 = vmatprep.subr.mxu0 0.0
  %1846 = vmatpush1.msra.mxu0 0.0
  %1847 = vmatprep.subr.mxu0 0.0
  %1848 = vmatpush1.msra.mxu0 0.0
  %1849 = vmatprep.subr.mxu0 0.0
  %1850 = vmatpush1.msra.mxu0 0.0
  %1851 = vmatprep.subr.mxu0 0.0
  %1852 = vmatpush1.msra.mxu0 0.0
  %1853 = vmatprep.subr.mxu0 0.0
  %1854 = vmatpush1.msra.mxu0 0.0
  %1855 = vmatprep.mubr.f32.mxu0 0.0
  %1856 = vmatmul.mubr.f32.gmra.mrb[0].mxu0 %v1783
  %v1857 = vpop.f32.mrb[0].mxu0
  %v1858 = vadd.f32 0.0, %v1857
  %v1859 = vpop.f32.mrb[0].mxu0
  %1860 = vmatprep.mubr.f32.mxu0 0.0
  %1861 = vmatmul.mubr.f32.gmra.mrb[0].mxu0 %v1786
  %v1862 = vpop.f32.mrb[0].mxu0
  %v1863 = vadd.f32 0.0, %v1862
  %v1864 = vpop.f32.mrb[0].mxu0
  %1865 = vmatprep.mubr.f32.mxu0 0.0
  %1866 = vmatmul.mubr.f32.gmra.mrb[0].mxu0 %v1789
  %v1867 = vpop.f32.mrb[0].mxu0
  %v1868 = vadd.f32 0.0, %v1867
  %v1869 = vpop.f32.mrb[0].mxu0
  %1870 = vdwg.mxu0
  %v1871 = vld [vmem:[%s10] sm:$0xff]
  %v1872 = vld [vmem:[%s10 + $0x8] sm:$0xff]
  %v1873 = vld [vmem:[%s10 + $0x10] sm:$0xff]
  %v1874 = vld [vmem:[%s10 + $0x18] sm:$0xff]
  %v1875 = vld [vmem:[%s10 + $0x20] sm:$0xff]
  %v1876 = vld [vmem:[%s10 + $0x28] sm:$0xff]
  %v1877 = vld [vmem:[%s10 + $0x30] sm:$0xff]
  %v1878 = vld [vmem:[%s10 + $0x38] sm:$0xff]
  %1879 = vmatprep.subr.mxu0 0.0
  %1880 = vmatpush1.msra.mxu0 %v1871
  %1881 = vmatprep.subr.mxu0 0.0
  %1882 = vmatpush1.msra.mxu0 %v1872
  %1883 = vmatprep.subr.mxu0 0.0
  %1884 = vmatpush1.msra.mxu0 %v1873
  %1885 = vmatprep.subr.mxu0 0.0
  %1886 = vmatpush1.msra.mxu0 %v1874
  %1887 = vmatprep.subr.mxu0 0.0
  %1888 = vmatpush1.msra.mxu0 %v1875
  %1889 = vmatprep.subr.mxu0 0.0
  %1890 = vmatpush1.msra.mxu0 %v1876
  %1891 = vmatprep.subr.mxu0 0.0
  %1892 = vmatpush1.msra.mxu0 %v1877
  %1893 = vmatprep.subr.mxu0 0.0
  %1894 = vmatpush1.msra.mxu0 %v1878
  %1895 = vmatprep.subr.mxu0 0.0
  %1896 = vmatpush1.msra.mxu0 0.0
  %1897 = vmatprep.subr.mxu0 0.0
  %1898 = vmatpush1.msra.mxu0 0.0
  %1899 = vmatprep.subr.mxu0 0.0
  %1900 = vmatpush1.msra.mxu0 0.0
  %1901 = vmatprep.subr.mxu0 0.0
  %1902 = vmatpush1.msra.mxu0 0.0
  %1903 = vmatprep.subr.mxu0 0.0
  %1904 = vmatpush1.msra.mxu0 0.0
  %1905 = vmatprep.subr.mxu0 0.0
  %1906 = vmatpush1.msra.mxu0 0.0
  %1907 = vmatprep.subr.mxu0 0.0
  %1908 = vmatpush1.msra.mxu0 0.0
  %1909 = vmatprep.subr.mxu0 0.0
  %1910 = vmatpush1.msra.mxu0 0.0
  %1911 = vmatprep.subr.mxu0 0.0
  %1912 = vmatpush1.msra.mxu0 0.0
  %1913 = vmatprep.subr.mxu0 0.0
  %1914 = vmatpush1.msra.mxu0 0.0
  %1915 = vmatprep.subr.mxu0 0.0
  %1916 = vmatpush1.msra.mxu0 0.0
  %1917 = vmatprep.subr.mxu0 0.0
  %1918 = vmatpush1.msra.mxu0 0.0
  %1919 = vmatprep.subr.mxu0 0.0
  %1920 = vmatpush1.msra.mxu0 0.0
  %1921 = vmatprep.subr.mxu0 0.0
  %1922 = vmatpush1.msra.mxu0 0.0
  %1923 = vmatprep.subr.mxu0 0.0
  %1924 = vmatpush1.msra.mxu0 0.0
  %1925 = vmatprep.subr.mxu0 0.0
  %1926 = vmatpush1.msra.mxu0 0.0
  %1927 = vmatprep.subr.mxu0 0.0
  %1928 = vmatpush1.msra.mxu0 0.0
  %1929 = vmatprep.subr.mxu0 0.0
  %1930 = vmatpush1.msra.mxu0 0.0
  %1931 = vmatprep.subr.mxu0 0.0
  %1932 = vmatpush1.msra.mxu0 0.0
  %1933 = vmatprep.subr.mxu0 0.0
  %1934 = vmatpush1.msra.mxu0 0.0
  %1935 = vmatprep.subr.mxu0 0.0
  %1936 = vmatpush1.msra.mxu0 0.0
  %1937 = vmatprep.subr.mxu0 0.0
  %1938 = vmatpush1.msra.mxu0 0.0
  %1939 = vmatprep.subr.mxu0 0.0
  %1940 = vmatpush1.msra.mxu0 0.0
  %1941 = vmatprep.subr.mxu0 0.0
  %1942 = vmatpush1.msra.mxu0 0.0
  %1943 = vmatprep.mubr.f32.mxu0 0.0
  %1944 = vmatmul.mubr.f32.gmra.mrb[0].mxu0 %v1783
  %v1945 = vpop.f32.mrb[0].mxu0
  %v1946 = vadd.f32 0.0, %v1945
  %v1947 = vpop.f32.mrb[0].mxu0
  %1948 = vmatprep.mubr.f32.mxu0 0.0
  %1949 = vmatmul.mubr.f32.gmra.mrb[0].mxu0 %v1786
  %v1950 = vpop.f32.mrb[0].mxu0
  %v1951 = vadd.f32 0.0, %v1950
  %v1952 = vpop.f32.mrb[0].mxu0
  %1953 = vmatprep.mubr.f32.mxu0 0.0
  %1954 = vmatmul.mubr.f32.gmra.mrb[0].mxu0 %v1789
  %v1955 = vpop.f32.mrb[0].mxu0
  %v1956 = vadd.f32 0.0, %v1955
  %v1957 = vpop.f32.mrb[0].mxu0
  %1958 = vdwg.mxu0
  %v1959 = vxor.u32 %v1858, 2147483648
  %v1960 = vxor.u32 %v1863, 2147483648
  %v1961 = vxor.u32 %v1868, 2147483648
  %v1962 = vmul.f32 %v1959, 1.442695
  %v1963 = vpow.pop %v1962
  %v1964 = vmul.f32 %v1960, 1.442695
  %v1965 = vpow.pop %v1964
  %v1966 = vmul.f32 %v1961, 1.442695
  %v1967 = vpow.pop %v1966
  %v1968 = vadd.f32 %v1963, 1.0
  %v1969 = vadd.f32 %v1965, 1.0
  %v1970 = vadd.f32 %v1967, 1.0
  %v1971 = vrcp.pop %v1968
  %v1972 = vmul.f32 1.0, %v1971
  %v1973 = vrcp.pop %v1969
  %v1974 = vmul.f32 1.0, %v1973
  %v1975 = vrcp.pop %v1970
  %v1976 = vmul.f32 1.0, %v1975
  %v1977 = vmul.f32 %v1858, %v1972
  %v1978 = vmul.f32 %v1863, %v1974
  %v1979 = vmul.f32 %v1868, %v1976
  %v1980 = vmul.f32 %v1977, %v1946
  %v1981 = vmul.f32 %v1978, %v1951
  %v1982 = vmul.f32 %v1979, %v1956
  %v1983 = vld [vmem:[%s11] sm:$0xff]
  %v1984 = vld [vmem:[%s11 + $0x8] sm:$0xff]
  %v1985 = vld [vmem:[%s11 + $0x10] sm:$0xff]
  %v1986 = vld [vmem:[%s11 + $0x18] sm:$0xff]
  %v1987 = vld [vmem:[%s11 + $0x20] sm:$0xff]
  %v1988 = vld [vmem:[%s11 + $0x28] sm:$0xff]
  %v1989 = vld [vmem:[%s11 + $0x30] sm:$0xff]
  %v1990 = vld [vmem:[%s11 + $0x38] sm:$0xff]
  %v1991 = vld [vmem:[%s11 + $0x40] sm:$0xff]
  %v1992 = vld [vmem:[%s11 + $0x48] sm:$0xff]
  %v1993 = vld [vmem:[%s11 + $0x50] sm:$0xff]
  %v1994 = vld [vmem:[%s11 + $0x58] sm:$0xff]
  %v1995 = vld [vmem:[%s11 + $0x60] sm:$0xff]
  %v1996 = vld [vmem:[%s11 + $0x68] sm:$0xff]
  %v1997 = vld [vmem:[%s11 + $0x70] sm:$0xff]
  %v1998 = vld [vmem:[%s11 + $0x78] sm:$0xff]
  %1999 = vmatprep.subr.mxu0 0.0
  %2000 = vmatpush1.msra.mxu0 %v1983
  %2001 = vmatprep.subr.mxu0 0.0
  %2002 = vmatpush1.msra.mxu0 %v1984
  %2003 = vmatprep.subr.mxu0 0.0
  %2004 = vmatpush1.msra.mxu0 %v1985
  %2005 = vmatprep.subr.mxu0 0.0
  %2006 = vmatpush1.msra.mxu0 %v1986
  %2007 = vmatprep.subr.mxu0 0.0
  %2008 = vmatpush1.msra.mxu0 %v1987
  %2009 = vmatprep.subr.mxu0 0.0
  %2010 = vmatpush1.msra.mxu0 %v1988
  %2011 = vmatprep.subr.mxu0 0.0
  %2012 = vmatpush1.msra.mxu0 %v1989
  %2013 = vmatprep.subr.mxu0 0.0
  %2014 = vmatpush1.msra.mxu0 %v1990
  %2015 = vmatprep.subr.mxu0 0.0
  %2016 = vmatpush1.msra.mxu0 %v1991
  %2017 = vmatprep.subr.mxu0 0.0
  %2018 = vmatpush1.msra.mxu0 %v1992
  %2019 = vmatprep.subr.mxu0 0.0
  %2020 = vmatpush1.msra.mxu0 %v1993
  %2021 = vmatprep.subr.mxu0 0.0
  %2022 = vmatpush1.msra.mxu0 %v1994
  %2023 = vmatprep.subr.mxu0 0.0
  %2024 = vmatpush1.msra.mxu0 %v1995
  %2025 = vmatprep.subr.mxu0 0.0
  %2026 = vmatpush1.msra.mxu0 %v1996
  %2027 = vmatprep.subr.mxu0 0.0
  %2028 = vmatpush1.msra.mxu0 %v1997
  %2029 = vmatprep.subr.mxu0 0.0
  %2030 = vmatpush1.msra.mxu0 %v1998
  %2031 = vmatprep.subr.mxu0 0.0
  %2032 = vmatpush1.msra.mxu0 0.0
  %2033 = vmatprep.subr.mxu0 0.0
  %2034 = vmatpush1.msra.mxu0 0.0
  %2035 = vmatprep.subr.mxu0 0.0
  %2036 = vmatpush1.msra.mxu0 0.0
  %2037 = vmatprep.subr.mxu0 0.0
  %2038 = vmatpush1.msra.mxu0 0.0
  %2039 = vmatprep.subr.mxu0 0.0
  %2040 = vmatpush1.msra.mxu0 0.0
  %2041 = vmatprep.subr.mxu0 0.0
  %2042 = vmatpush1.msra.mxu0 0.0
  %2043 = vmatprep.subr.mxu0 0.0
  %2044 = vmatpush1.msra.mxu0 0.0
  %2045 = vmatprep.subr.mxu0 0.0
  %2046 = vmatpush1.msra.mxu0 0.0
  %2047 = vmatprep.subr.mxu0 0.0
  %2048 = vmatpush1.msra.mxu0 0.0
  %2049 = vmatprep.subr.mxu0 0.0
  %2050 = vmatpush1.msra.mxu0 0.0
  %2051 = vmatprep.subr.mxu0 0.0
  %2052 = vmatpush1.msra.mxu0 0.0
  %2053 = vmatprep.subr.mxu0 0.0
  %2054 = vmatpush1.msra.mxu0 0.0
  %2055 = vmatprep.subr.mxu0 0.0
  %2056 = vmatpush1.msra.mxu0 0.0
  %2057 = vmatprep.subr.mxu0 0.0
  %2058 = vmatpush1.msra.mxu0 0.0
  %2059 = vmatprep.subr.mxu0 0.0
  %2060 = vmatpush1.msra.mxu0 0.0
  %2061 = vmatprep.subr.mxu0 0.0
  %2062 = vmatpush1.msra.mxu0 0.0
  %2063 = vmatprep.mubr.f32.mxu0 0.0
  %2064 = vmatmul.mubr.f32.gmra.mrb[0].mxu0 %v1980
  %v2065 = vpop.f32.mrb[0].mxu0
  %v2066 = vadd.f32 0.0, %v2065
  %v2067 = vpop.f32.mrb[0].mxu0
  %2068 = vmatprep.mubr.f32.mxu0 0.0
  %2069 = vmatmul.mubr.f32.gmra.mrb[0].mxu0 %v1981
  %v2070 = vpop.f32.mrb[0].mxu0
  %v2071 = vadd.f32 0.0, %v2070
  %v2072 = vpop.f32.mrb[0].mxu0
  %2073 = vmatprep.mubr.f32.mxu0 0.0
  %2074 = vmatmul.mubr.f32.gmra.mrb[0].mxu0 %v1982
  %v2075 = vpop.f32.mrb[0].mxu0
  %v2076 = vadd.f32 0.0, %v2075
  %v2077 = vpop.f32.mrb[0].mxu0
  %2078 = vdwg.mxu0
  %v2079 = vadd.f32 %v1747, %v2066
  %v2080 = vadd.f32 %v1748, %v2071
  %v2081 = vadd.f32 %v1749, %v2076
  %v2082 = vmul.f32 %v2079, %v2079
  %v2083 = vmul.f32 %v2080, %v2080
  %v2084 = vmul.f32 %v2081, %v2081
  %v2085 = vsel %vm99, %v2082, 0.0
  %2086 = vadd.xlane.f32.xlu0 %v2085
  %v2087 = vpop.xlane.xlu0 %2086
  %v2088 = vsel %vm99, %v2083, 0.0
  %2089 = vadd.xlane.f32.xlu0 %v2088
  %v2090 = vpop.xlane.xlu0 %2089
  %v2091 = vsel %vm198, %v2084, 0.0
  %2092 = vadd.xlane.f32.xlu0 %v2091
  %v2093 = vpop.xlane.xlu0 %2092
  %v2094 = vmul.f32 %v2087, %v202
  %v2095 = vmul.f32 %v2090, %v202
  %v2096 = vmul.f32 %v2093, %v202
  %v2097 = vadd.f32 %v2094, 1e-05
  %v2098 = vadd.f32 %v2095, 1e-05
  %v2099 = vadd.f32 %v2096, 1e-05
  %v2100 = vrsqrt.pop %v2097
  %v2101 = vrsqrt.pop %v2098
  %v2102 = vrsqrt.pop %v2099
  %v2103 = vmul.f32 %v2079, %v2100
  %v2104 = vmul.f32 %v2080, %v2101
  %v2105 = vmul.f32 %v2081, %v2102
  %s2106 = scalar_lea.vmem %s3, 64
  %v2107 = vld [vmem:[%s2106] sm:$0xff]
  %v2108 = vld [vmem:[%s2106 + $0x8] sm:$0xff]
  %v2109 = vld [vmem:[%s2106 + $0x10] sm:$0xff]
  %v2110 = vld [vmem:[%s2106 + $0x18] sm:$0xff]
  %v2111 = vld [vmem:[%s2106 + $0x20] sm:$0xff]
  %v2112 = vld [vmem:[%s2106 + $0x28] sm:$0xff]
  %v2113 = vld [vmem:[%s2106 + $0x30] sm:$0xff]
  %v2114 = vld [vmem:[%s2106 + $0x38] sm:$0xff]
  %v2116 = vsel %vm99, %v2103, 0
  %v2119 = vsel %vm99, %v2104, 0
  %v2122 = vsel %vm99, %v2105, 0
  %2124 = vmatprep.subr.mxu0 0.0
  %2125 = vmatpush1.msra.mxu0 %v2107
  %2126 = vmatprep.subr.mxu0 0.0
  %2127 = vmatpush1.msra.mxu0 %v2108
  %2128 = vmatprep.subr.mxu0 0.0
  %2129 = vmatpush1.msra.mxu0 %v2109
  %2130 = vmatprep.subr.mxu0 0.0
  %2131 = vmatpush1.msra.mxu0 %v2110
  %2132 = vmatprep.subr.mxu0 0.0
  %2133 = vmatpush1.msra.mxu0 %v2111
  %2134 = vmatprep.subr.mxu0 0.0
  %2135 = vmatpush1.msra.mxu0 %v2112
  %2136 = vmatprep.subr.mxu0 0.0
  %2137 = vmatpush1.msra.mxu0 %v2113
  %2138 = vmatprep.subr.mxu0 0.0
  %2139 = vmatpush1.msra.mxu0 %v2114
  %2140 = vmatprep.subr.mxu0 0.0
  %2141 = vmatpush1.msra.mxu0 0.0
  %2142 = vmatprep.subr.mxu0 0.0
  %2143 = vmatpush1.msra.mxu0 0.0
  %2144 = vmatprep.subr.mxu0 0.0
  %2145 = vmatpush1.msra.mxu0 0.0
  %2146 = vmatprep.subr.mxu0 0.0
  %2147 = vmatpush1.msra.mxu0 0.0
  %2148 = vmatprep.subr.mxu0 0.0
  %2149 = vmatpush1.msra.mxu0 0.0
  %2150 = vmatprep.subr.mxu0 0.0
  %2151 = vmatpush1.msra.mxu0 0.0
  %2152 = vmatprep.subr.mxu0 0.0
  %2153 = vmatpush1.msra.mxu0 0.0
  %2154 = vmatprep.subr.mxu0 0.0
  %2155 = vmatpush1.msra.mxu0 0.0
  %2156 = vmatprep.subr.mxu0 0.0
  %2157 = vmatpush1.msra.mxu0 0.0
  %2158 = vmatprep.subr.mxu0 0.0
  %2159 = vmatpush1.msra.mxu0 0.0
  %2160 = vmatprep.subr.mxu0 0.0
  %2161 = vmatpush1.msra.mxu0 0.0
  %2162 = vmatprep.subr.mxu0 0.0
  %2163 = vmatpush1.msra.mxu0 0.0
  %2164 = vmatprep.subr.mxu0 0.0
  %2165 = vmatpush1.msra.mxu0 0.0
  %2166 = vmatprep.subr.mxu0 0.0
  %2167 = vmatpush1.msra.mxu0 0.0
  %2168 = vmatprep.subr.mxu0 0.0
  %2169 = vmatpush1.msra.mxu0 0.0
  %2170 = vmatprep.subr.mxu0 0.0
  %2171 = vmatpush1.msra.mxu0 0.0
  %2172 = vmatprep.subr.mxu0 0.0
  %2173 = vmatpush1.msra.mxu0 0.0
  %2174 = vmatprep.subr.mxu0 0.0
  %2175 = vmatpush1.msra.mxu0 0.0
  %2176 = vmatprep.subr.mxu0 0.0
  %2177 = vmatpush1.msra.mxu0 0.0
  %2178 = vmatprep.subr.mxu0 0.0
  %2179 = vmatpush1.msra.mxu0 0.0
  %2180 = vmatprep.subr.mxu0 0.0
  %2181 = vmatpush1.msra.mxu0 0.0
  %2182 = vmatprep.subr.mxu0 0.0
  %2183 = vmatpush1.msra.mxu0 0.0
  %2184 = vmatprep.subr.mxu0 0.0
  %2185 = vmatpush1.msra.mxu0 0.0
  %2186 = vmatprep.subr.mxu0 0.0
  %2187 = vmatpush1.msra.mxu0 0.0
  %2188 = vmatprep.mubr.f32.mxu0 0.0
  %2189 = vmatmul.mubr.f32.gmra.mrb[0].mxu0 %v2116
  %v2190 = vpop.f32.mrb[0].mxu0
  %v2191 = vadd.f32 0.0, %v2190
  %v2192 = vpop.f32.mrb[0].mxu0
  %2193 = vmatprep.mubr.f32.mxu0 0.0
  %2194 = vmatmul.mubr.f32.gmra.mrb[0].mxu0 %v2119
  %v2195 = vpop.f32.mrb[0].mxu0
  %v2196 = vadd.f32 0.0, %v2195
  %v2197 = vpop.f32.mrb[0].mxu0
  %2198 = vmatprep.mubr.f32.mxu0 0.0
  %2199 = vmatmul.mubr.f32.gmra.mrb[0].mxu0 %v2122
  %v2200 = vpop.f32.mrb[0].mxu0
  %v2201 = vadd.f32 0.0, %v2200
  %v2202 = vpop.f32.mrb[0].mxu0
  %2203 = vdwg.mxu0
  %v2204 = vmul.f32 %v2191, %v53
  %v2205 = vmul.f32 %v2196, %v54
  %v2206 = vmul.f32 %v2201, %v55
  %s2207 = scalar_lea.vmem %s4, 64
  %v2208 = vld [vmem:[%s2207] sm:$0xff]
  %v2209 = vld [vmem:[%s2207 + $0x8] sm:$0xff]
  %v2210 = vld [vmem:[%s2207 + $0x10] sm:$0xff]
  %v2211 = vld [vmem:[%s2207 + $0x18] sm:$0xff]
  %v2212 = vld [vmem:[%s2207 + $0x20] sm:$0xff]
  %v2213 = vld [vmem:[%s2207 + $0x28] sm:$0xff]
  %v2214 = vld [vmem:[%s2207 + $0x30] sm:$0xff]
  %v2215 = vld [vmem:[%s2207 + $0x38] sm:$0xff]
  %2216 = vmatprep.subr.mxu0 0.0
  %2217 = vmatpush1.msra.mxu0 %v2208
  %2218 = vmatprep.subr.mxu0 0.0
  %2219 = vmatpush1.msra.mxu0 %v2209
  %2220 = vmatprep.subr.mxu0 0.0
  %2221 = vmatpush1.msra.mxu0 %v2210
  %2222 = vmatprep.subr.mxu0 0.0
  %2223 = vmatpush1.msra.mxu0 %v2211
  %2224 = vmatprep.subr.mxu0 0.0
  %2225 = vmatpush1.msra.mxu0 %v2212
  %2226 = vmatprep.subr.mxu0 0.0
  %2227 = vmatpush1.msra.mxu0 %v2213
  %2228 = vmatprep.subr.mxu0 0.0
  %2229 = vmatpush1.msra.mxu0 %v2214
  %2230 = vmatprep.subr.mxu0 0.0
  %2231 = vmatpush1.msra.mxu0 %v2215
  %2232 = vmatprep.subr.mxu0 0.0
  %2233 = vmatpush1.msra.mxu0 0.0
  %2234 = vmatprep.subr.mxu0 0.0
  %2235 = vmatpush1.msra.mxu0 0.0
  %2236 = vmatprep.subr.mxu0 0.0
  %2237 = vmatpush1.msra.mxu0 0.0
  %2238 = vmatprep.subr.mxu0 0.0
  %2239 = vmatpush1.msra.mxu0 0.0
  %2240 = vmatprep.subr.mxu0 0.0
  %2241 = vmatpush1.msra.mxu0 0.0
  %2242 = vmatprep.subr.mxu0 0.0
  %2243 = vmatpush1.msra.mxu0 0.0
  %2244 = vmatprep.subr.mxu0 0.0
  %2245 = vmatpush1.msra.mxu0 0.0
  %2246 = vmatprep.subr.mxu0 0.0
  %2247 = vmatpush1.msra.mxu0 0.0
  %2248 = vmatprep.subr.mxu0 0.0
  %2249 = vmatpush1.msra.mxu0 0.0
  %2250 = vmatprep.subr.mxu0 0.0
  %2251 = vmatpush1.msra.mxu0 0.0
  %2252 = vmatprep.subr.mxu0 0.0
  %2253 = vmatpush1.msra.mxu0 0.0
  %2254 = vmatprep.subr.mxu0 0.0
  %2255 = vmatpush1.msra.mxu0 0.0
  %2256 = vmatprep.subr.mxu0 0.0
  %2257 = vmatpush1.msra.mxu0 0.0
  %2258 = vmatprep.subr.mxu0 0.0
  %2259 = vmatpush1.msra.mxu0 0.0
  %2260 = vmatprep.subr.mxu0 0.0
  %2261 = vmatpush1.msra.mxu0 0.0
  %2262 = vmatprep.subr.mxu0 0.0
  %2263 = vmatpush1.msra.mxu0 0.0
  %2264 = vmatprep.subr.mxu0 0.0
  %2265 = vmatpush1.msra.mxu0 0.0
  %2266 = vmatprep.subr.mxu0 0.0
  %2267 = vmatpush1.msra.mxu0 0.0
  %2268 = vmatprep.subr.mxu0 0.0
  %2269 = vmatpush1.msra.mxu0 0.0
  %2270 = vmatprep.subr.mxu0 0.0
  %2271 = vmatpush1.msra.mxu0 0.0
  %2272 = vmatprep.subr.mxu0 0.0
  %2273 = vmatpush1.msra.mxu0 0.0
  %2274 = vmatprep.subr.mxu0 0.0
  %2275 = vmatpush1.msra.mxu0 0.0
  %2276 = vmatprep.subr.mxu0 0.0
  %2277 = vmatpush1.msra.mxu0 0.0
  %2278 = vmatprep.subr.mxu0 0.0
  %2279 = vmatpush1.msra.mxu0 0.0
  %2280 = vmatprep.mubr.f32.mxu0 0.0
  %2281 = vmatmul.mubr.f32.gmra.mrb[0].mxu0 %v2116
  %v2282 = vpop.f32.mrb[0].mxu0
  %v2283 = vadd.f32 0.0, %v2282
  %v2284 = vpop.f32.mrb[0].mxu0
  %2285 = vmatprep.mubr.f32.mxu0 0.0
  %2286 = vmatmul.mubr.f32.gmra.mrb[0].mxu0 %v2119
  %v2287 = vpop.f32.mrb[0].mxu0
  %v2288 = vadd.f32 0.0, %v2287
  %v2289 = vpop.f32.mrb[0].mxu0
  %2290 = vmatprep.mubr.f32.mxu0 0.0
  %2291 = vmatmul.mubr.f32.gmra.mrb[0].mxu0 %v2122
  %v2292 = vpop.f32.mrb[0].mxu0
  %v2293 = vadd.f32 0.0, %v2292
  %v2294 = vpop.f32.mrb[0].mxu0
  %2295 = vdwg.mxu0
  %v2296 = vmul.f32 %v2283, %v56
  %v2297 = vmul.f32 %v2288, %v57
  %v2298 = vmul.f32 %v2293, %v58
  %v2299 = vadd.f32 %v2204, %v2296
  %v2300 = vadd.f32 %v2205, %v2297
  %v2301 = vadd.f32 %v2206, %v2298
  %s2302 = scalar_lea.vmem %s5, 64
  %v2303 = vld [vmem:[%s2302] sm:$0xff]
  %v2304 = vld [vmem:[%s2302 + $0x8] sm:$0xff]
  %v2305 = vld [vmem:[%s2302 + $0x10] sm:$0xff]
  %v2306 = vld [vmem:[%s2302 + $0x18] sm:$0xff]
  %v2307 = vld [vmem:[%s2302 + $0x20] sm:$0xff]
  %v2308 = vld [vmem:[%s2302 + $0x28] sm:$0xff]
  %v2309 = vld [vmem:[%s2302 + $0x30] sm:$0xff]
  %v2310 = vld [vmem:[%s2302 + $0x38] sm:$0xff]
  %2311 = vmatprep.subr.mxu0 0.0
  %2312 = vmatpush1.msra.mxu0 %v2303
  %2313 = vmatprep.subr.mxu0 0.0
  %2314 = vmatpush1.msra.mxu0 %v2304
  %2315 = vmatprep.subr.mxu0 0.0
  %2316 = vmatpush1.msra.mxu0 %v2305
  %2317 = vmatprep.subr.mxu0 0.0
  %2318 = vmatpush1.msra.mxu0 %v2306
  %2319 = vmatprep.subr.mxu0 0.0
  %2320 = vmatpush1.msra.mxu0 %v2307
  %2321 = vmatprep.subr.mxu0 0.0
  %2322 = vmatpush1.msra.mxu0 %v2308
  %2323 = vmatprep.subr.mxu0 0.0
  %2324 = vmatpush1.msra.mxu0 %v2309
  %2325 = vmatprep.subr.mxu0 0.0
  %2326 = vmatpush1.msra.mxu0 %v2310
  %2327 = vmatprep.subr.mxu0 0.0
  %2328 = vmatpush1.msra.mxu0 0.0
  %2329 = vmatprep.subr.mxu0 0.0
  %2330 = vmatpush1.msra.mxu0 0.0
  %2331 = vmatprep.subr.mxu0 0.0
  %2332 = vmatpush1.msra.mxu0 0.0
  %2333 = vmatprep.subr.mxu0 0.0
  %2334 = vmatpush1.msra.mxu0 0.0
  %2335 = vmatprep.subr.mxu0 0.0
  %2336 = vmatpush1.msra.mxu0 0.0
  %2337 = vmatprep.subr.mxu0 0.0
  %2338 = vmatpush1.msra.mxu0 0.0
  %2339 = vmatprep.subr.mxu0 0.0
  %2340 = vmatpush1.msra.mxu0 0.0
  %2341 = vmatprep.subr.mxu0 0.0
  %2342 = vmatpush1.msra.mxu0 0.0
  %2343 = vmatprep.subr.mxu0 0.0
  %2344 = vmatpush1.msra.mxu0 0.0
  %2345 = vmatprep.subr.mxu0 0.0
  %2346 = vmatpush1.msra.mxu0 0.0
  %2347 = vmatprep.subr.mxu0 0.0
  %2348 = vmatpush1.msra.mxu0 0.0
  %2349 = vmatprep.subr.mxu0 0.0
  %2350 = vmatpush1.msra.mxu0 0.0
  %2351 = vmatprep.subr.mxu0 0.0
  %2352 = vmatpush1.msra.mxu0 0.0
  %2353 = vmatprep.subr.mxu0 0.0
  %2354 = vmatpush1.msra.mxu0 0.0
  %2355 = vmatprep.subr.mxu0 0.0
  %2356 = vmatpush1.msra.mxu0 0.0
  %2357 = vmatprep.subr.mxu0 0.0
  %2358 = vmatpush1.msra.mxu0 0.0
  %2359 = vmatprep.subr.mxu0 0.0
  %2360 = vmatpush1.msra.mxu0 0.0
  %2361 = vmatprep.subr.mxu0 0.0
  %2362 = vmatpush1.msra.mxu0 0.0
  %2363 = vmatprep.subr.mxu0 0.0
  %2364 = vmatpush1.msra.mxu0 0.0
  %2365 = vmatprep.subr.mxu0 0.0
  %2366 = vmatpush1.msra.mxu0 0.0
  %2367 = vmatprep.subr.mxu0 0.0
  %2368 = vmatpush1.msra.mxu0 0.0
  %2369 = vmatprep.subr.mxu0 0.0
  %2370 = vmatpush1.msra.mxu0 0.0
  %2371 = vmatprep.subr.mxu0 0.0
  %2372 = vmatpush1.msra.mxu0 0.0
  %2373 = vmatprep.subr.mxu0 0.0
  %2374 = vmatpush1.msra.mxu0 0.0
  %2375 = vmatprep.mubr.f32.mxu0 0.0
  %2376 = vmatmul.mubr.f32.gmra.mrb[0].mxu0 %v2116
  %v2377 = vpop.f32.mrb[0].mxu0
  %v2378 = vadd.f32 0.0, %v2377
  %v2379 = vpop.f32.mrb[0].mxu0
  %2380 = vmatprep.mubr.f32.mxu0 0.0
  %2381 = vmatmul.mubr.f32.gmra.mrb[0].mxu0 %v2119
  %v2382 = vpop.f32.mrb[0].mxu0
  %v2383 = vadd.f32 0.0, %v2382
  %v2384 = vpop.f32.mrb[0].mxu0
  %2385 = vmatprep.mubr.f32.mxu0 0.0
  %2386 = vmatmul.mubr.f32.gmra.mrb[0].mxu0 %v2122
  %v2387 = vpop.f32.mrb[0].mxu0
  %v2388 = vadd.f32 0.0, %v2387
  %v2389 = vpop.f32.mrb[0].mxu0
  %2390 = vdwg.mxu0
  %v2391 = vmul.f32 %v2378, %v53
  %v2392 = vmul.f32 %v2383, %v54
  %v2393 = vmul.f32 %v2388, %v55
  %s2394 = scalar_lea.vmem %s6, 64
  %v2395 = vld [vmem:[%s2394] sm:$0xff]
  %v2396 = vld [vmem:[%s2394 + $0x8] sm:$0xff]
  %v2397 = vld [vmem:[%s2394 + $0x10] sm:$0xff]
  %v2398 = vld [vmem:[%s2394 + $0x18] sm:$0xff]
  %v2399 = vld [vmem:[%s2394 + $0x20] sm:$0xff]
  %v2400 = vld [vmem:[%s2394 + $0x28] sm:$0xff]
  %v2401 = vld [vmem:[%s2394 + $0x30] sm:$0xff]
  %v2402 = vld [vmem:[%s2394 + $0x38] sm:$0xff]
  %2403 = vmatprep.subr.mxu0 0.0
  %2404 = vmatpush1.msra.mxu0 %v2395
  %2405 = vmatprep.subr.mxu0 0.0
  %2406 = vmatpush1.msra.mxu0 %v2396
  %2407 = vmatprep.subr.mxu0 0.0
  %2408 = vmatpush1.msra.mxu0 %v2397
  %2409 = vmatprep.subr.mxu0 0.0
  %2410 = vmatpush1.msra.mxu0 %v2398
  %2411 = vmatprep.subr.mxu0 0.0
  %2412 = vmatpush1.msra.mxu0 %v2399
  %2413 = vmatprep.subr.mxu0 0.0
  %2414 = vmatpush1.msra.mxu0 %v2400
  %2415 = vmatprep.subr.mxu0 0.0
  %2416 = vmatpush1.msra.mxu0 %v2401
  %2417 = vmatprep.subr.mxu0 0.0
  %2418 = vmatpush1.msra.mxu0 %v2402
  %2419 = vmatprep.subr.mxu0 0.0
  %2420 = vmatpush1.msra.mxu0 0.0
  %2421 = vmatprep.subr.mxu0 0.0
  %2422 = vmatpush1.msra.mxu0 0.0
  %2423 = vmatprep.subr.mxu0 0.0
  %2424 = vmatpush1.msra.mxu0 0.0
  %2425 = vmatprep.subr.mxu0 0.0
  %2426 = vmatpush1.msra.mxu0 0.0
  %2427 = vmatprep.subr.mxu0 0.0
  %2428 = vmatpush1.msra.mxu0 0.0
  %2429 = vmatprep.subr.mxu0 0.0
  %2430 = vmatpush1.msra.mxu0 0.0
  %2431 = vmatprep.subr.mxu0 0.0
  %2432 = vmatpush1.msra.mxu0 0.0
  %2433 = vmatprep.subr.mxu0 0.0
  %2434 = vmatpush1.msra.mxu0 0.0
  %2435 = vmatprep.subr.mxu0 0.0
  %2436 = vmatpush1.msra.mxu0 0.0
  %2437 = vmatprep.subr.mxu0 0.0
  %2438 = vmatpush1.msra.mxu0 0.0
  %2439 = vmatprep.subr.mxu0 0.0
  %2440 = vmatpush1.msra.mxu0 0.0
  %2441 = vmatprep.subr.mxu0 0.0
  %2442 = vmatpush1.msra.mxu0 0.0
  %2443 = vmatprep.subr.mxu0 0.0
  %2444 = vmatpush1.msra.mxu0 0.0
  %2445 = vmatprep.subr.mxu0 0.0
  %2446 = vmatpush1.msra.mxu0 0.0
  %2447 = vmatprep.subr.mxu0 0.0
  %2448 = vmatpush1.msra.mxu0 0.0
  %2449 = vmatprep.subr.mxu0 0.0
  %2450 = vmatpush1.msra.mxu0 0.0
  %2451 = vmatprep.subr.mxu0 0.0
  %2452 = vmatpush1.msra.mxu0 0.0
  %2453 = vmatprep.subr.mxu0 0.0
  %2454 = vmatpush1.msra.mxu0 0.0
  %2455 = vmatprep.subr.mxu0 0.0
  %2456 = vmatpush1.msra.mxu0 0.0
  %2457 = vmatprep.subr.mxu0 0.0
  %2458 = vmatpush1.msra.mxu0 0.0
  %2459 = vmatprep.subr.mxu0 0.0
  %2460 = vmatpush1.msra.mxu0 0.0
  %2461 = vmatprep.subr.mxu0 0.0
  %2462 = vmatpush1.msra.mxu0 0.0
  %2463 = vmatprep.subr.mxu0 0.0
  %2464 = vmatpush1.msra.mxu0 0.0
  %2465 = vmatprep.subr.mxu0 0.0
  %2466 = vmatpush1.msra.mxu0 0.0
  %2467 = vmatprep.mubr.f32.mxu0 0.0
  %2468 = vmatmul.mubr.f32.gmra.mrb[0].mxu0 %v2116
  %v2469 = vpop.f32.mrb[0].mxu0
  %v2470 = vadd.f32 0.0, %v2469
  %v2471 = vpop.f32.mrb[0].mxu0
  %2472 = vmatprep.mubr.f32.mxu0 0.0
  %2473 = vmatmul.mubr.f32.gmra.mrb[0].mxu0 %v2119
  %v2474 = vpop.f32.mrb[0].mxu0
  %v2475 = vadd.f32 0.0, %v2474
  %v2476 = vpop.f32.mrb[0].mxu0
  %2477 = vmatprep.mubr.f32.mxu0 0.0
  %2478 = vmatmul.mubr.f32.gmra.mrb[0].mxu0 %v2122
  %v2479 = vpop.f32.mrb[0].mxu0
  %v2480 = vadd.f32 0.0, %v2479
  %v2481 = vpop.f32.mrb[0].mxu0
  %2482 = vdwg.mxu0
  %v2483 = vmul.f32 %v2470, %v56
  %v2484 = vmul.f32 %v2475, %v57
  %v2485 = vmul.f32 %v2480, %v58
  %v2486 = vadd.f32 %v2391, %v2483
  %v2487 = vadd.f32 %v2392, %v2484
  %v2488 = vadd.f32 %v2393, %v2485
  %s2489 = scalar_lea.vmem %s7, 64
  %v2490 = vld [vmem:[%s2489] sm:$0xff]
  %v2491 = vld [vmem:[%s2489 + $0x8] sm:$0xff]
  %v2492 = vld [vmem:[%s2489 + $0x10] sm:$0xff]
  %v2493 = vld [vmem:[%s2489 + $0x18] sm:$0xff]
  %v2494 = vld [vmem:[%s2489 + $0x20] sm:$0xff]
  %v2495 = vld [vmem:[%s2489 + $0x28] sm:$0xff]
  %v2496 = vld [vmem:[%s2489 + $0x30] sm:$0xff]
  %v2497 = vld [vmem:[%s2489 + $0x38] sm:$0xff]
  %2498 = vmatprep.subr.mxu0 0.0
  %2499 = vmatpush1.msra.mxu0 %v2490
  %2500 = vmatprep.subr.mxu0 0.0
  %2501 = vmatpush1.msra.mxu0 %v2491
  %2502 = vmatprep.subr.mxu0 0.0
  %2503 = vmatpush1.msra.mxu0 %v2492
  %2504 = vmatprep.subr.mxu0 0.0
  %2505 = vmatpush1.msra.mxu0 %v2493
  %2506 = vmatprep.subr.mxu0 0.0
  %2507 = vmatpush1.msra.mxu0 %v2494
  %2508 = vmatprep.subr.mxu0 0.0
  %2509 = vmatpush1.msra.mxu0 %v2495
  %2510 = vmatprep.subr.mxu0 0.0
  %2511 = vmatpush1.msra.mxu0 %v2496
  %2512 = vmatprep.subr.mxu0 0.0
  %2513 = vmatpush1.msra.mxu0 %v2497
  %2514 = vmatprep.subr.mxu0 0.0
  %2515 = vmatpush1.msra.mxu0 0.0
  %2516 = vmatprep.subr.mxu0 0.0
  %2517 = vmatpush1.msra.mxu0 0.0
  %2518 = vmatprep.subr.mxu0 0.0
  %2519 = vmatpush1.msra.mxu0 0.0
  %2520 = vmatprep.subr.mxu0 0.0
  %2521 = vmatpush1.msra.mxu0 0.0
  %2522 = vmatprep.subr.mxu0 0.0
  %2523 = vmatpush1.msra.mxu0 0.0
  %2524 = vmatprep.subr.mxu0 0.0
  %2525 = vmatpush1.msra.mxu0 0.0
  %2526 = vmatprep.subr.mxu0 0.0
  %2527 = vmatpush1.msra.mxu0 0.0
  %2528 = vmatprep.subr.mxu0 0.0
  %2529 = vmatpush1.msra.mxu0 0.0
  %2530 = vmatprep.subr.mxu0 0.0
  %2531 = vmatpush1.msra.mxu0 0.0
  %2532 = vmatprep.subr.mxu0 0.0
  %2533 = vmatpush1.msra.mxu0 0.0
  %2534 = vmatprep.subr.mxu0 0.0
  %2535 = vmatpush1.msra.mxu0 0.0
  %2536 = vmatprep.subr.mxu0 0.0
  %2537 = vmatpush1.msra.mxu0 0.0
  %2538 = vmatprep.subr.mxu0 0.0
  %2539 = vmatpush1.msra.mxu0 0.0
  %2540 = vmatprep.subr.mxu0 0.0
  %2541 = vmatpush1.msra.mxu0 0.0
  %2542 = vmatprep.subr.mxu0 0.0
  %2543 = vmatpush1.msra.mxu0 0.0
  %2544 = vmatprep.subr.mxu0 0.0
  %2545 = vmatpush1.msra.mxu0 0.0
  %2546 = vmatprep.subr.mxu0 0.0
  %2547 = vmatpush1.msra.mxu0 0.0
  %2548 = vmatprep.subr.mxu0 0.0
  %2549 = vmatpush1.msra.mxu0 0.0
  %2550 = vmatprep.subr.mxu0 0.0
  %2551 = vmatpush1.msra.mxu0 0.0
  %2552 = vmatprep.subr.mxu0 0.0
  %2553 = vmatpush1.msra.mxu0 0.0
  %2554 = vmatprep.subr.mxu0 0.0
  %2555 = vmatpush1.msra.mxu0 0.0
  %2556 = vmatprep.subr.mxu0 0.0
  %2557 = vmatpush1.msra.mxu0 0.0
  %2558 = vmatprep.subr.mxu0 0.0
  %2559 = vmatpush1.msra.mxu0 0.0
  %2560 = vmatprep.subr.mxu0 0.0
  %2561 = vmatpush1.msra.mxu0 0.0
  %2562 = vmatprep.mubr.f32.mxu0 0.0
  %2563 = vmatmul.mubr.f32.gmra.mrb[0].mxu0 %v2116
  %v2564 = vpop.f32.mrb[0].mxu0
  %v2565 = vadd.f32 0.0, %v2564
  %v2566 = vpop.f32.mrb[0].mxu0
  %2567 = vmatprep.mubr.f32.mxu0 0.0
  %2568 = vmatmul.mubr.f32.gmra.mrb[0].mxu0 %v2119
  %v2569 = vpop.f32.mrb[0].mxu0
  %v2570 = vadd.f32 0.0, %v2569
  %v2571 = vpop.f32.mrb[0].mxu0
  %2572 = vmatprep.mubr.f32.mxu0 0.0
  %2573 = vmatmul.mubr.f32.gmra.mrb[0].mxu0 %v2122
  %v2574 = vpop.f32.mrb[0].mxu0
  %v2575 = vadd.f32 0.0, %v2574
  %v2576 = vpop.f32.mrb[0].mxu0
  %2577 = vdwg.mxu0
  %v2578 = vmul.f32 %v2486, %v720
  %v2579 = vmul.f32 %v2487, %v720
  %v2580 = vmul.f32 %v2488, %v720
  %v2582 = vsel %vm99, %v2299, 0
  %v2585 = vsel %vm99, %v2300, 0
  %v2588 = vsel %vm99, %v2301, 0
  %v2591 = vsel %vm99, %v2578, 0
  %v2594 = vsel %vm99, %v2579, 0
  %v2597 = vsel %vm99, %v2580, 0
  %2599 = vmatprep.subr.mxu0 0.0
  %2600 = vmatpush1.xpose.msra.mxu0 %v2591
  %2601 = vmatprep.subr.mxu0 0.0
  %2602 = vmatpush1.xpose.msra.mxu0 %v2594
  %2603 = vmatprep.subr.mxu0 0.0
  %2604 = vmatpush1.xpose.msra.mxu0 %v2597
  %2605 = vmatprep.subr.mxu0 0.0
  %2606 = vmatpush1.xpose.msra.mxu0 0.0
  %2607 = vmatprep.subr.mxu0 0.0
  %2608 = vmatpush1.xpose.msra.mxu0 0.0
  %2609 = vmatprep.subr.mxu0 0.0
  %2610 = vmatpush1.xpose.msra.mxu0 0.0
  %2611 = vmatprep.subr.mxu0 0.0
  %2612 = vmatpush1.xpose.msra.mxu0 0.0
  %2613 = vmatprep.subr.mxu0 0.0
  %2614 = vmatpush1.xpose.msra.mxu0 0.0
  %2615 = vmatprep.subr.mxu0 0.0
  %2616 = vmatpush1.xpose.msra.mxu0 0.0
  %2617 = vmatprep.subr.mxu0 0.0
  %2618 = vmatpush1.xpose.msra.mxu0 0.0
  %2619 = vmatprep.subr.mxu0 0.0
  %2620 = vmatpush1.xpose.msra.mxu0 0.0
  %2621 = vmatprep.subr.mxu0 0.0
  %2622 = vmatpush1.xpose.msra.mxu0 0.0
  %2623 = vmatprep.subr.mxu0 0.0
  %2624 = vmatpush1.xpose.msra.mxu0 0.0
  %2625 = vmatprep.subr.mxu0 0.0
  %2626 = vmatpush1.xpose.msra.mxu0 0.0
  %2627 = vmatprep.subr.mxu0 0.0
  %2628 = vmatpush1.xpose.msra.mxu0 0.0
  %2629 = vmatprep.subr.mxu0 0.0
  %2630 = vmatpush1.xpose.msra.mxu0 0.0
  %2631 = vmatprep.subr.mxu0 0.0
  %2632 = vmatpush1.xpose.msra.mxu0 0.0
  %2633 = vmatprep.subr.mxu0 0.0
  %2634 = vmatpush1.xpose.msra.mxu0 0.0
  %2635 = vmatprep.subr.mxu0 0.0
  %2636 = vmatpush1.xpose.msra.mxu0 0.0
  %2637 = vmatprep.subr.mxu0 0.0
  %2638 = vmatpush1.xpose.msra.mxu0 0.0
  %2639 = vmatprep.subr.mxu0 0.0
  %2640 = vmatpush1.xpose.msra.mxu0 0.0
  %2641 = vmatprep.subr.mxu0 0.0
  %2642 = vmatpush1.xpose.msra.mxu0 0.0
  %2643 = vmatprep.subr.mxu0 0.0
  %2644 = vmatpush1.xpose.msra.mxu0 0.0
  %2645 = vmatprep.subr.mxu0 0.0
  %2646 = vmatpush1.xpose.msra.mxu0 0.0
  %2647 = vmatprep.subr.mxu0 0.0
  %2648 = vmatpush1.xpose.msra.mxu0 0.0
  %2649 = vmatprep.subr.mxu0 0.0
  %2650 = vmatpush1.xpose.msra.mxu0 0.0
  %2651 = vmatprep.subr.mxu0 0.0
  %2652 = vmatpush1.xpose.msra.mxu0 0.0
  %2653 = vmatprep.subr.mxu0 0.0
  %2654 = vmatpush1.xpose.msra.mxu0 0.0
  %2655 = vmatprep.subr.mxu0 0.0
  %2656 = vmatpush1.xpose.msra.mxu0 0.0
  %2657 = vmatprep.subr.mxu0 0.0
  %2658 = vmatpush1.xpose.msra.mxu0 0.0
  %2659 = vmatprep.subr.mxu0 0.0
  %2660 = vmatpush1.xpose.msra.mxu0 0.0
  %2661 = vmatprep.subr.mxu0 0.0
  %2662 = vmatpush1.xpose.msra.mxu0 0.0
  %2663 = vmatprep.mubr.f32.mxu0 0.0
  %2664 = vmatmul.mubr.f32.gmra.mrb[0].mxu0 %v2582
  %v2665 = vpop.f32.mrb[0].mxu0
  %v2666 = vadd.f32 %v59, %v2665
  %v2667 = vpop.f32.mrb[0].mxu0
  %2668 = vmatprep.mubr.f32.mxu0 0.0
  %2669 = vmatmul.mubr.f32.gmra.mrb[0].mxu0 %v2585
  %v2670 = vpop.f32.mrb[0].mxu0
  %v2671 = vadd.f32 %v60, %v2670
  %v2672 = vpop.f32.mrb[0].mxu0
  %2673 = vmatprep.mubr.f32.mxu0 0.0
  %2674 = vmatmul.mubr.f32.gmra.mrb[0].mxu0 %v2588
  %v2675 = vpop.f32.mrb[0].mxu0
  %v2676 = vadd.f32 %v61, %v2675
  %v2677 = vpop.f32.mrb[0].mxu0
  %2678 = vdwg.mxu0
  %v2679 = vsel %vm823, %v2666, -inf
  %2680 = vmax.xlane.f32.xlu0 %v2679
  %v2681 = vpop.xlane.xlu0 %2680
  %v2682 = vsel %vm823, %v2671, -inf
  %2683 = vmax.xlane.f32.xlu0 %v2682
  %v2684 = vpop.xlane.xlu0 %2683
  %v2685 = vsel %vm830, %v2676, -inf
  %2686 = vmax.xlane.f32.xlu0 %v2685
  %v2687 = vpop.xlane.xlu0 %2686
  %v2688 = vsub.f32 %v2666, %v2681
  %v2689 = vsub.f32 %v2671, %v2684
  %v2690 = vsub.f32 %v2676, %v2687
  %v2691 = vmul.f32 %v2688, 1.442695
  %v2692 = vpow.pop %v2691
  %v2693 = vmul.f32 %v2689, 1.442695
  %v2694 = vpow.pop %v2693
  %v2695 = vmul.f32 %v2690, 1.442695
  %v2696 = vpow.pop %v2695
  %v2697 = vsel %vm823, %v2692, 0.0
  %2698 = vadd.xlane.f32.xlu0 %v2697
  %v2699 = vpop.xlane.xlu0 %2698
  %v2700 = vsel %vm823, %v2694, 0.0
  %2701 = vadd.xlane.f32.xlu0 %v2700
  %v2702 = vpop.xlane.xlu0 %2701
  %v2703 = vsel %vm830, %v2696, 0.0
  %2704 = vadd.xlane.f32.xlu0 %v2703
  %v2705 = vpop.xlane.xlu0 %2704
  %v2706 = vrcp.pop %v2699
  %v2707 = vmul.f32 1.0, %v2706
  %v2708 = vrcp.pop %v2702
  %v2709 = vmul.f32 1.0, %v2708
  %v2710 = vrcp.pop %v2705
  %v2711 = vmul.f32 1.0, %v2710
  %v2712 = vmul.f32 %v2692, %v2707
  %v2713 = vmul.f32 %v2694, %v2709
  %v2714 = vmul.f32 %v2696, %v2711
  %v2715 = vmul.f32 %v2565, %v720
  %v2716 = vmul.f32 %v2570, %v720
  %v2717 = vmul.f32 %v2575, %v720
  %v2718 = vmul.f32 %v2486, %v868
  %v2719 = vmul.f32 %v2487, %v868
  %v2720 = vmul.f32 %v2488, %v868
  %v2722 = vsel %vm99, %v2718, 0
  %v2725 = vsel %vm99, %v2719, 0
  %v2728 = vsel %vm99, %v2720, 0
  %2730 = vmatprep.subr.mxu0 0.0
  %2731 = vmatpush1.xpose.msra.mxu0 %v2722
  %2732 = vmatprep.subr.mxu0 0.0
  %2733 = vmatpush1.xpose.msra.mxu0 %v2725
  %2734 = vmatprep.subr.mxu0 0.0
  %2735 = vmatpush1.xpose.msra.mxu0 %v2728
  %2736 = vmatprep.subr.mxu0 0.0
  %2737 = vmatpush1.xpose.msra.mxu0 0.0
  %2738 = vmatprep.subr.mxu0 0.0
  %2739 = vmatpush1.xpose.msra.mxu0 0.0
  %2740 = vmatprep.subr.mxu0 0.0
  %2741 = vmatpush1.xpose.msra.mxu0 0.0
  %2742 = vmatprep.subr.mxu0 0.0
  %2743 = vmatpush1.xpose.msra.mxu0 0.0
  %2744 = vmatprep.subr.mxu0 0.0
  %2745 = vmatpush1.xpose.msra.mxu0 0.0
  %2746 = vmatprep.subr.mxu0 0.0
  %2747 = vmatpush1.xpose.msra.mxu0 0.0
  %2748 = vmatprep.subr.mxu0 0.0
  %2749 = vmatpush1.xpose.msra.mxu0 0.0
  %2750 = vmatprep.subr.mxu0 0.0
  %2751 = vmatpush1.xpose.msra.mxu0 0.0
  %2752 = vmatprep.subr.mxu0 0.0
  %2753 = vmatpush1.xpose.msra.mxu0 0.0
  %2754 = vmatprep.subr.mxu0 0.0
  %2755 = vmatpush1.xpose.msra.mxu0 0.0
  %2756 = vmatprep.subr.mxu0 0.0
  %2757 = vmatpush1.xpose.msra.mxu0 0.0
  %2758 = vmatprep.subr.mxu0 0.0
  %2759 = vmatpush1.xpose.msra.mxu0 0.0
  %2760 = vmatprep.subr.mxu0 0.0
  %2761 = vmatpush1.xpose.msra.mxu0 0.0
  %2762 = vmatprep.subr.mxu0 0.0
  %2763 = vmatpush1.xpose.msra.mxu0 0.0
  %2764 = vmatprep.subr.mxu0 0.0
  %2765 = vmatpush1.xpose.msra.mxu0 0.0
  %2766 = vmatprep.subr.mxu0 0.0
  %2767 = vmatpush1.xpose.msra.mxu0 0.0
  %2768 = vmatprep.subr.mxu0 0.0
  %2769 = vmatpush1.xpose.msra.mxu0 0.0
  %2770 = vmatprep.subr.mxu0 0.0
  %2771 = vmatpush1.xpose.msra.mxu0 0.0
  %2772 = vmatprep.subr.mxu0 0.0
  %2773 = vmatpush1.xpose.msra.mxu0 0.0
  %2774 = vmatprep.subr.mxu0 0.0
  %2775 = vmatpush1.xpose.msra.mxu0 0.0
  %2776 = vmatprep.subr.mxu0 0.0
  %2777 = vmatpush1.xpose.msra.mxu0 0.0
  %2778 = vmatprep.subr.mxu0 0.0
  %2779 = vmatpush1.xpose.msra.mxu0 0.0
  %2780 = vmatprep.subr.mxu0 0.0
  %2781 = vmatpush1.xpose.msra.mxu0 0.0
  %2782 = vmatprep.subr.mxu0 0.0
  %2783 = vmatpush1.xpose.msra.mxu0 0.0
  %2784 = vmatprep.subr.mxu0 0.0
  %2785 = vmatpush1.xpose.msra.mxu0 0.0
  %2786 = vmatprep.subr.mxu0 0.0
  %2787 = vmatpush1.xpose.msra.mxu0 0.0
  %2788 = vmatprep.subr.mxu0 0.0
  %2789 = vmatpush1.xpose.msra.mxu0 0.0
  %2790 = vmatprep.subr.mxu0 0.0
  %2791 = vmatpush1.xpose.msra.mxu0 0.0
  %2792 = vmatprep.subr.mxu0 0.0
  %2793 = vmatpush1.xpose.msra.mxu0 0.0
  %2794 = vmatprep.mubr.f32.mxu0 0.0
  %2795 = vmatmul.mubr.f32.gmra.mrb[0].mxu0 %v2582
  %v2796 = vpop.f32.mrb[0].mxu0
  %v2797 = vadd.f32 %v59, %v2796
  %v2798 = vpop.f32.mrb[0].mxu0
  %2799 = vmatprep.mubr.f32.mxu0 0.0
  %2800 = vmatmul.mubr.f32.gmra.mrb[0].mxu0 %v2585
  %v2801 = vpop.f32.mrb[0].mxu0
  %v2802 = vadd.f32 %v60, %v2801
  %v2803 = vpop.f32.mrb[0].mxu0
  %2804 = vmatprep.mubr.f32.mxu0 0.0
  %2805 = vmatmul.mubr.f32.gmra.mrb[0].mxu0 %v2588
  %v2806 = vpop.f32.mrb[0].mxu0
  %v2807 = vadd.f32 %v61, %v2806
  %v2808 = vpop.f32.mrb[0].mxu0
  %2809 = vdwg.mxu0
  %v2810 = vsel %vm823, %v2797, -inf
  %2811 = vmax.xlane.f32.xlu0 %v2810
  %v2812 = vpop.xlane.xlu0 %2811
  %v2813 = vsel %vm823, %v2802, -inf
  %2814 = vmax.xlane.f32.xlu0 %v2813
  %v2815 = vpop.xlane.xlu0 %2814
  %v2816 = vsel %vm830, %v2807, -inf
  %2817 = vmax.xlane.f32.xlu0 %v2816
  %v2818 = vpop.xlane.xlu0 %2817
  %v2819 = vsub.f32 %v2797, %v2812
  %v2820 = vsub.f32 %v2802, %v2815
  %v2821 = vsub.f32 %v2807, %v2818
  %v2822 = vmul.f32 %v2819, 1.442695
  %v2823 = vpow.pop %v2822
  %v2824 = vmul.f32 %v2820, 1.442695
  %v2825 = vpow.pop %v2824
  %v2826 = vmul.f32 %v2821, 1.442695
  %v2827 = vpow.pop %v2826
  %v2828 = vsel %vm823, %v2823, 0.0
  %2829 = vadd.xlane.f32.xlu0 %v2828
  %v2830 = vpop.xlane.xlu0 %2829
  %v2831 = vsel %vm823, %v2825, 0.0
  %2832 = vadd.xlane.f32.xlu0 %v2831
  %v2833 = vpop.xlane.xlu0 %2832
  %v2834 = vsel %vm830, %v2827, 0.0
  %2835 = vadd.xlane.f32.xlu0 %v2834
  %v2836 = vpop.xlane.xlu0 %2835
  %v2837 = vrcp.pop %v2830
  %v2838 = vmul.f32 1.0, %v2837
  %v2839 = vrcp.pop %v2833
  %v2840 = vmul.f32 1.0, %v2839
  %v2841 = vrcp.pop %v2836
  %v2842 = vmul.f32 1.0, %v2841
  %v2843 = vmul.f32 %v2823, %v2838
  %v2844 = vmul.f32 %v2825, %v2840
  %v2845 = vmul.f32 %v2827, %v2842
  %v2846 = vmul.f32 %v2565, %v868
  %v2847 = vmul.f32 %v2570, %v868
  %v2848 = vmul.f32 %v2575, %v868
  %v2850 = vsel %vm823, %v2843, 0
  %v2853 = vsel %vm823, %v2844, 0
  %v2856 = vsel %vm823, %v2845, 0
  %v2859 = vsel %vm1010, %v2848, 0
  %2861 = vmatprep.subr.mxu0 0.0
  %2862 = vmatpush1.msra.mxu0 %v2846
  %2863 = vmatprep.subr.mxu0 0.0
  %2864 = vmatpush1.msra.mxu0 %v2847
  %2865 = vmatprep.subr.mxu0 0.0
  %2866 = vmatpush1.msra.mxu0 %v2859
  %2867 = vmatprep.subr.mxu0 0.0
  %2868 = vmatpush1.msra.mxu0 0.0
  %2869 = vmatprep.subr.mxu0 0.0
  %2870 = vmatpush1.msra.mxu0 0.0
  %2871 = vmatprep.subr.mxu0 0.0
  %2872 = vmatpush1.msra.mxu0 0.0
  %2873 = vmatprep.subr.mxu0 0.0
  %2874 = vmatpush1.msra.mxu0 0.0
  %2875 = vmatprep.subr.mxu0 0.0
  %2876 = vmatpush1.msra.mxu0 0.0
  %2877 = vmatprep.subr.mxu0 0.0
  %2878 = vmatpush1.msra.mxu0 0.0
  %2879 = vmatprep.subr.mxu0 0.0
  %2880 = vmatpush1.msra.mxu0 0.0
  %2881 = vmatprep.subr.mxu0 0.0
  %2882 = vmatpush1.msra.mxu0 0.0
  %2883 = vmatprep.subr.mxu0 0.0
  %2884 = vmatpush1.msra.mxu0 0.0
  %2885 = vmatprep.subr.mxu0 0.0
  %2886 = vmatpush1.msra.mxu0 0.0
  %2887 = vmatprep.subr.mxu0 0.0
  %2888 = vmatpush1.msra.mxu0 0.0
  %2889 = vmatprep.subr.mxu0 0.0
  %2890 = vmatpush1.msra.mxu0 0.0
  %2891 = vmatprep.subr.mxu0 0.0
  %2892 = vmatpush1.msra.mxu0 0.0
  %2893 = vmatprep.subr.mxu0 0.0
  %2894 = vmatpush1.msra.mxu0 0.0
  %2895 = vmatprep.subr.mxu0 0.0
  %2896 = vmatpush1.msra.mxu0 0.0
  %2897 = vmatprep.subr.mxu0 0.0
  %2898 = vmatpush1.msra.mxu0 0.0
  %2899 = vmatprep.subr.mxu0 0.0
  %2900 = vmatpush1.msra.mxu0 0.0
  %2901 = vmatprep.subr.mxu0 0.0
  %2902 = vmatpush1.msra.mxu0 0.0
  %2903 = vmatprep.subr.mxu0 0.0
  %2904 = vmatpush1.msra.mxu0 0.0
  %2905 = vmatprep.subr.mxu0 0.0
  %2906 = vmatpush1.msra.mxu0 0.0
  %2907 = vmatprep.subr.mxu0 0.0
  %2908 = vmatpush1.msra.mxu0 0.0
  %2909 = vmatprep.subr.mxu0 0.0
  %2910 = vmatpush1.msra.mxu0 0.0
  %2911 = vmatprep.subr.mxu0 0.0
  %2912 = vmatpush1.msra.mxu0 0.0
  %2913 = vmatprep.subr.mxu0 0.0
  %2914 = vmatpush1.msra.mxu0 0.0
  %2915 = vmatprep.subr.mxu0 0.0
  %2916 = vmatpush1.msra.mxu0 0.0
  %2917 = vmatprep.subr.mxu0 0.0
  %2918 = vmatpush1.msra.mxu0 0.0
  %2919 = vmatprep.subr.mxu0 0.0
  %2920 = vmatpush1.msra.mxu0 0.0
  %2921 = vmatprep.subr.mxu0 0.0
  %2922 = vmatpush1.msra.mxu0 0.0
  %2923 = vmatprep.subr.mxu0 0.0
  %2924 = vmatpush1.msra.mxu0 0.0
  %2925 = vmatprep.mubr.f32.mxu0 0.0
  %2926 = vmatmul.mubr.f32.gmra.mrb[0].mxu0 %v2850
  %v2927 = vpop.f32.mrb[0].mxu0
  %v2928 = vadd.f32 0.0, %v2927
  %v2929 = vpop.f32.mrb[0].mxu0
  %2930 = vmatprep.mubr.f32.mxu0 0.0
  %2931 = vmatmul.mubr.f32.gmra.mrb[0].mxu0 %v2853
  %v2932 = vpop.f32.mrb[0].mxu0
  %v2933 = vadd.f32 0.0, %v2932
  %v2934 = vpop.f32.mrb[0].mxu0
  %2935 = vmatprep.mubr.f32.mxu0 0.0
  %2936 = vmatmul.mubr.f32.gmra.mrb[0].mxu0 %v2856
  %v2937 = vpop.f32.mrb[0].mxu0
  %v2938 = vadd.f32 0.0, %v2937
  %v2939 = vpop.f32.mrb[0].mxu0
  %2940 = vdwg.mxu0
  %v2942 = vsel %vm823, %v2712, 0
  %v2945 = vsel %vm823, %v2713, 0
  %v2948 = vsel %vm823, %v2714, 0
  %v2951 = vsel %vm1010, %v2717, 0
  %2953 = vmatprep.subr.mxu0 0.0
  %2954 = vmatpush1.msra.mxu0 %v2715
  %2955 = vmatprep.subr.mxu0 0.0
  %2956 = vmatpush1.msra.mxu0 %v2716
  %2957 = vmatprep.subr.mxu0 0.0
  %2958 = vmatpush1.msra.mxu0 %v2951
  %2959 = vmatprep.subr.mxu0 0.0
  %2960 = vmatpush1.msra.mxu0 0.0
  %2961 = vmatprep.subr.mxu0 0.0
  %2962 = vmatpush1.msra.mxu0 0.0
  %2963 = vmatprep.subr.mxu0 0.0
  %2964 = vmatpush1.msra.mxu0 0.0
  %2965 = vmatprep.subr.mxu0 0.0
  %2966 = vmatpush1.msra.mxu0 0.0
  %2967 = vmatprep.subr.mxu0 0.0
  %2968 = vmatpush1.msra.mxu0 0.0
  %2969 = vmatprep.subr.mxu0 0.0
  %2970 = vmatpush1.msra.mxu0 0.0
  %2971 = vmatprep.subr.mxu0 0.0
  %2972 = vmatpush1.msra.mxu0 0.0
  %2973 = vmatprep.subr.mxu0 0.0
  %2974 = vmatpush1.msra.mxu0 0.0
  %2975 = vmatprep.subr.mxu0 0.0
  %2976 = vmatpush1.msra.mxu0 0.0
  %2977 = vmatprep.subr.mxu0 0.0
  %2978 = vmatpush1.msra.mxu0 0.0
  %2979 = vmatprep.subr.mxu0 0.0
  %2980 = vmatpush1.msra.mxu0 0.0
  %2981 = vmatprep.subr.mxu0 0.0
  %2982 = vmatpush1.msra.mxu0 0.0
  %2983 = vmatprep.subr.mxu0 0.0
  %2984 = vmatpush1.msra.mxu0 0.0
  %2985 = vmatprep.subr.mxu0 0.0
  %2986 = vmatpush1.msra.mxu0 0.0
  %2987 = vmatprep.subr.mxu0 0.0
  %2988 = vmatpush1.msra.mxu0 0.0
  %2989 = vmatprep.subr.mxu0 0.0
  %2990 = vmatpush1.msra.mxu0 0.0
  %2991 = vmatprep.subr.mxu0 0.0
  %2992 = vmatpush1.msra.mxu0 0.0
  %2993 = vmatprep.subr.mxu0 0.0
  %2994 = vmatpush1.msra.mxu0 0.0
  %2995 = vmatprep.subr.mxu0 0.0
  %2996 = vmatpush1.msra.mxu0 0.0
  %2997 = vmatprep.subr.mxu0 0.0
  %2998 = vmatpush1.msra.mxu0 0.0
  %2999 = vmatprep.subr.mxu0 0.0
  %3000 = vmatpush1.msra.mxu0 0.0
  %3001 = vmatprep.subr.mxu0 0.0
  %3002 = vmatpush1.msra.mxu0 0.0
  %3003 = vmatprep.subr.mxu0 0.0
  %3004 = vmatpush1.msra.mxu0 0.0
  %3005 = vmatprep.subr.mxu0 0.0
  %3006 = vmatpush1.msra.mxu0 0.0
  %3007 = vmatprep.subr.mxu0 0.0
  %3008 = vmatpush1.msra.mxu0 0.0
  %3009 = vmatprep.subr.mxu0 0.0
  %3010 = vmatpush1.msra.mxu0 0.0
  %3011 = vmatprep.subr.mxu0 0.0
  %3012 = vmatpush1.msra.mxu0 0.0
  %3013 = vmatprep.subr.mxu0 0.0
  %3014 = vmatpush1.msra.mxu0 0.0
  %3015 = vmatprep.subr.mxu0 0.0
  %3016 = vmatpush1.msra.mxu0 0.0
  %3017 = vmatprep.mubr.f32.mxu0 0.0
  %3018 = vmatmul.mubr.f32.gmra.mrb[0].mxu0 %v2942
  %v3019 = vpop.f32.mrb[0].mxu0
  %v3020 = vadd.f32 %v2928, %v3019
  %v3021 = vpop.f32.mrb[0].mxu0
  %3022 = vmatprep.mubr.f32.mxu0 0.0
  %3023 = vmatmul.mubr.f32.gmra.mrb[0].mxu0 %v2945
  %v3024 = vpop.f32.mrb[0].mxu0
  %v3025 = vadd.f32 %v2933, %v3024
  %v3026 = vpop.f32.mrb[0].mxu0
  %3027 = vmatprep.mubr.f32.mxu0 0.0
  %3028 = vmatmul.mubr.f32.gmra.mrb[0].mxu0 %v2948
  %v3029 = vpop.f32.mrb[0].mxu0
  %v3030 = vadd.f32 %v2938, %v3029
  %v3031 = vpop.f32.mrb[0].mxu0
  %3032 = vdwg.mxu0
  %v3033 = vmul.f32 %v2486, %v1190
  %v3034 = vmul.f32 %v2487, %v1190
  %v3035 = vmul.f32 %v2488, %v1190
  %v3037 = vsel %vm99, %v3033, 0
  %v3040 = vsel %vm99, %v3034, 0
  %v3043 = vsel %vm99, %v3035, 0
  %3045 = vmatprep.subr.mxu0 0.0
  %3046 = vmatpush1.xpose.msra.mxu0 %v3037
  %3047 = vmatprep.subr.mxu0 0.0
  %3048 = vmatpush1.xpose.msra.mxu0 %v3040
  %3049 = vmatprep.subr.mxu0 0.0
  %3050 = vmatpush1.xpose.msra.mxu0 %v3043
  %3051 = vmatprep.subr.mxu0 0.0
  %3052 = vmatpush1.xpose.msra.mxu0 0.0
  %3053 = vmatprep.subr.mxu0 0.0
  %3054 = vmatpush1.xpose.msra.mxu0 0.0
  %3055 = vmatprep.subr.mxu0 0.0
  %3056 = vmatpush1.xpose.msra.mxu0 0.0
  %3057 = vmatprep.subr.mxu0 0.0
  %3058 = vmatpush1.xpose.msra.mxu0 0.0
  %3059 = vmatprep.subr.mxu0 0.0
  %3060 = vmatpush1.xpose.msra.mxu0 0.0
  %3061 = vmatprep.subr.mxu0 0.0
  %3062 = vmatpush1.xpose.msra.mxu0 0.0
  %3063 = vmatprep.subr.mxu0 0.0
  %3064 = vmatpush1.xpose.msra.mxu0 0.0
  %3065 = vmatprep.subr.mxu0 0.0
  %3066 = vmatpush1.xpose.msra.mxu0 0.0
  %3067 = vmatprep.subr.mxu0 0.0
  %3068 = vmatpush1.xpose.msra.mxu0 0.0
  %3069 = vmatprep.subr.mxu0 0.0
  %3070 = vmatpush1.xpose.msra.mxu0 0.0
  %3071 = vmatprep.subr.mxu0 0.0
  %3072 = vmatpush1.xpose.msra.mxu0 0.0
  %3073 = vmatprep.subr.mxu0 0.0
  %3074 = vmatpush1.xpose.msra.mxu0 0.0
  %3075 = vmatprep.subr.mxu0 0.0
  %3076 = vmatpush1.xpose.msra.mxu0 0.0
  %3077 = vmatprep.subr.mxu0 0.0
  %3078 = vmatpush1.xpose.msra.mxu0 0.0
  %3079 = vmatprep.subr.mxu0 0.0
  %3080 = vmatpush1.xpose.msra.mxu0 0.0
  %3081 = vmatprep.subr.mxu0 0.0
  %3082 = vmatpush1.xpose.msra.mxu0 0.0
  %3083 = vmatprep.subr.mxu0 0.0
  %3084 = vmatpush1.xpose.msra.mxu0 0.0
  %3085 = vmatprep.subr.mxu0 0.0
  %3086 = vmatpush1.xpose.msra.mxu0 0.0
  %3087 = vmatprep.subr.mxu0 0.0
  %3088 = vmatpush1.xpose.msra.mxu0 0.0
  %3089 = vmatprep.subr.mxu0 0.0
  %3090 = vmatpush1.xpose.msra.mxu0 0.0
  %3091 = vmatprep.subr.mxu0 0.0
  %3092 = vmatpush1.xpose.msra.mxu0 0.0
  %3093 = vmatprep.subr.mxu0 0.0
  %3094 = vmatpush1.xpose.msra.mxu0 0.0
  %3095 = vmatprep.subr.mxu0 0.0
  %3096 = vmatpush1.xpose.msra.mxu0 0.0
  %3097 = vmatprep.subr.mxu0 0.0
  %3098 = vmatpush1.xpose.msra.mxu0 0.0
  %3099 = vmatprep.subr.mxu0 0.0
  %3100 = vmatpush1.xpose.msra.mxu0 0.0
  %3101 = vmatprep.subr.mxu0 0.0
  %3102 = vmatpush1.xpose.msra.mxu0 0.0
  %3103 = vmatprep.subr.mxu0 0.0
  %3104 = vmatpush1.xpose.msra.mxu0 0.0
  %3105 = vmatprep.subr.mxu0 0.0
  %3106 = vmatpush1.xpose.msra.mxu0 0.0
  %3107 = vmatprep.subr.mxu0 0.0
  %3108 = vmatpush1.xpose.msra.mxu0 0.0
  %3109 = vmatprep.mubr.f32.mxu0 0.0
  %3110 = vmatmul.mubr.f32.gmra.mrb[0].mxu0 %v2582
  %v3111 = vpop.f32.mrb[0].mxu0
  %v3112 = vadd.f32 %v59, %v3111
  %v3113 = vpop.f32.mrb[0].mxu0
  %3114 = vmatprep.mubr.f32.mxu0 0.0
  %3115 = vmatmul.mubr.f32.gmra.mrb[0].mxu0 %v2585
  %v3116 = vpop.f32.mrb[0].mxu0
  %v3117 = vadd.f32 %v60, %v3116
  %v3118 = vpop.f32.mrb[0].mxu0
  %3119 = vmatprep.mubr.f32.mxu0 0.0
  %3120 = vmatmul.mubr.f32.gmra.mrb[0].mxu0 %v2588
  %v3121 = vpop.f32.mrb[0].mxu0
  %v3122 = vadd.f32 %v61, %v3121
  %v3123 = vpop.f32.mrb[0].mxu0
  %3124 = vdwg.mxu0
  %v3125 = vsel %vm823, %v3112, -inf
  %3126 = vmax.xlane.f32.xlu0 %v3125
  %v3127 = vpop.xlane.xlu0 %3126
  %v3128 = vsel %vm823, %v3117, -inf
  %3129 = vmax.xlane.f32.xlu0 %v3128
  %v3130 = vpop.xlane.xlu0 %3129
  %v3131 = vsel %vm830, %v3122, -inf
  %3132 = vmax.xlane.f32.xlu0 %v3131
  %v3133 = vpop.xlane.xlu0 %3132
  %v3134 = vsub.f32 %v3112, %v3127
  %v3135 = vsub.f32 %v3117, %v3130
  %v3136 = vsub.f32 %v3122, %v3133
  %v3137 = vmul.f32 %v3134, 1.442695
  %v3138 = vpow.pop %v3137
  %v3139 = vmul.f32 %v3135, 1.442695
  %v3140 = vpow.pop %v3139
  %v3141 = vmul.f32 %v3136, 1.442695
  %v3142 = vpow.pop %v3141
  %v3143 = vsel %vm823, %v3138, 0.0
  %3144 = vadd.xlane.f32.xlu0 %v3143
  %v3145 = vpop.xlane.xlu0 %3144
  %v3146 = vsel %vm823, %v3140, 0.0
  %3147 = vadd.xlane.f32.xlu0 %v3146
  %v3148 = vpop.xlane.xlu0 %3147
  %v3149 = vsel %vm830, %v3142, 0.0
  %3150 = vadd.xlane.f32.xlu0 %v3149
  %v3151 = vpop.xlane.xlu0 %3150
  %v3152 = vrcp.pop %v3145
  %v3153 = vmul.f32 1.0, %v3152
  %v3154 = vrcp.pop %v3148
  %v3155 = vmul.f32 1.0, %v3154
  %v3156 = vrcp.pop %v3151
  %v3157 = vmul.f32 1.0, %v3156
  %v3158 = vmul.f32 %v3138, %v3153
  %v3159 = vmul.f32 %v3140, %v3155
  %v3160 = vmul.f32 %v3142, %v3157
  %v3161 = vmul.f32 %v2565, %v1190
  %v3162 = vmul.f32 %v2570, %v1190
  %v3163 = vmul.f32 %v2575, %v1190
  %v3165 = vsel %vm823, %v3158, 0
  %v3168 = vsel %vm823, %v3159, 0
  %v3171 = vsel %vm823, %v3160, 0
  %v3174 = vsel %vm1010, %v3163, 0
  %3176 = vmatprep.subr.mxu0 0.0
  %3177 = vmatpush1.msra.mxu0 %v3161
  %3178 = vmatprep.subr.mxu0 0.0
  %3179 = vmatpush1.msra.mxu0 %v3162
  %3180 = vmatprep.subr.mxu0 0.0
  %3181 = vmatpush1.msra.mxu0 %v3174
  %3182 = vmatprep.subr.mxu0 0.0
  %3183 = vmatpush1.msra.mxu0 0.0
  %3184 = vmatprep.subr.mxu0 0.0
  %3185 = vmatpush1.msra.mxu0 0.0
  %3186 = vmatprep.subr.mxu0 0.0
  %3187 = vmatpush1.msra.mxu0 0.0
  %3188 = vmatprep.subr.mxu0 0.0
  %3189 = vmatpush1.msra.mxu0 0.0
  %3190 = vmatprep.subr.mxu0 0.0
  %3191 = vmatpush1.msra.mxu0 0.0
  %3192 = vmatprep.subr.mxu0 0.0
  %3193 = vmatpush1.msra.mxu0 0.0
  %3194 = vmatprep.subr.mxu0 0.0
  %3195 = vmatpush1.msra.mxu0 0.0
  %3196 = vmatprep.subr.mxu0 0.0
  %3197 = vmatpush1.msra.mxu0 0.0
  %3198 = vmatprep.subr.mxu0 0.0
  %3199 = vmatpush1.msra.mxu0 0.0
  %3200 = vmatprep.subr.mxu0 0.0
  %3201 = vmatpush1.msra.mxu0 0.0
  %3202 = vmatprep.subr.mxu0 0.0
  %3203 = vmatpush1.msra.mxu0 0.0
  %3204 = vmatprep.subr.mxu0 0.0
  %3205 = vmatpush1.msra.mxu0 0.0
  %3206 = vmatprep.subr.mxu0 0.0
  %3207 = vmatpush1.msra.mxu0 0.0
  %3208 = vmatprep.subr.mxu0 0.0
  %3209 = vmatpush1.msra.mxu0 0.0
  %3210 = vmatprep.subr.mxu0 0.0
  %3211 = vmatpush1.msra.mxu0 0.0
  %3212 = vmatprep.subr.mxu0 0.0
  %3213 = vmatpush1.msra.mxu0 0.0
  %3214 = vmatprep.subr.mxu0 0.0
  %3215 = vmatpush1.msra.mxu0 0.0
  %3216 = vmatprep.subr.mxu0 0.0
  %3217 = vmatpush1.msra.mxu0 0.0
  %3218 = vmatprep.subr.mxu0 0.0
  %3219 = vmatpush1.msra.mxu0 0.0
  %3220 = vmatprep.subr.mxu0 0.0
  %3221 = vmatpush1.msra.mxu0 0.0
  %3222 = vmatprep.subr.mxu0 0.0
  %3223 = vmatpush1.msra.mxu0 0.0
  %3224 = vmatprep.subr.mxu0 0.0
  %3225 = vmatpush1.msra.mxu0 0.0
  %3226 = vmatprep.subr.mxu0 0.0
  %3227 = vmatpush1.msra.mxu0 0.0
  %3228 = vmatprep.subr.mxu0 0.0
  %3229 = vmatpush1.msra.mxu0 0.0
  %3230 = vmatprep.subr.mxu0 0.0
  %3231 = vmatpush1.msra.mxu0 0.0
  %3232 = vmatprep.subr.mxu0 0.0
  %3233 = vmatpush1.msra.mxu0 0.0
  %3234 = vmatprep.subr.mxu0 0.0
  %3235 = vmatpush1.msra.mxu0 0.0
  %3236 = vmatprep.subr.mxu0 0.0
  %3237 = vmatpush1.msra.mxu0 0.0
  %3238 = vmatprep.subr.mxu0 0.0
  %3239 = vmatpush1.msra.mxu0 0.0
  %3240 = vmatprep.mubr.f32.mxu0 0.0
  %3241 = vmatmul.mubr.f32.gmra.mrb[0].mxu0 %v3165
  %v3242 = vpop.f32.mrb[0].mxu0
  %v3243 = vadd.f32 0.0, %v3242
  %v3244 = vpop.f32.mrb[0].mxu0
  %3245 = vmatprep.mubr.f32.mxu0 0.0
  %3246 = vmatmul.mubr.f32.gmra.mrb[0].mxu0 %v3168
  %v3247 = vpop.f32.mrb[0].mxu0
  %v3248 = vadd.f32 0.0, %v3247
  %v3249 = vpop.f32.mrb[0].mxu0
  %3250 = vmatprep.mubr.f32.mxu0 0.0
  %3251 = vmatmul.mubr.f32.gmra.mrb[0].mxu0 %v3171
  %v3252 = vpop.f32.mrb[0].mxu0
  %v3253 = vadd.f32 0.0, %v3252
  %v3254 = vpop.f32.mrb[0].mxu0
  %3255 = vdwg.mxu0
  %v3256 = vadd.f32 %v3020, %v3243
  %v3257 = vadd.f32 %v3025, %v3248
  %v3258 = vadd.f32 %v3030, %v3253
  %v3259 = vmul.f32 %v2486, %v1422
  %v3260 = vmul.f32 %v2487, %v1422
  %v3261 = vmul.f32 %v2488, %v1422
  %v3263 = vsel %vm99, %v3259, 0
  %v3266 = vsel %vm99, %v3260, 0
  %v3269 = vsel %vm99, %v3261, 0
  %3271 = vmatprep.subr.mxu0 0.0
  %3272 = vmatpush1.xpose.msra.mxu0 %v3263
  %3273 = vmatprep.subr.mxu0 0.0
  %3274 = vmatpush1.xpose.msra.mxu0 %v3266
  %3275 = vmatprep.subr.mxu0 0.0
  %3276 = vmatpush1.xpose.msra.mxu0 %v3269
  %3277 = vmatprep.subr.mxu0 0.0
  %3278 = vmatpush1.xpose.msra.mxu0 0.0
  %3279 = vmatprep.subr.mxu0 0.0
  %3280 = vmatpush1.xpose.msra.mxu0 0.0
  %3281 = vmatprep.subr.mxu0 0.0
  %3282 = vmatpush1.xpose.msra.mxu0 0.0
  %3283 = vmatprep.subr.mxu0 0.0
  %3284 = vmatpush1.xpose.msra.mxu0 0.0
  %3285 = vmatprep.subr.mxu0 0.0
  %3286 = vmatpush1.xpose.msra.mxu0 0.0
  %3287 = vmatprep.subr.mxu0 0.0
  %3288 = vmatpush1.xpose.msra.mxu0 0.0
  %3289 = vmatprep.subr.mxu0 0.0
  %3290 = vmatpush1.xpose.msra.mxu0 0.0
  %3291 = vmatprep.subr.mxu0 0.0
  %3292 = vmatpush1.xpose.msra.mxu0 0.0
  %3293 = vmatprep.subr.mxu0 0.0
  %3294 = vmatpush1.xpose.msra.mxu0 0.0
  %3295 = vmatprep.subr.mxu0 0.0
  %3296 = vmatpush1.xpose.msra.mxu0 0.0
  %3297 = vmatprep.subr.mxu0 0.0
  %3298 = vmatpush1.xpose.msra.mxu0 0.0
  %3299 = vmatprep.subr.mxu0 0.0
  %3300 = vmatpush1.xpose.msra.mxu0 0.0
  %3301 = vmatprep.subr.mxu0 0.0
  %3302 = vmatpush1.xpose.msra.mxu0 0.0
  %3303 = vmatprep.subr.mxu0 0.0
  %3304 = vmatpush1.xpose.msra.mxu0 0.0
  %3305 = vmatprep.subr.mxu0 0.0
  %3306 = vmatpush1.xpose.msra.mxu0 0.0
  %3307 = vmatprep.subr.mxu0 0.0
  %3308 = vmatpush1.xpose.msra.mxu0 0.0
  %3309 = vmatprep.subr.mxu0 0.0
  %3310 = vmatpush1.xpose.msra.mxu0 0.0
  %3311 = vmatprep.subr.mxu0 0.0
  %3312 = vmatpush1.xpose.msra.mxu0 0.0
  %3313 = vmatprep.subr.mxu0 0.0
  %3314 = vmatpush1.xpose.msra.mxu0 0.0
  %3315 = vmatprep.subr.mxu0 0.0
  %3316 = vmatpush1.xpose.msra.mxu0 0.0
  %3317 = vmatprep.subr.mxu0 0.0
  %3318 = vmatpush1.xpose.msra.mxu0 0.0
  %3319 = vmatprep.subr.mxu0 0.0
  %3320 = vmatpush1.xpose.msra.mxu0 0.0
  %3321 = vmatprep.subr.mxu0 0.0
  %3322 = vmatpush1.xpose.msra.mxu0 0.0
  %3323 = vmatprep.subr.mxu0 0.0
  %3324 = vmatpush1.xpose.msra.mxu0 0.0
  %3325 = vmatprep.subr.mxu0 0.0
  %3326 = vmatpush1.xpose.msra.mxu0 0.0
  %3327 = vmatprep.subr.mxu0 0.0
  %3328 = vmatpush1.xpose.msra.mxu0 0.0
  %3329 = vmatprep.subr.mxu0 0.0
  %3330 = vmatpush1.xpose.msra.mxu0 0.0
  %3331 = vmatprep.subr.mxu0 0.0
  %3332 = vmatpush1.xpose.msra.mxu0 0.0
  %3333 = vmatprep.subr.mxu0 0.0
  %3334 = vmatpush1.xpose.msra.mxu0 0.0
  %3335 = vmatprep.mubr.f32.mxu0 0.0
  %3336 = vmatmul.mubr.f32.gmra.mrb[0].mxu0 %v2582
  %v3337 = vpop.f32.mrb[0].mxu0
  %v3338 = vadd.f32 %v59, %v3337
  %v3339 = vpop.f32.mrb[0].mxu0
  %3340 = vmatprep.mubr.f32.mxu0 0.0
  %3341 = vmatmul.mubr.f32.gmra.mrb[0].mxu0 %v2585
  %v3342 = vpop.f32.mrb[0].mxu0
  %v3343 = vadd.f32 %v60, %v3342
  %v3344 = vpop.f32.mrb[0].mxu0
  %3345 = vmatprep.mubr.f32.mxu0 0.0
  %3346 = vmatmul.mubr.f32.gmra.mrb[0].mxu0 %v2588
  %v3347 = vpop.f32.mrb[0].mxu0
  %v3348 = vadd.f32 %v61, %v3347
  %v3349 = vpop.f32.mrb[0].mxu0
  %3350 = vdwg.mxu0
  %v3351 = vsel %vm823, %v3338, -inf
  %3352 = vmax.xlane.f32.xlu0 %v3351
  %v3353 = vpop.xlane.xlu0 %3352
  %v3354 = vsel %vm823, %v3343, -inf
  %3355 = vmax.xlane.f32.xlu0 %v3354
  %v3356 = vpop.xlane.xlu0 %3355
  %v3357 = vsel %vm830, %v3348, -inf
  %3358 = vmax.xlane.f32.xlu0 %v3357
  %v3359 = vpop.xlane.xlu0 %3358
  %v3360 = vsub.f32 %v3338, %v3353
  %v3361 = vsub.f32 %v3343, %v3356
  %v3362 = vsub.f32 %v3348, %v3359
  %v3363 = vmul.f32 %v3360, 1.442695
  %v3364 = vpow.pop %v3363
  %v3365 = vmul.f32 %v3361, 1.442695
  %v3366 = vpow.pop %v3365
  %v3367 = vmul.f32 %v3362, 1.442695
  %v3368 = vpow.pop %v3367
  %v3369 = vsel %vm823, %v3364, 0.0
  %3370 = vadd.xlane.f32.xlu0 %v3369
  %v3371 = vpop.xlane.xlu0 %3370
  %v3372 = vsel %vm823, %v3366, 0.0
  %3373 = vadd.xlane.f32.xlu0 %v3372
  %v3374 = vpop.xlane.xlu0 %3373
  %v3375 = vsel %vm830, %v3368, 0.0
  %3376 = vadd.xlane.f32.xlu0 %v3375
  %v3377 = vpop.xlane.xlu0 %3376
  %v3378 = vrcp.pop %v3371
  %v3379 = vmul.f32 1.0, %v3378
  %v3380 = vrcp.pop %v3374
  %v3381 = vmul.f32 1.0, %v3380
  %v3382 = vrcp.pop %v3377
  %v3383 = vmul.f32 1.0, %v3382
  %v3384 = vmul.f32 %v3364, %v3379
  %v3385 = vmul.f32 %v3366, %v3381
  %v3386 = vmul.f32 %v3368, %v3383
  %v3387 = vmul.f32 %v2565, %v1422
  %v3388 = vmul.f32 %v2570, %v1422
  %v3389 = vmul.f32 %v2575, %v1422
  %v3391 = vsel %vm823, %v3384, 0
  %v3394 = vsel %vm823, %v3385, 0
  %v3397 = vsel %vm823, %v3386, 0
  %v3400 = vsel %vm1010, %v3389, 0
  %3402 = vmatprep.subr.mxu0 0.0
  %3403 = vmatpush1.msra.mxu0 %v3387
  %3404 = vmatprep.subr.mxu0 0.0
  %3405 = vmatpush1.msra.mxu0 %v3388
  %3406 = vmatprep.subr.mxu0 0.0
  %3407 = vmatpush1.msra.mxu0 %v3400
  %3408 = vmatprep.subr.mxu0 0.0
  %3409 = vmatpush1.msra.mxu0 0.0
  %3410 = vmatprep.subr.mxu0 0.0
  %3411 = vmatpush1.msra.mxu0 0.0
  %3412 = vmatprep.subr.mxu0 0.0
  %3413 = vmatpush1.msra.mxu0 0.0
  %3414 = vmatprep.subr.mxu0 0.0
  %3415 = vmatpush1.msra.mxu0 0.0
  %3416 = vmatprep.subr.mxu0 0.0
  %3417 = vmatpush1.msra.mxu0 0.0
  %3418 = vmatprep.subr.mxu0 0.0
  %3419 = vmatpush1.msra.mxu0 0.0
  %3420 = vmatprep.subr.mxu0 0.0
  %3421 = vmatpush1.msra.mxu0 0.0
  %3422 = vmatprep.subr.mxu0 0.0
  %3423 = vmatpush1.msra.mxu0 0.0
  %3424 = vmatprep.subr.mxu0 0.0
  %3425 = vmatpush1.msra.mxu0 0.0
  %3426 = vmatprep.subr.mxu0 0.0
  %3427 = vmatpush1.msra.mxu0 0.0
  %3428 = vmatprep.subr.mxu0 0.0
  %3429 = vmatpush1.msra.mxu0 0.0
  %3430 = vmatprep.subr.mxu0 0.0
  %3431 = vmatpush1.msra.mxu0 0.0
  %3432 = vmatprep.subr.mxu0 0.0
  %3433 = vmatpush1.msra.mxu0 0.0
  %3434 = vmatprep.subr.mxu0 0.0
  %3435 = vmatpush1.msra.mxu0 0.0
  %3436 = vmatprep.subr.mxu0 0.0
  %3437 = vmatpush1.msra.mxu0 0.0
  %3438 = vmatprep.subr.mxu0 0.0
  %3439 = vmatpush1.msra.mxu0 0.0
  %3440 = vmatprep.subr.mxu0 0.0
  %3441 = vmatpush1.msra.mxu0 0.0
  %3442 = vmatprep.subr.mxu0 0.0
  %3443 = vmatpush1.msra.mxu0 0.0
  %3444 = vmatprep.subr.mxu0 0.0
  %3445 = vmatpush1.msra.mxu0 0.0
  %3446 = vmatprep.subr.mxu0 0.0
  %3447 = vmatpush1.msra.mxu0 0.0
  %3448 = vmatprep.subr.mxu0 0.0
  %3449 = vmatpush1.msra.mxu0 0.0
  %3450 = vmatprep.subr.mxu0 0.0
  %3451 = vmatpush1.msra.mxu0 0.0
  %3452 = vmatprep.subr.mxu0 0.0
  %3453 = vmatpush1.msra.mxu0 0.0
  %3454 = vmatprep.subr.mxu0 0.0
  %3455 = vmatpush1.msra.mxu0 0.0
  %3456 = vmatprep.subr.mxu0 0.0
  %3457 = vmatpush1.msra.mxu0 0.0
  %3458 = vmatprep.subr.mxu0 0.0
  %3459 = vmatpush1.msra.mxu0 0.0
  %3460 = vmatprep.subr.mxu0 0.0
  %3461 = vmatpush1.msra.mxu0 0.0
  %3462 = vmatprep.subr.mxu0 0.0
  %3463 = vmatpush1.msra.mxu0 0.0
  %3464 = vmatprep.subr.mxu0 0.0
  %3465 = vmatpush1.msra.mxu0 0.0
  %3466 = vmatprep.mubr.f32.mxu0 0.0
  %3467 = vmatmul.mubr.f32.gmra.mrb[0].mxu0 %v3391
  %v3468 = vpop.f32.mrb[0].mxu0
  %v3469 = vadd.f32 0.0, %v3468
  %v3470 = vpop.f32.mrb[0].mxu0
  %3471 = vmatprep.mubr.f32.mxu0 0.0
  %3472 = vmatmul.mubr.f32.gmra.mrb[0].mxu0 %v3394
  %v3473 = vpop.f32.mrb[0].mxu0
  %v3474 = vadd.f32 0.0, %v3473
  %v3475 = vpop.f32.mrb[0].mxu0
  %3476 = vmatprep.mubr.f32.mxu0 0.0
  %3477 = vmatmul.mubr.f32.gmra.mrb[0].mxu0 %v3397
  %v3478 = vpop.f32.mrb[0].mxu0
  %v3479 = vadd.f32 0.0, %v3478
  %v3480 = vpop.f32.mrb[0].mxu0
  %3481 = vdwg.mxu0
  %v3482 = vadd.f32 %v3256, %v3469
  %v3483 = vadd.f32 %v3257, %v3474
  %v3484 = vadd.f32 %v3258, %v3479
  %s3485 = scalar_lea.vmem %s8, 64
  %v3486 = vld [vmem:[%s3485] sm:$0xff]
  %v3487 = vld [vmem:[%s3485 + $0x8] sm:$0xff]
  %v3488 = vld [vmem:[%s3485 + $0x10] sm:$0xff]
  %v3489 = vld [vmem:[%s3485 + $0x18] sm:$0xff]
  %v3490 = vld [vmem:[%s3485 + $0x20] sm:$0xff]
  %v3491 = vld [vmem:[%s3485 + $0x28] sm:$0xff]
  %v3492 = vld [vmem:[%s3485 + $0x30] sm:$0xff]
  %v3493 = vld [vmem:[%s3485 + $0x38] sm:$0xff]
  %v3495 = vsel %vm99, %v3482, 0
  %v3498 = vsel %vm99, %v3483, 0
  %v3501 = vsel %vm99, %v3484, 0
  %3503 = vmatprep.subr.mxu0 0.0
  %3504 = vmatpush1.msra.mxu0 %v3486
  %3505 = vmatprep.subr.mxu0 0.0
  %3506 = vmatpush1.msra.mxu0 %v3487
  %3507 = vmatprep.subr.mxu0 0.0
  %3508 = vmatpush1.msra.mxu0 %v3488
  %3509 = vmatprep.subr.mxu0 0.0
  %3510 = vmatpush1.msra.mxu0 %v3489
  %3511 = vmatprep.subr.mxu0 0.0
  %3512 = vmatpush1.msra.mxu0 %v3490
  %3513 = vmatprep.subr.mxu0 0.0
  %3514 = vmatpush1.msra.mxu0 %v3491
  %3515 = vmatprep.subr.mxu0 0.0
  %3516 = vmatpush1.msra.mxu0 %v3492
  %3517 = vmatprep.subr.mxu0 0.0
  %3518 = vmatpush1.msra.mxu0 %v3493
  %3519 = vmatprep.subr.mxu0 0.0
  %3520 = vmatpush1.msra.mxu0 0.0
  %3521 = vmatprep.subr.mxu0 0.0
  %3522 = vmatpush1.msra.mxu0 0.0
  %3523 = vmatprep.subr.mxu0 0.0
  %3524 = vmatpush1.msra.mxu0 0.0
  %3525 = vmatprep.subr.mxu0 0.0
  %3526 = vmatpush1.msra.mxu0 0.0
  %3527 = vmatprep.subr.mxu0 0.0
  %3528 = vmatpush1.msra.mxu0 0.0
  %3529 = vmatprep.subr.mxu0 0.0
  %3530 = vmatpush1.msra.mxu0 0.0
  %3531 = vmatprep.subr.mxu0 0.0
  %3532 = vmatpush1.msra.mxu0 0.0
  %3533 = vmatprep.subr.mxu0 0.0
  %3534 = vmatpush1.msra.mxu0 0.0
  %3535 = vmatprep.subr.mxu0 0.0
  %3536 = vmatpush1.msra.mxu0 0.0
  %3537 = vmatprep.subr.mxu0 0.0
  %3538 = vmatpush1.msra.mxu0 0.0
  %3539 = vmatprep.subr.mxu0 0.0
  %3540 = vmatpush1.msra.mxu0 0.0
  %3541 = vmatprep.subr.mxu0 0.0
  %3542 = vmatpush1.msra.mxu0 0.0
  %3543 = vmatprep.subr.mxu0 0.0
  %3544 = vmatpush1.msra.mxu0 0.0
  %3545 = vmatprep.subr.mxu0 0.0
  %3546 = vmatpush1.msra.mxu0 0.0
  %3547 = vmatprep.subr.mxu0 0.0
  %3548 = vmatpush1.msra.mxu0 0.0
  %3549 = vmatprep.subr.mxu0 0.0
  %3550 = vmatpush1.msra.mxu0 0.0
  %3551 = vmatprep.subr.mxu0 0.0
  %3552 = vmatpush1.msra.mxu0 0.0
  %3553 = vmatprep.subr.mxu0 0.0
  %3554 = vmatpush1.msra.mxu0 0.0
  %3555 = vmatprep.subr.mxu0 0.0
  %3556 = vmatpush1.msra.mxu0 0.0
  %3557 = vmatprep.subr.mxu0 0.0
  %3558 = vmatpush1.msra.mxu0 0.0
  %3559 = vmatprep.subr.mxu0 0.0
  %3560 = vmatpush1.msra.mxu0 0.0
  %3561 = vmatprep.subr.mxu0 0.0
  %3562 = vmatpush1.msra.mxu0 0.0
  %3563 = vmatprep.subr.mxu0 0.0
  %3564 = vmatpush1.msra.mxu0 0.0
  %3565 = vmatprep.subr.mxu0 0.0
  %3566 = vmatpush1.msra.mxu0 0.0
  %3567 = vmatprep.mubr.f32.mxu0 0.0
  %3568 = vmatmul.mubr.f32.gmra.mrb[0].mxu0 %v3495
  %v3569 = vpop.f32.mrb[0].mxu0
  %v3570 = vadd.f32 0.0, %v3569
  %v3571 = vpop.f32.mrb[0].mxu0
  %3572 = vmatprep.mubr.f32.mxu0 0.0
  %3573 = vmatmul.mubr.f32.gmra.mrb[0].mxu0 %v3498
  %v3574 = vpop.f32.mrb[0].mxu0
  %v3575 = vadd.f32 0.0, %v3574
  %v3576 = vpop.f32.mrb[0].mxu0
  %3577 = vmatprep.mubr.f32.mxu0 0.0
  %3578 = vmatmul.mubr.f32.gmra.mrb[0].mxu0 %v3501
  %v3579 = vpop.f32.mrb[0].mxu0
  %v3580 = vadd.f32 0.0, %v3579
  %v3581 = vpop.f32.mrb[0].mxu0
  %3582 = vdwg.mxu0
  %v3583 = vadd.f32 %v2079, %v3570
  %v3584 = vadd.f32 %v2080, %v3575
  %v3585 = vadd.f32 %v2081, %v3580
  %v3586 = vmul.f32 %v3583, %v3583
  %v3587 = vmul.f32 %v3584, %v3584
  %v3588 = vmul.f32 %v3585, %v3585
  %v3589 = vsel %vm99, %v3586, 0.0
  %3590 = vadd.xlane.f32.xlu0 %v3589
  %v3591 = vpop.xlane.xlu0 %3590
  %v3592 = vsel %vm99, %v3587, 0.0
  %3593 = vadd.xlane.f32.xlu0 %v3592
  %v3594 = vpop.xlane.xlu0 %3593
  %v3595 = vsel %vm198, %v3588, 0.0
  %3596 = vadd.xlane.f32.xlu0 %v3595
  %v3597 = vpop.xlane.xlu0 %3596
  %v3598 = vmul.f32 %v3591, %v202
  %v3599 = vmul.f32 %v3594, %v202
  %v3600 = vmul.f32 %v3597, %v202
  %v3601 = vadd.f32 %v3598, 1e-05
  %v3602 = vadd.f32 %v3599, 1e-05
  %v3603 = vadd.f32 %v3600, 1e-05
  %v3604 = vrsqrt.pop %v3601
  %v3605 = vrsqrt.pop %v3602
  %v3606 = vrsqrt.pop %v3603
  %v3607 = vmul.f32 %v3583, %v3604
  %v3608 = vmul.f32 %v3584, %v3605
  %v3609 = vmul.f32 %v3585, %v3606
  %s3610 = scalar_lea.vmem %s9, 64
  %v3611 = vld [vmem:[%s3610] sm:$0xff]
  %v3612 = vld [vmem:[%s3610 + $0x8] sm:$0xff]
  %v3613 = vld [vmem:[%s3610 + $0x10] sm:$0xff]
  %v3614 = vld [vmem:[%s3610 + $0x18] sm:$0xff]
  %v3615 = vld [vmem:[%s3610 + $0x20] sm:$0xff]
  %v3616 = vld [vmem:[%s3610 + $0x28] sm:$0xff]
  %v3617 = vld [vmem:[%s3610 + $0x30] sm:$0xff]
  %v3618 = vld [vmem:[%s3610 + $0x38] sm:$0xff]
  %v3620 = vsel %vm99, %v3607, 0
  %v3623 = vsel %vm99, %v3608, 0
  %v3626 = vsel %vm99, %v3609, 0
  %3628 = vmatprep.subr.mxu0 0.0
  %3629 = vmatpush1.msra.mxu0 %v3611
  %3630 = vmatprep.subr.mxu0 0.0
  %3631 = vmatpush1.msra.mxu0 %v3612
  %3632 = vmatprep.subr.mxu0 0.0
  %3633 = vmatpush1.msra.mxu0 %v3613
  %3634 = vmatprep.subr.mxu0 0.0
  %3635 = vmatpush1.msra.mxu0 %v3614
  %3636 = vmatprep.subr.mxu0 0.0
  %3637 = vmatpush1.msra.mxu0 %v3615
  %3638 = vmatprep.subr.mxu0 0.0
  %3639 = vmatpush1.msra.mxu0 %v3616
  %3640 = vmatprep.subr.mxu0 0.0
  %3641 = vmatpush1.msra.mxu0 %v3617
  %3642 = vmatprep.subr.mxu0 0.0
  %3643 = vmatpush1.msra.mxu0 %v3618
  %3644 = vmatprep.subr.mxu0 0.0
  %3645 = vmatpush1.msra.mxu0 0.0
  %3646 = vmatprep.subr.mxu0 0.0
  %3647 = vmatpush1.msra.mxu0 0.0
  %3648 = vmatprep.subr.mxu0 0.0
  %3649 = vmatpush1.msra.mxu0 0.0
  %3650 = vmatprep.subr.mxu0 0.0
  %3651 = vmatpush1.msra.mxu0 0.0
  %3652 = vmatprep.subr.mxu0 0.0
  %3653 = vmatpush1.msra.mxu0 0.0
  %3654 = vmatprep.subr.mxu0 0.0
  %3655 = vmatpush1.msra.mxu0 0.0
  %3656 = vmatprep.subr.mxu0 0.0
  %3657 = vmatpush1.msra.mxu0 0.0
  %3658 = vmatprep.subr.mxu0 0.0
  %3659 = vmatpush1.msra.mxu0 0.0
  %3660 = vmatprep.subr.mxu0 0.0
  %3661 = vmatpush1.msra.mxu0 0.0
  %3662 = vmatprep.subr.mxu0 0.0
  %3663 = vmatpush1.msra.mxu0 0.0
  %3664 = vmatprep.subr.mxu0 0.0
  %3665 = vmatpush1.msra.mxu0 0.0
  %3666 = vmatprep.subr.mxu0 0.0
  %3667 = vmatpush1.msra.mxu0 0.0
  %3668 = vmatprep.subr.mxu0 0.0
  %3669 = vmatpush1.msra.mxu0 0.0
  %3670 = vmatprep.subr.mxu0 0.0
  %3671 = vmatpush1.msra.mxu0 0.0
  %3672 = vmatprep.subr.mxu0 0.0
  %3673 = vmatpush1.msra.mxu0 0.0
  %3674 = vmatprep.subr.mxu0 0.0
  %3675 = vmatpush1.msra.mxu0 0.0
  %3676 = vmatprep.subr.mxu0 0.0
  %3677 = vmatpush1.msra.mxu0 0.0
  %3678 = vmatprep.subr.mxu0 0.0
  %3679 = vmatpush1.msra.mxu0 0.0
  %3680 = vmatprep.subr.mxu0 0.0
  %3681 = vmatpush1.msra.mxu0 0.0
  %3682 = vmatprep.subr.mxu0 0.0
  %3683 = vmatpush1.msra.mxu0 0.0
  %3684 = vmatprep.subr.mxu0 0.0
  %3685 = vmatpush1.msra.mxu0 0.0
  %3686 = vmatprep.subr.mxu0 0.0
  %3687 = vmatpush1.msra.mxu0 0.0
  %3688 = vmatprep.subr.mxu0 0.0
  %3689 = vmatpush1.msra.mxu0 0.0
  %3690 = vmatprep.subr.mxu0 0.0
  %3691 = vmatpush1.msra.mxu0 0.0
  %3692 = vmatprep.mubr.f32.mxu0 0.0
  %3693 = vmatmul.mubr.f32.gmra.mrb[0].mxu0 %v3620
  %v3694 = vpop.f32.mrb[0].mxu0
  %v3695 = vadd.f32 0.0, %v3694
  %v3696 = vpop.f32.mrb[0].mxu0
  %3697 = vmatprep.mubr.f32.mxu0 0.0
  %3698 = vmatmul.mubr.f32.gmra.mrb[0].mxu0 %v3623
  %v3699 = vpop.f32.mrb[0].mxu0
  %v3700 = vadd.f32 0.0, %v3699
  %v3701 = vpop.f32.mrb[0].mxu0
  %3702 = vmatprep.mubr.f32.mxu0 0.0
  %3703 = vmatmul.mubr.f32.gmra.mrb[0].mxu0 %v3626
  %v3704 = vpop.f32.mrb[0].mxu0
  %v3705 = vadd.f32 0.0, %v3704
  %v3706 = vpop.f32.mrb[0].mxu0
  %3707 = vdwg.mxu0
  %s3708 = scalar_lea.vmem %s10, 64
  %v3709 = vld [vmem:[%s3708] sm:$0xff]
  %v3710 = vld [vmem:[%s3708 + $0x8] sm:$0xff]
  %v3711 = vld [vmem:[%s3708 + $0x10] sm:$0xff]
  %v3712 = vld [vmem:[%s3708 + $0x18] sm:$0xff]
  %v3713 = vld [vmem:[%s3708 + $0x20] sm:$0xff]
  %v3714 = vld [vmem:[%s3708 + $0x28] sm:$0xff]
  %v3715 = vld [vmem:[%s3708 + $0x30] sm:$0xff]
  %v3716 = vld [vmem:[%s3708 + $0x38] sm:$0xff]
  %3717 = vmatprep.subr.mxu0 0.0
  %3718 = vmatpush1.msra.mxu0 %v3709
  %3719 = vmatprep.subr.mxu0 0.0
  %3720 = vmatpush1.msra.mxu0 %v3710
  %3721 = vmatprep.subr.mxu0 0.0
  %3722 = vmatpush1.msra.mxu0 %v3711
  %3723 = vmatprep.subr.mxu0 0.0
  %3724 = vmatpush1.msra.mxu0 %v3712
  %3725 = vmatprep.subr.mxu0 0.0
  %3726 = vmatpush1.msra.mxu0 %v3713
  %3727 = vmatprep.subr.mxu0 0.0
  %3728 = vmatpush1.msra.mxu0 %v3714
  %3729 = vmatprep.subr.mxu0 0.0
  %3730 = vmatpush1.msra.mxu0 %v3715
  %3731 = vmatprep.subr.mxu0 0.0
  %3732 = vmatpush1.msra.mxu0 %v3716
  %3733 = vmatprep.subr.mxu0 0.0
  %3734 = vmatpush1.msra.mxu0 0.0
  %3735 = vmatprep.subr.mxu0 0.0
  %3736 = vmatpush1.msra.mxu0 0.0
  %3737 = vmatprep.subr.mxu0 0.0
  %3738 = vmatpush1.msra.mxu0 0.0
  %3739 = vmatprep.subr.mxu0 0.0
  %3740 = vmatpush1.msra.mxu0 0.0
  %3741 = vmatprep.subr.mxu0 0.0
  %3742 = vmatpush1.msra.mxu0 0.0
  %3743 = vmatprep.subr.mxu0 0.0
  %3744 = vmatpush1.msra.mxu0 0.0
  %3745 = vmatprep.subr.mxu0 0.0
  %3746 = vmatpush1.msra.mxu0 0.0
  %3747 = vmatprep.subr.mxu0 0.0
  %3748 = vmatpush1.msra.mxu0 0.0
  %3749 = vmatprep.subr.mxu0 0.0
  %3750 = vmatpush1.msra.mxu0 0.0
  %3751 = vmatprep.subr.mxu0 0.0
  %3752 = vmatpush1.msra.mxu0 0.0
  %3753 = vmatprep.subr.mxu0 0.0
  %3754 = vmatpush1.msra.mxu0 0.0
  %3755 = vmatprep.subr.mxu0 0.0
  %3756 = vmatpush1.msra.mxu0 0.0
  %3757 = vmatprep.subr.mxu0 0.0
  %3758 = vmatpush1.msra.mxu0 0.0
  %3759 = vmatprep.subr.mxu0 0.0
  %3760 = vmatpush1.msra.mxu0 0.0
  %3761 = vmatprep.subr.mxu0 0.0
  %3762 = vmatpush1.msra.mxu0 0.0
  %3763 = vmatprep.subr.mxu0 0.0
  %3764 = vmatpush1.msra.mxu0 0.0
  %3765 = vmatprep.subr.mxu0 0.0
  %3766 = vmatpush1.msra.mxu0 0.0
  %3767 = vmatprep.subr.mxu0 0.0
  %3768 = vmatpush1.msra.mxu0 0.0
  %3769 = vmatprep.subr.mxu0 0.0
  %3770 = vmatpush1.msra.mxu0 0.0
  %3771 = vmatprep.subr.mxu0 0.0
  %3772 = vmatpush1.msra.mxu0 0.0
  %3773 = vmatprep.subr.mxu0 0.0
  %3774 = vmatpush1.msra.mxu0 0.0
  %3775 = vmatprep.subr.mxu0 0.0
  %3776 = vmatpush1.msra.mxu0 0.0
  %3777 = vmatprep.subr.mxu0 0.0
  %3778 = vmatpush1.msra.mxu0 0.0
  %3779 = vmatprep.subr.mxu0 0.0
  %3780 = vmatpush1.msra.mxu0 0.0
  %3781 = vmatprep.mubr.f32.mxu0 0.0
  %3782 = vmatmul.mubr.f32.gmra.mrb[0].mxu0 %v3620
  %v3783 = vpop.f32.mrb[0].mxu0
  %v3784 = vadd.f32 0.0, %v3783
  %v3785 = vpop.f32.mrb[0].mxu0
  %3786 = vmatprep.mubr.f32.mxu0 0.0
  %3787 = vmatmul.mubr.f32.gmra.mrb[0].mxu0 %v3623
  %v3788 = vpop.f32.mrb[0].mxu0
  %v3789 = vadd.f32 0.0, %v3788
  %v3790 = vpop.f32.mrb[0].mxu0
  %3791 = vmatprep.mubr.f32.mxu0 0.0
  %3792 = vmatmul.mubr.f32.gmra.mrb[0].mxu0 %v3626
  %v3793 = vpop.f32.mrb[0].mxu0
  %v3794 = vadd.f32 0.0, %v3793
  %v3795 = vpop.f32.mrb[0].mxu0
  %3796 = vdwg.mxu0
  %v3797 = vxor.u32 %v3695, 2147483648
  %v3798 = vxor.u32 %v3700, 2147483648
  %v3799 = vxor.u32 %v3705, 2147483648
  %v3800 = vmul.f32 %v3797, 1.442695
  %v3801 = vpow.pop %v3800
  %v3802 = vmul.f32 %v3798, 1.442695
  %v3803 = vpow.pop %v3802
  %v3804 = vmul.f32 %v3799, 1.442695
  %v3805 = vpow.pop %v3804
  %v3806 = vadd.f32 %v3801, 1.0
  %v3807 = vadd.f32 %v3803, 1.0
  %v3808 = vadd.f32 %v3805, 1.0
  %v3809 = vrcp.pop %v3806
  %v3810 = vmul.f32 1.0, %v3809
  %v3811 = vrcp.pop %v3807
  %v3812 = vmul.f32 1.0, %v3811
  %v3813 = vrcp.pop %v3808
  %v3814 = vmul.f32 1.0, %v3813
  %v3815 = vmul.f32 %v3695, %v3810
  %v3816 = vmul.f32 %v3700, %v3812
  %v3817 = vmul.f32 %v3705, %v3814
  %v3818 = vmul.f32 %v3815, %v3784
  %v3819 = vmul.f32 %v3816, %v3789
  %v3820 = vmul.f32 %v3817, %v3794
  %s3821 = scalar_lea.vmem %s11, 128
  %v3822 = vld [vmem:[%s3821] sm:$0xff]
  %v3823 = vld [vmem:[%s3821 + $0x8] sm:$0xff]
  %v3824 = vld [vmem:[%s3821 + $0x10] sm:$0xff]
  %v3825 = vld [vmem:[%s3821 + $0x18] sm:$0xff]
  %v3826 = vld [vmem:[%s3821 + $0x20] sm:$0xff]
  %v3827 = vld [vmem:[%s3821 + $0x28] sm:$0xff]
  %v3828 = vld [vmem:[%s3821 + $0x30] sm:$0xff]
  %v3829 = vld [vmem:[%s3821 + $0x38] sm:$0xff]
  %v3830 = vld [vmem:[%s3821 + $0x40] sm:$0xff]
  %v3831 = vld [vmem:[%s3821 + $0x48] sm:$0xff]
  %v3832 = vld [vmem:[%s3821 + $0x50] sm:$0xff]
  %v3833 = vld [vmem:[%s3821 + $0x58] sm:$0xff]
  %v3834 = vld [vmem:[%s3821 + $0x60] sm:$0xff]
  %v3835 = vld [vmem:[%s3821 + $0x68] sm:$0xff]
  %v3836 = vld [vmem:[%s3821 + $0x70] sm:$0xff]
  %v3837 = vld [vmem:[%s3821 + $0x78] sm:$0xff]
  %3838 = vmatprep.subr.mxu0 0.0
  %3839 = vmatpush1.msra.mxu0 %v3822
  %3840 = vmatprep.subr.mxu0 0.0
  %3841 = vmatpush1.msra.mxu0 %v3823
  %3842 = vmatprep.subr.mxu0 0.0
  %3843 = vmatpush1.msra.mxu0 %v3824
  %3844 = vmatprep.subr.mxu0 0.0
  %3845 = vmatpush1.msra.mxu0 %v3825
  %3846 = vmatprep.subr.mxu0 0.0
  %3847 = vmatpush1.msra.mxu0 %v3826
  %3848 = vmatprep.subr.mxu0 0.0
  %3849 = vmatpush1.msra.mxu0 %v3827
  %3850 = vmatprep.subr.mxu0 0.0
  %3851 = vmatpush1.msra.mxu0 %v3828
  %3852 = vmatprep.subr.mxu0 0.0
  %3853 = vmatpush1.msra.mxu0 %v3829
  %3854 = vmatprep.subr.mxu0 0.0
  %3855 = vmatpush1.msra.mxu0 %v3830
  %3856 = vmatprep.subr.mxu0 0.0
  %3857 = vmatpush1.msra.mxu0 %v3831
  %3858 = vmatprep.subr.mxu0 0.0
  %3859 = vmatpush1.msra.mxu0 %v3832
  %3860 = vmatprep.subr.mxu0 0.0
  %3861 = vmatpush1.msra.mxu0 %v3833
  %3862 = vmatprep.subr.mxu0 0.0
  %3863 = vmatpush1.msra.mxu0 %v3834
  %3864 = vmatprep.subr.mxu0 0.0
  %3865 = vmatpush1.msra.mxu0 %v3835
  %3866 = vmatprep.subr.mxu0 0.0
  %3867 = vmatpush1.msra.mxu0 %v3836
  %3868 = vmatprep.subr.mxu0 0.0
  %3869 = vmatpush1.msra.mxu0 %v3837
  %3870 = vmatprep.subr.mxu0 0.0
  %3871 = vmatpush1.msra.mxu0 0.0
  %3872 = vmatprep.subr.mxu0 0.0
  %3873 = vmatpush1.msra.mxu0 0.0
  %3874 = vmatprep.subr.mxu0 0.0
  %3875 = vmatpush1.msra.mxu0 0.0
  %3876 = vmatprep.subr.mxu0 0.0
  %3877 = vmatpush1.msra.mxu0 0.0
  %3878 = vmatprep.subr.mxu0 0.0
  %3879 = vmatpush1.msra.mxu0 0.0
  %3880 = vmatprep.subr.mxu0 0.0
  %3881 = vmatpush1.msra.mxu0 0.0
  %3882 = vmatprep.subr.mxu0 0.0
  %3883 = vmatpush1.msra.mxu0 0.0
  %3884 = vmatprep.subr.mxu0 0.0
  %3885 = vmatpush1.msra.mxu0 0.0
  %3886 = vmatprep.subr.mxu0 0.0
  %3887 = vmatpush1.msra.mxu0 0.0
  %3888 = vmatprep.subr.mxu0 0.0
  %3889 = vmatpush1.msra.mxu0 0.0
  %3890 = vmatprep.subr.mxu0 0.0
  %3891 = vmatpush1.msra.mxu0 0.0
  %3892 = vmatprep.subr.mxu0 0.0
  %3893 = vmatpush1.msra.mxu0 0.0
  %3894 = vmatprep.subr.mxu0 0.0
  %3895 = vmatpush1.msra.mxu0 0.0
  %3896 = vmatprep.subr.mxu0 0.0
  %3897 = vmatpush1.msra.mxu0 0.0
  %3898 = vmatprep.subr.mxu0 0.0
  %3899 = vmatpush1.msra.mxu0 0.0
  %3900 = vmatprep.subr.mxu0 0.0
  %3901 = vmatpush1.msra.mxu0 0.0
  %3902 = vmatprep.mubr.f32.mxu0 0.0
  %3903 = vmatmul.mubr.f32.gmra.mrb[0].mxu0 %v3818
  %v3904 = vpop.f32.mrb[0].mxu0
  %v3905 = vadd.f32 0.0, %v3904
  %v3906 = vpop.f32.mrb[0].mxu0
  %3907 = vmatprep.mubr.f32.mxu0 0.0
  %3908 = vmatmul.mubr.f32.gmra.mrb[0].mxu0 %v3819
  %v3909 = vpop.f32.mrb[0].mxu0
  %v3910 = vadd.f32 0.0, %v3909
  %v3911 = vpop.f32.mrb[0].mxu0
  %3912 = vmatprep.mubr.f32.mxu0 0.0
  %3913 = vmatmul.mubr.f32.gmra.mrb[0].mxu0 %v3820
  %v3914 = vpop.f32.mrb[0].mxu0
  %v3915 = vadd.f32 0.0, %v3914
  %v3916 = vpop.f32.mrb[0].mxu0
  %3917 = vdwg.mxu0
  %v3918 = vadd.f32 %v3583, %v3905
  %v3919 = vadd.f32 %v3584, %v3910
  %v3920 = vadd.f32 %v3585, %v3915
  %3921 = vst.msk [vmem:[%s16] sm:$0xff] %vm99, %v3918
  %3922 = vst.msk [vmem:[%s16 + $0x8] sm:$0xff] %vm99, %v3919
  %3923 = vst.msk [vmem:[%s16 + $0x10] sm:$0x3f] %vm198, %v3920
  // Predicated region
  $region66: #{pixtral_vision_forward.1} parent=0 // pred_check
    _
  $region67: #{pixtral_vision_forward.1} parent=0 // pred_check_branch
    %3925 = sbr.rel (0) target = $region69
  $region68: #{pixtral_vision_forward.1} parent=0 // pred_region
    _
  $region69: #{pixtral_vision_forward.1} parent=0 // pred_fallthru
    _
  // Predicated region
  $region70: #{pixtral_vision_forward.1} parent=0 // pred_check
    _
  $region71: #{pixtral_vision_forward.1} parent=0 // pred_check_branch
    %3927 = sbr.rel (0) target = $region73
  $region72: #{pixtral_vision_forward.1} parent=0 // pred_region
    _
  $region73: #{pixtral_vision_forward.1} parent=0 // pred_fallthru
    _

</llo_original>
